<compile_context>
chip_gen: v5e
topology: v5e:2x2
jax: 0.10.0
libtpu: 0.0.40
codegen_flags: <defaults>
</compile_context>

<pallas_src>
import functools

import jax
import jax.numpy as jnp
from jax.experimental import pallas as pl
from jax.experimental.pallas import tpu as pltpu

EPS = 1e-5


# ----------------------------------------------------------------------------
# Kernel A: ConvTranspose2d(kernel=2, stride=2), interleaved on-chip.
# grid = (N, kh).  Each step computes, for one image and one kernel-row kh, the
# slab holding output rows h = 2*hr + kh with columns in (wr, kw, co) order.
# The 5-D output (N, Hr, 2, Wr, 2*Cout) reshapes for free (row-major bitcast)
# to the interleaved (N, 2Hr, 2Wr, Cout) result.
# ----------------------------------------------------------------------------
def _convT_kernel(x_ref, w_ref, b_ref, o_ref):
    # x_ref: (1, Hr, Wr, Cin)  w_ref: (1, Cin, 2*Cout)  b_ref: (1, 1, 2*Cout)
    # o_ref: (1, Hr, 1, Wr, 2*Cout)
    _, Hr, Wr, Cin = x_ref.shape
    C2 = w_ref.shape[-1]
    x2d = x_ref[0].reshape(Hr * Wr, Cin)
    y = jnp.dot(x2d, w_ref[0], preferred_element_type=jnp.float32) + b_ref[0]
    o_ref[0, :, 0, :, :] = y.reshape(Hr, Wr, C2)


def conv_transpose_2x2(x, w2, b2):
    # x: (N, Hr, Wr, Cin);  w2: (2, Cin, 2*Cout) rows=(kh), cols=(kw, co);  b2: (2, 1, 2*Cout)
    N, Hr, Wr, Cin = x.shape
    C2 = w2.shape[-1]
    Cout = C2 // 2
    out = pl.pallas_call(
        _convT_kernel,
        out_shape=jax.ShapeDtypeStruct((N, Hr, 2, Wr, C2), jnp.float32),
        grid=(N, 2),
        in_specs=[
            pl.BlockSpec((1, Hr, Wr, Cin), lambda n, kh: (n, 0, 0, 0)),
            pl.BlockSpec((1, Cin, C2), lambda n, kh: (kh, 0, 0)),
            pl.BlockSpec((1, 1, C2), lambda n, kh: (kh, 0, 0)),
        ],
        out_specs=pl.BlockSpec((1, Hr, 1, Wr, C2), lambda n, kh: (n, 0, kh, 0, 0)),
        compiler_params=pltpu.CompilerParams(
            dimension_semantics=("parallel", "parallel")),
    )(x, w2, b2)
    # pure reshape: (n, hr, kh, wr, (kw, co)) -> (n, 2hr+kh, 2wr+kw, co)
    return out.reshape(N, 2 * Hr, 2 * Wr, Cout)


# ----------------------------------------------------------------------------
# Kernel B: [optional fused BN+ReLU of previous stage] -> zero-pad in VMEM ->
#           3x3 conv as ONE im2col matmul (K = 9*Cin) -> raw conv output +
#           per-image per-channel sum / sum-of-squares for this stage's BN stats.
# ----------------------------------------------------------------------------
def _conv3x3_kernel(x_ref, scale_ref, shift_ref, w_ref, b_ref,
                    o_ref, sum_ref, ssq_ref, xpad_ref, *, apply_act):
    # x_ref: (1, H, W, Cin) raw (pre-BN) input of this stage
    # scale/shift_ref: (1, Cin) fused BatchNorm affine of the previous stage
    # w_ref: (9*Cin, Cout)   b_ref: (1, Cout)
    # o_ref: (1, H, W, Cout) raw conv output; sum/ssq_ref: (1, 1, Cout)
    # xpad_ref: VMEM scratch (H+2, W+2, Cin) with zero halo
    _, H, W, Cin = x_ref.shape
    Cout = o_ref.shape[-1]

    x = x_ref[0]
    if apply_act:  # previous stage's BatchNorm + ReLU, fused here
        x = jnp.maximum(x * scale_ref[...] + shift_ref[...], 0.0)

    # zero-pad in VMEM; padding applied AFTER the activation so the halo is 0
    xpad_ref[...] = jnp.zeros_like(xpad_ref)
    xpad_ref[1:H + 1, 1:W + 1, :] = x

    # im2col: single MXU matmul with K = 9*Cin instead of nine K = Cin matmuls
    cols = []
    for dy in range(3):
        for dx in range(3):
            cols.append(xpad_ref[dy:dy + H, dx:dx + W, :].reshape(H * W, Cin))
    patches = jnp.concatenate(cols, axis=-1)                   # (H*W, 9*Cin)
    acc = jnp.dot(patches, w_ref[...], preferred_element_type=jnp.float32)
    acc = acc + b_ref[...]

    o_ref[0] = acc.reshape(H, W, Cout)
    sum_ref[0] = jnp.sum(acc, axis=0, keepdims=True)
    ssq_ref[0] = jnp.sum(acc * acc, axis=0, keepdims=True)


def conv3x3_bn_stats(x, w2d, b, scale, shift, apply_act):
    # x: (N, H, W, Cin) raw input of this stage; w2d: (9*Cin, Cout)
    N, H, W, Cin = x.shape
    Cout = w2d.shape[-1]
    kernel = functools.partial(_conv3x3_kernel, apply_act=apply_act)
    y, csum, cssq = pl.pallas_call(
        kernel,
        out_shape=(
            jax.ShapeDtypeStruct((N, H, W, Cout), jnp.float32),
            jax.ShapeDtypeStruct((N, 1, Cout), jnp.float32),
            jax.ShapeDtypeStruct((N, 1, Cout), jnp.float32),
        ),
        grid=(N,),
        in_specs=[
            pl.BlockSpec((1, H, W, Cin), lambda n: (n, 0, 0, 0)),
            pl.BlockSpec((1, Cin), lambda n: (0, 0)),
            pl.BlockSpec((1, Cin), lambda n: (0, 0)),
            pl.BlockSpec((9 * Cin, Cout), lambda n: (0, 0)),
            pl.BlockSpec((1, Cout), lambda n: (0, 0)),
        ],
        out_specs=(
            pl.BlockSpec((1, H, W, Cout), lambda n: (n, 0, 0, 0)),
            pl.BlockSpec((1, 1, Cout), lambda n: (n, 0, 0)),
            pl.BlockSpec((1, 1, Cout), lambda n: (n, 0, 0)),
        ),
        scratch_shapes=[pltpu.VMEM((H + 2, W + 2, Cin), jnp.float32)],
        compiler_params=pltpu.CompilerParams(dimension_semantics=("parallel",)),
    )(x, scale.reshape(1, Cin), shift.reshape(1, Cin), w2d, b.reshape(1, Cout))
    return y, csum, cssq


def _bn_affine(csum, cssq, count, gamma, beta):
    # training-mode BatchNorm2d: biased batch statistics over (N, H, W)
    mean = jnp.sum(csum, axis=(0, 1)) / count
    var = jnp.sum(cssq, axis=(0, 1)) / count - mean * mean
    var = jnp.maximum(var, 0.0)  # guard against catastrophic cancellation
    scale = gamma * jax.lax.rsqrt(var + EPS)
    shift = beta - mean * scale
    return scale, shift


# ----------------------------------------------------------------------------
# Kernel C: final BatchNorm + ReLU, elementwise on a lane-dense (H, W*Cout) view
# ----------------------------------------------------------------------------
def _bn_relu_kernel(x_ref, scale_ref, shift_ref, o_ref):
    # x_ref/o_ref: (1, H, W*Cout);  scale/shift_ref: (1, W*Cout) pre-broadcast
    o_ref[0] = jnp.maximum(x_ref[0] * scale_ref[...] + shift_ref[...], 0.0)


def bn_relu(y, scale, shift):
    # y: (N, H, W, Cout)
    N, H, W, Cout = y.shape
    WC = W * Cout
    y2 = y.reshape(N, H, WC)                       # free row-major reshape
    scale_b = jnp.tile(scale, W).reshape(1, WC)    # (w, c) order matches flatten
    shift_b = jnp.tile(shift, W).reshape(1, WC)
    out = pl.pallas_call(
        _bn_relu_kernel,
        out_shape=jax.ShapeDtypeStruct((N, H, WC), jnp.float32),
        grid=(N,),
        in_specs=[
            pl.BlockSpec((1, H, WC), lambda n: (n, 0, 0)),
            pl.BlockSpec((1, WC), lambda n: (0, 0)),
            pl.BlockSpec((1, WC), lambda n: (0, 0)),
        ],
        out_specs=pl.BlockSpec((1, H, WC), lambda n: (n, 0, 0)),
        compiler_params=pltpu.CompilerParams(dimension_semantics=("parallel",)),
    )(y2, scale_b, shift_b)
    return out.reshape(N, H, W, Cout)


# ----------------------------------------------------------------------------
# Parameter init (deterministic, synthetic — shapes follow the PyTorch module)
# ----------------------------------------------------------------------------
def init_params(key, in_channels, out_channels):
    Cin, Cc, Cout = in_channels, 2 * in_channels, out_channels
    ks = jax.random.split(key, 6)
    # ConvTranspose2d weight, PyTorch layout (Cin, Cout=Cin, kh, kw)
    wt = jax.random.normal(ks[0], (Cin, Cin, 2, 2), jnp.float32) * 0.1
    # -> (kh, ci, kw*Cout + co) for the per-kernel-row matmul
    upsample_w = jnp.transpose(wt, (2, 0, 3, 1)).reshape(2, Cin, 2 * Cin)
    ub = jax.random.normal(ks[1], (Cin,), jnp.float32) * 0.1
    upsample_b = jnp.tile(ub.reshape(1, 1, Cin), (2, 1, 2))     # (2, 1, 2*Cin)
    # Conv2d weights, PyTorch OIHW -> HWIO -> (9*Cin, Cout) rows ordered (dy, dx, ci)
    w1 = jax.random.normal(ks[2], (Cout, Cc, 3, 3), jnp.float32) * 0.1
    conv1_w = jnp.transpose(w1, (2, 3, 1, 0)).reshape(9 * Cc, Cout)
    conv1_b = jax.random.normal(ks[3], (Cout,), jnp.float32) * 0.1
    w2 = jax.random.normal(ks[4], (Cout, Cout, 3, 3), jnp.float32) * 0.1
    conv2_w = jnp.transpose(w2, (2, 3, 1, 0)).reshape(9 * Cout, Cout)
    conv2_b = jax.random.normal(ks[5], (Cout,), jnp.float32) * 0.1
    return {
        "upsample_w": upsample_w, "upsample_b": upsample_b,
        "conv1_w": conv1_w, "conv1_b": conv1_b,
        "bn1_gamma": jnp.ones((Cout,), jnp.float32), "bn1_beta": jnp.zeros((Cout,), jnp.float32),
        "conv2_w": conv2_w, "conv2_b": conv2_b,
        "bn2_gamma": jnp.ones((Cout,), jnp.float32), "bn2_beta": jnp.zeros((Cout,), jnp.float32),
    }


# ----------------------------------------------------------------------------
# UpSamplingBlock forward (block='standart')
# ----------------------------------------------------------------------------
@jax.jit
def upsampling_block_forward(params, left_nchw, right_nchw):
    # NCHW (PyTorch) -> NHWC (kernel layout)
    left = jnp.transpose(left_nchw, (0, 2, 3, 1)).astype(jnp.float32)
    right = jnp.transpose(right_nchw, (0, 2, 3, 1)).astype(jnp.float32)

    up = conv_transpose_2x2(right, params["upsample_w"], params["upsample_b"])
    net = jnp.concatenate([left, up], axis=-1)   # == torch.cat(..., dim=1) in NCHW

    N, H, W, Cc = net.shape
    Cout = params["conv1_b"].shape[0]
    count = float(N * H * W)

    # stage 1: conv1 + batch-stat partial sums (BN1+ReLU is fused into stage 2)
    dummy = jnp.zeros((Cc,), jnp.float32)
    y1, s1, q1 = conv3x3_bn_stats(net, params["conv1_w"], params["conv1_b"],
                                  dummy, dummy, apply_act=False)
    scale1, shift1 = _bn_affine(s1, q1, count, params["bn1_gamma"], params["bn1_beta"])

    # stage 2: fused BN1+ReLU -> pad (in VMEM) -> conv2 + batch-stat partial sums
    y2, s2, q2 = conv3x3_bn_stats(y1, params["conv2_w"], params["conv2_b"],
                                  scale1, shift1, apply_act=True)
    scale2, shift2 = _bn_affine(s2, q2, count, params["bn2_gamma"], params["bn2_beta"])

    # final BN2 + ReLU (lane-dense elementwise kernel)
    out = bn_relu(y2, scale2, shift2)

    # back to NCHW to match PyTorch output convention
    return jnp.transpose(out, (0, 3, 1, 2))


if __name__ == "__main__":
    in_channels, out_channels = 4, 8
    N, H, W = 2, 16, 16

    key = jax.random.PRNGKey(0)
    kp, kl, kr = jax.random.split(key, 3)
    params = init_params(kp, in_channels, out_channels)

    left = jax.random.normal(kl, (N, in_channels, H, W), jnp.float32)             # NCHW
    right = jax.random.normal(kr, (N, in_channels, H // 2, W // 2), jnp.float32)  # NCHW

    out = upsampling_block_forward(params, left, right)
    out = jax.block_until_ready(out)
    assert out.shape == (N, out_channels, H, W), out.shape
    print("KERNEL_OK")
</pallas_src>

<mosaic_0001>
module attributes {stable_mosaic.version = 11 : i64} {
  func.func @_convT_kernel(%arg0: i32, %arg1: i32, %arg2: memref<1x8x8x4xf32, #tpu.memory_space<vmem>>, %arg3: memref<1x4x8xf32, #tpu.memory_space<vmem>>, %arg4: memref<1x1x8xf32, #tpu.memory_space<vmem>>, %arg5: memref<1x8x1x8x8xf32, #tpu.memory_space<vmem>>) attributes {dimension_semantics = [#tpu.dimension_semantics<parallel>, #tpu.dimension_semantics<parallel>], iteration_bounds = array<i64: 2, 2>, scalar_prefetch = 0 : i64, scratch_operands = 0 : i64, tpu.core_type = #tpu.core_type<tc>, window_params = [{transform_indices = @transform_0, window_bounds = array<i64: 1, 8, 8, 4>}, {transform_indices = @transform_1, window_bounds = array<i64: 1, 4, 8>}, {transform_indices = @transform_2, window_bounds = array<i64: 1, 1, 8>}, {transform_indices = @transform_3, window_bounds = array<i64: 1, 8, 1, 8, 8>}]} {
    %c0 = arith.constant 0 : index
    %c0_0 = arith.constant 0 : index
    %c0_1 = arith.constant 0 : index
    %c0_2 = arith.constant 0 : index
    %0 = vector.load %arg2[%c0, %c0_0, %c0_1, %c0_2] : memref<1x8x8x4xf32, #tpu.memory_space<vmem>>, vector<1x8x8x4xf32>
    %1 = vector.shape_cast %0 : vector<1x8x8x4xf32> to vector<8x8x4xf32>
    %2 = vector.shape_cast %1 : vector<8x8x4xf32> to vector<64x4xf32>
    %c0_3 = arith.constant 0 : index
    %c0_4 = arith.constant 0 : index
    %c0_5 = arith.constant 0 : index
    %3 = vector.load %arg3[%c0_3, %c0_4, %c0_5] : memref<1x4x8xf32, #tpu.memory_space<vmem>>, vector<1x4x8xf32>
    %4 = vector.shape_cast %3 : vector<1x4x8xf32> to vector<4x8xf32>
    %cst = arith.constant dense<0.000000e+00> : vector<64x8xf32>
    %5 = tpu.matmul %2, %4, %cst {dimension_numbers = #tpu.dot_dimension_numbers<[1], [0], [0], [1], [0, 0, 1, 1], [], []>} : vector<64x4xf32>, vector<4x8xf32>, vector<64x8xf32> -> vector<64x8xf32>
    %c0_6 = arith.constant 0 : index
    %c0_7 = arith.constant 0 : index
    %c0_8 = arith.constant 0 : index
    %6 = vector.load %arg4[%c0_6, %c0_7, %c0_8] : memref<1x1x8xf32, #tpu.memory_space<vmem>>, vector<1x1x8xf32>
    %7 = vector.shape_cast %6 : vector<1x1x8xf32> to vector<1x8xf32>
    %8 = vector.broadcast %7 : vector<1x8xf32> to vector<64x8xf32>
    %9 = arith.addf %5, %8 : vector<64x8xf32>
    %10 = vector.shape_cast %9 : vector<64x8xf32> to vector<8x8x8xf32>
    %c0_9 = arith.constant 0 : index
    %c0_10 = arith.constant 0 : index
    %c0_11 = arith.constant 0 : index
    %c0_12 = arith.constant 0 : index
    %c0_13 = arith.constant 0 : index
    %11 = vector.load %arg5[%c0_9, %c0_10, %c0_11, %c0_12, %c0_13] : memref<1x8x1x8x8xf32, #tpu.memory_space<vmem>>, vector<1x8x1x8x8xf32>
    %12 = vector.shape_cast %11 : vector<1x8x1x8x8xf32> to vector<8x8x8xf32>
    %13 = vector.shape_cast %10 : vector<8x8x8xf32> to vector<1x8x1x8x8xf32>
    tpu.vector_store %arg5[%c0_9, %c0_10, %c0_11, %c0_12, %c0_13], %13 {strides = array<i32>} : memref<1x8x1x8x8xf32, #tpu.memory_space<vmem>>, vector<1x8x1x8x8xf32>,
    return
  }
  func.func @transform_0(%arg0: i32, %arg1: i32) -> (i32, i32, i32, i32) {
    %c0_i32 = arith.constant 0 : i32
    %c0_i32_0 = arith.constant 0 : i32
    %c0_i32_1 = arith.constant 0 : i32
    %c0_i32_2 = arith.constant 0 : i32
    return %arg0, %c0_i32, %c0_i32_0, %c0_i32_1 : i32, i32, i32, i32
  }
  func.func @transform_1(%arg0: i32, %arg1: i32) -> (i32, i32, i32) {
    %c0_i32 = arith.constant 0 : i32
    %c0_i32_0 = arith.constant 0 : i32
    %c0_i32_1 = arith.constant 0 : i32
    return %arg1, %c0_i32, %c0_i32_0 : i32, i32, i32
  }
  func.func @transform_2(%arg0: i32, %arg1: i32) -> (i32, i32, i32) {
    %c0_i32 = arith.constant 0 : i32
    %c0_i32_0 = arith.constant 0 : i32
    %c0_i32_1 = arith.constant 0 : i32
    return %arg1, %c0_i32, %c0_i32_0 : i32, i32, i32
  }
  func.func @transform_3(%arg0: i32, %arg1: i32) -> (i32, i32, i32, i32, i32) {
    %c0_i32 = arith.constant 0 : i32
    %c0_i32_0 = arith.constant 0 : i32
    %c0_i32_1 = arith.constant 0 : i32
    %c0_i32_2 = arith.constant 0 : i32
    return %arg0, %c0_i32, %arg1, %c0_i32_0, %c0_i32_1 : i32, i32, i32, i32, i32
  }
}

module attributes {stable_mosaic.version = 11 : i64} {
  func.func @_conv3x3_kernel(%arg0: i32, %arg1: memref<1x16x16x8xf32, #tpu.memory_space<vmem>>, %arg2: memref<1x8xf32, #tpu.memory_space<vmem>>, %arg3: memref<1x8xf32, #tpu.memory_space<vmem>>, %arg4: memref<72x8xf32, #tpu.memory_space<vmem>>, %arg5: memref<1x8xf32, #tpu.memory_space<vmem>>, %arg6: memref<1x16x16x8xf32, #tpu.memory_space<vmem>>, %arg7: memref<1x1x8xf32, #tpu.memory_space<vmem>>, %arg8: memref<1x1x8xf32, #tpu.memory_space<vmem>>, %arg9: memref<18x18x8xf32, #tpu.memory_space<vmem>>) attributes {dimension_semantics = [#tpu.dimension_semantics<parallel>], iteration_bounds = array<i64: 2>, scalar_prefetch = 0 : i64, scratch_operands = 1 : i64, tpu.core_type = #tpu.core_type<tc>, window_params = [{transform_indices = @transform_0, window_bounds = array<i64: 1, 16, 16, 8>}, {pipeline_mode = #tpu.pipeline_mode<synchronous>, transform_indices = @transform_1, window_bounds = array<i64: 1, 8>}, {pipeline_mode = #tpu.pipeline_mode<synchronous>, transform_indices = @transform_2, window_bounds = array<i64: 1, 8>}, {pipeline_mode = #tpu.pipeline_mode<synchronous>, transform_indices = @transform_3, window_bounds = array<i64: 72, 8>}, {pipeline_mode = #tpu.pipeline_mode<synchronous>, transform_indices = @transform_4, window_bounds = array<i64: 1, 8>}, {transform_indices = @transform_5, window_bounds = array<i64: 1, 16, 16, 8>}, {transform_indices = @transform_6, window_bounds = array<i64: 1, 1, 8>}, {transform_indices = @transform_7, window_bounds = array<i64: 1, 1, 8>}]} {
    %c0 = arith.constant 0 : index
    %c0_0 = arith.constant 0 : index
    %c0_1 = arith.constant 0 : index
    %c0_2 = arith.constant 0 : index
    %0 = vector.load %arg1[%c0, %c0_0, %c0_1, %c0_2] : memref<1x16x16x8xf32, #tpu.memory_space<vmem>>, vector<1x16x16x8xf32>
    %1 = vector.shape_cast %0 : vector<1x16x16x8xf32> to vector<16x16x8xf32>
    %c0_3 = arith.constant 0 : index
    %c0_4 = arith.constant 0 : index
    %2 = vector.load %arg2[%c0_3, %c0_4] : memref<1x8xf32, #tpu.memory_space<vmem>>, vector<1x8xf32>
    %3 = vector.shape_cast %2 : vector<1x8xf32> to vector<1x1x8xf32>
    %4 = vector.broadcast %3 : vector<1x1x8xf32> to vector<16x16x8xf32>
    %5 = arith.mulf %1, %4 : vector<16x16x8xf32>
    %c0_5 = arith.constant 0 : index
    %c0_6 = arith.constant 0 : index
    %6 = vector.load %arg3[%c0_5, %c0_6] : memref<1x8xf32, #tpu.memory_space<vmem>>, vector<1x8xf32>
    %7 = vector.shape_cast %6 : vector<1x8xf32> to vector<1x1x8xf32>
    %8 = vector.broadcast %7 : vector<1x1x8xf32> to vector<16x16x8xf32>
    %9 = arith.addf %5, %8 : vector<16x16x8xf32>
    %cst = arith.constant 0.000000e+00 : f32
    %10 = vector.broadcast %cst : f32 to vector<16x16x8xf32>
    %11 = arith.maximumf %9, %10 : vector<16x16x8xf32>
    %cst_7 = arith.constant 0.000000e+00 : f32
    %12 = vector.broadcast %cst_7 : f32 to vector<18x18x8xf32>
    %c0_8 = arith.constant 0 : index
    %c0_9 = arith.constant 0 : index
    %c0_10 = arith.constant 0 : index
    %13 = vector.load %arg9[%c0_8, %c0_9, %c0_10] : memref<18x18x8xf32, #tpu.memory_space<vmem>>, vector<18x18x8xf32>
    tpu.vector_store %arg9[%c0_8, %c0_9, %c0_10], %12 {strides = array<i32>} : memref<18x18x8xf32, #tpu.memory_space<vmem>>, vector<18x18x8xf32>,
    %c1 = arith.constant 1 : index
    %c1_11 = arith.constant 1 : index
    %c0_12 = arith.constant 0 : index
    %14 = vector.load %arg9[%c1, %c1_11, %c0_12] : memref<18x18x8xf32, #tpu.memory_space<vmem>>, vector<16x16x8xf32>
    tpu.vector_store %arg9[%c1, %c1_11, %c0_12], %11 {strides = array<i32>} : memref<18x18x8xf32, #tpu.memory_space<vmem>>, vector<16x16x8xf32>,
    %c0_13 = arith.constant 0 : index
    %c0_14 = arith.constant 0 : index
    %c0_15 = arith.constant 0 : index
    %15 = vector.load %arg9[%c0_13, %c0_14, %c0_15] : memref<18x18x8xf32, #tpu.memory_space<vmem>>, vector<16x16x8xf32>
    %16 = vector.shape_cast %15 : vector<16x16x8xf32> to vector<256x8xf32>
    %c0_16 = arith.constant 0 : index
    %c1_17 = arith.constant 1 : index
    %c0_18 = arith.constant 0 : index
    %17 = vector.load %arg9[%c0_16, %c1_17, %c0_18] : memref<18x18x8xf32, #tpu.memory_space<vmem>>, vector<16x16x8xf32>
    %18 = vector.shape_cast %17 : vector<16x16x8xf32> to vector<256x8xf32>
    %c0_19 = arith.constant 0 : index
    %c2 = arith.constant 2 : index
    %c0_20 = arith.constant 0 : index
    %19 = vector.load %arg9[%c0_19, %c2, %c0_20] : memref<18x18x8xf32, #tpu.memory_space<vmem>>, vector<16x16x8xf32>
    %20 = vector.shape_cast %19 : vector<16x16x8xf32> to vector<256x8xf32>
    %c1_21 = arith.constant 1 : index
    %c0_22 = arith.constant 0 : index
    %c0_23 = arith.constant 0 : index
    %21 = vector.load %arg9[%c1_21, %c0_22, %c0_23] : memref<18x18x8xf32, #tpu.memory_space<vmem>>, vector<16x16x8xf32>
    %22 = vector.shape_cast %21 : vector<16x16x8xf32> to vector<256x8xf32>
    %c1_24 = arith.constant 1 : index
    %c1_25 = arith.constant 1 : index
    %c0_26 = arith.constant 0 : index
    %23 = vector.load %arg9[%c1_24, %c1_25, %c0_26] : memref<18x18x8xf32, #tpu.memory_space<vmem>>, vector<16x16x8xf32>
    %24 = vector.shape_cast %23 : vector<16x16x8xf32> to vector<256x8xf32>
    %c1_27 = arith.constant 1 : index
    %c2_28 = arith.constant 2 : index
    %c0_29 = arith.constant 0 : index
    %25 = vector.load %arg9[%c1_27, %c2_28, %c0_29] : memref<18x18x8xf32, #tpu.memory_space<vmem>>, vector<16x16x8xf32>
    %26 = vector.shape_cast %25 : vector<16x16x8xf32> to vector<256x8xf32>
    %c2_30 = arith.constant 2 : index
    %c0_31 = arith.constant 0 : index
    %c0_32 = arith.constant 0 : index
    %27 = vector.load %arg9[%c2_30, %c0_31, %c0_32] : memref<18x18x8xf32, #tpu.memory_space<vmem>>, vector<16x16x8xf32>
    %28 = vector.shape_cast %27 : vector<16x16x8xf32> to vector<256x8xf32>
    %c2_33 = arith.constant 2 : index
    %c1_34 = arith.constant 1 : index
    %c0_35 = arith.constant 0 : index
    %29 = vector.load %arg9[%c2_33, %c1_34, %c0_35] : memref<18x18x8xf32, #tpu.memory_space<vmem>>, vector<16x16x8xf32>
    %30 = vector.shape_cast %29 : vector<16x16x8xf32> to vector<256x8xf32>
    %c2_36 = arith.constant 2 : index
    %c2_37 = arith.constant 2 : index
    %c0_38 = arith.constant 0 : index
    %31 = vector.load %arg9[%c2_36, %c2_37, %c0_38] : memref<18x18x8xf32, #tpu.memory_space<vmem>>, vector<16x16x8xf32>
    %32 = vector.shape_cast %31 : vector<16x16x8xf32> to vector<256x8xf32>
    %33 = tpu.concatenate %16, %18, %20, %22, %24, %26, %28, %30, %32 in 1 : vector<256x8xf32>, vector<256x8xf32>, vector<256x8xf32>, vector<256x8xf32>, vector<256x8xf32>, vector<256x8xf32>, vector<256x8xf32>, vector<256x8xf32>, vector<256x8xf32> -> vector<256x72xf32>
    %c0_39 = arith.constant 0 : index
    %c0_40 = arith.constant 0 : index
    %34 = vector.load %arg4[%c0_39, %c0_40] : memref<72x8xf32, #tpu.memory_space<vmem>>, vector<72x8xf32>
    %cst_41 = arith.constant dense<0.000000e+00> : vector<256x8xf32>
    %35 = tpu.matmul %33, %34, %cst_41 {dimension_numbers = #tpu.dot_dimension_numbers<[1], [0], [0], [1], [0, 0, 1, 1], [], []>} : vector<256x72xf32>, vector<72x8xf32>, vector<256x8xf32> -> vector<256x8xf32>
    %c0_42 = arith.constant 0 : index
    %c0_43 = arith.constant 0 : index
    %36 = vector.load %arg5[%c0_42, %c0_43] : memref<1x8xf32, #tpu.memory_space<vmem>>, vector<1x8xf32>
    %37 = vector.broadcast %36 : vector<1x8xf32> to vector<256x8xf32>
    %38 = arith.addf %35, %37 : vector<256x8xf32>
    %39 = vector.shape_cast %38 : vector<256x8xf32> to vector<16x16x8xf32>
    %c0_44 = arith.constant 0 : index
    %c0_45 = arith.constant 0 : index
    %c0_46 = arith.constant 0 : index
    %c0_47 = arith.constant 0 : index
    %40 = vector.load %arg6[%c0_44, %c0_45, %c0_46, %c0_47] : memref<1x16x16x8xf32, #tpu.memory_space<vmem>>, vector<1x16x16x8xf32>
    %41 = vector.shape_cast %40 : vector<1x16x16x8xf32> to vector<16x16x8xf32>
    %42 = vector.shape_cast %39 : vector<16x16x8xf32> to vector<1x16x16x8xf32>
    tpu.vector_store %arg6[%c0_44, %c0_45, %c0_46, %c0_47], %42 {strides = array<i32>} : memref<1x16x16x8xf32, #tpu.memory_space<vmem>>, vector<1x16x16x8xf32>,
    %cst_48 = arith.constant dense<0.000000e+00> : vector<8xf32>
    %43 = vector.multi_reduction <add>, %38, %cst_48 [0] : vector<256x8xf32> to vector<8xf32>
    %44 = vector.shape_cast %43 : vector<8xf32> to vector<1x8xf32>
    %c0_49 = arith.constant 0 : index
    %c0_50 = arith.constant 0 : index
    %c0_51 = arith.constant 0 : index
    %45 = vector.load %arg7[%c0_49, %c0_50, %c0_51] : memref<1x1x8xf32, #tpu.memory_space<vmem>>, vector<1x1x8xf32>
    %46 = vector.shape_cast %45 : vector<1x1x8xf32> to vector<1x8xf32>
    %47 = vector.shape_cast %44 : vector<1x8xf32> to vector<1x1x8xf32>
    tpu.vector_store %arg7[%c0_49, %c0_50, %c0_51], %47 {strides = array<i32>} : memref<1x1x8xf32, #tpu.memory_space<vmem>>, vector<1x1x8xf32>,
    %48 = arith.mulf %38, %38 : vector<256x8xf32>
    %cst_52 = arith.constant dense<0.000000e+00> : vector<8xf32>
    %49 = vector.multi_reduction <add>, %48, %cst_52 [0] : vector<256x8xf32> to vector<8xf32>
    %50 = vector.shape_cast %49 : vector<8xf32> to vector<1x8xf32>
    %c0_53 = arith.constant 0 : index
    %c0_54 = arith.constant 0 : index
    %c0_55 = arith.constant 0 : index
    %51 = vector.load %arg8[%c0_53, %c0_54, %c0_55] : memref<1x1x8xf32, #tpu.memory_space<vmem>>, vector<1x1x8xf32>
    %52 = vector.shape_cast %51 : vector<1x1x8xf32> to vector<1x8xf32>
    %53 = vector.shape_cast %50 : vector<1x8xf32> to vector<1x1x8xf32>
    tpu.vector_store %arg8[%c0_53, %c0_54, %c0_55], %53 {strides = array<i32>} : memref<1x1x8xf32, #tpu.memory_space<vmem>>, vector<1x1x8xf32>,
    return
  }
  func.func @transform_0(%arg0: i32) -> (i32, i32, i32, i32) {
    %c0_i32 = arith.constant 0 : i32
    %c0_i32_0 = arith.constant 0 : i32
    %c0_i32_1 = arith.constant 0 : i32
    %c0_i32_2 = arith.constant 0 : i32
    return %arg0, %c0_i32, %c0_i32_0, %c0_i32_1 : i32, i32, i32, i32
  }
  func.func @transform_1(%arg0: i32) -> (i32, i32) {
    %c0_i32 = arith.constant 0 : i32
    %c0_i32_0 = arith.constant 0 : i32
    %c0_i32_1 = arith.constant 0 : i32
    return %c0_i32, %c0_i32_0 : i32, i32
  }
  func.func @transform_2(%arg0: i32) -> (i32, i32) {
    %c0_i32 = arith.constant 0 : i32
    %c0_i32_0 = arith.constant 0 : i32
    %c0_i32_1 = arith.constant 0 : i32
    return %c0_i32, %c0_i32_0 : i32, i32
  }
  func.func @transform_3(%arg0: i32) -> (i32, i32) {
    %c0_i32 = arith.constant 0 : i32
    %c0_i32_0 = arith.constant 0 : i32
    %c0_i32_1 = arith.constant 0 : i32
    return %c0_i32, %c0_i32_0 : i32, i32
  }
  func.func @transform_4(%arg0: i32) -> (i32, i32) {
    %c0_i32 = arith.constant 0 : i32
    %c0_i32_0 = arith.constant 0 : i32
    %c0_i32_1 = arith.constant 0 : i32
    return %c0_i32, %c0_i32_0 : i32, i32
  }
  func.func @transform_5(%arg0: i32) -> (i32, i32, i32, i32) {
    %c0_i32 = arith.constant 0 : i32
    %c0_i32_0 = arith.constant 0 : i32
    %c0_i32_1 = arith.constant 0 : i32
    %c0_i32_2 = arith.constant 0 : i32
    return %arg0, %c0_i32, %c0_i32_0, %c0_i32_1 : i32, i32, i32, i32
  }
  func.func @transform_6(%arg0: i32) -> (i32, i32, i32) {
    %c0_i32 = arith.constant 0 : i32
    %c0_i32_0 = arith.constant 0 : i32
    %c0_i32_1 = arith.constant 0 : i32
    return %arg0, %c0_i32, %c0_i32_0 : i32, i32, i32
  }
  func.func @transform_7(%arg0: i32) -> (i32, i32, i32) {
    %c0_i32 = arith.constant 0 : i32
    %c0_i32_0 = arith.constant 0 : i32
    %c0_i32_1 = arith.constant 0 : i32
    return %arg0, %c0_i32, %c0_i32_0 : i32, i32, i32
  }
}

module attributes {stable_mosaic.version = 11 : i64} {
  func.func @_conv3x3_kernel(%arg0: i32, %arg1: memref<1x16x16x8xf32, #tpu.memory_space<vmem>>, %arg2: memref<1x8xf32, #tpu.memory_space<vmem>>, %arg3: memref<1x8xf32, #tpu.memory_space<vmem>>, %arg4: memref<72x8xf32, #tpu.memory_space<vmem>>, %arg5: memref<1x8xf32, #tpu.memory_space<vmem>>, %arg6: memref<1x16x16x8xf32, #tpu.memory_space<vmem>>, %arg7: memref<1x1x8xf32, #tpu.memory_space<vmem>>, %arg8: memref<1x1x8xf32, #tpu.memory_space<vmem>>, %arg9: memref<18x18x8xf32, #tpu.memory_space<vmem>>) attributes {dimension_semantics = [#tpu.dimension_semantics<parallel>], iteration_bounds = array<i64: 2>, scalar_prefetch = 0 : i64, scratch_operands = 1 : i64, tpu.core_type = #tpu.core_type<tc>, window_params = [{transform_indices = @transform_0, window_bounds = array<i64: 1, 16, 16, 8>}, {pipeline_mode = #tpu.pipeline_mode<synchronous>, transform_indices = @transform_1, window_bounds = array<i64: 1, 8>}, {pipeline_mode = #tpu.pipeline_mode<synchronous>, transform_indices = @transform_2, window_bounds = array<i64: 1, 8>}, {pipeline_mode = #tpu.pipeline_mode<synchronous>, transform_indices = @transform_3, window_bounds = array<i64: 72, 8>}, {pipeline_mode = #tpu.pipeline_mode<synchronous>, transform_indices = @transform_4, window_bounds = array<i64: 1, 8>}, {transform_indices = @transform_5, window_bounds = array<i64: 1, 16, 16, 8>}, {transform_indices = @transform_6, window_bounds = array<i64: 1, 1, 8>}, {transform_indices = @transform_7, window_bounds = array<i64: 1, 1, 8>}]} {
    %c0 = arith.constant 0 : index
    %c0_0 = arith.constant 0 : index
    %c0_1 = arith.constant 0 : index
    %c0_2 = arith.constant 0 : index
    %0 = vector.load %arg1[%c0, %c0_0, %c0_1, %c0_2] : memref<1x16x16x8xf32, #tpu.memory_space<vmem>>, vector<1x16x16x8xf32>
    %1 = vector.shape_cast %0 : vector<1x16x16x8xf32> to vector<16x16x8xf32>
    %cst = arith.constant 0.000000e+00 : f32
    %2 = vector.broadcast %cst : f32 to vector<18x18x8xf32>
    %c0_3 = arith.constant 0 : index
    %c0_4 = arith.constant 0 : index
    %c0_5 = arith.constant 0 : index
    %3 = vector.load %arg9[%c0_3, %c0_4, %c0_5] : memref<18x18x8xf32, #tpu.memory_space<vmem>>, vector<18x18x8xf32>
    tpu.vector_store %arg9[%c0_3, %c0_4, %c0_5], %2 {strides = array<i32>} : memref<18x18x8xf32, #tpu.memory_space<vmem>>, vector<18x18x8xf32>,
    %c1 = arith.constant 1 : index
    %c1_6 = arith.constant 1 : index
    %c0_7 = arith.constant 0 : index
    %4 = vector.load %arg9[%c1, %c1_6, %c0_7] : memref<18x18x8xf32, #tpu.memory_space<vmem>>, vector<16x16x8xf32>
    tpu.vector_store %arg9[%c1, %c1_6, %c0_7], %1 {strides = array<i32>} : memref<18x18x8xf32, #tpu.memory_space<vmem>>, vector<16x16x8xf32>,
    %c0_8 = arith.constant 0 : index
    %c0_9 = arith.constant 0 : index
    %c0_10 = arith.constant 0 : index
    %5 = vector.load %arg9[%c0_8, %c0_9, %c0_10] : memref<18x18x8xf32, #tpu.memory_space<vmem>>, vector<16x16x8xf32>
    %6 = vector.shape_cast %5 : vector<16x16x8xf32> to vector<256x8xf32>
    %c0_11 = arith.constant 0 : index
    %c1_12 = arith.constant 1 : index
    %c0_13 = arith.constant 0 : index
    %7 = vector.load %arg9[%c0_11, %c1_12, %c0_13] : memref<18x18x8xf32, #tpu.memory_space<vmem>>, vector<16x16x8xf32>
    %8 = vector.shape_cast %7 : vector<16x16x8xf32> to vector<256x8xf32>
    %c0_14 = arith.constant 0 : index
    %c2 = arith.constant 2 : index
    %c0_15 = arith.constant 0 : index
    %9 = vector.load %arg9[%c0_14, %c2, %c0_15] : memref<18x18x8xf32, #tpu.memory_space<vmem>>, vector<16x16x8xf32>
    %10 = vector.shape_cast %9 : vector<16x16x8xf32> to vector<256x8xf32>
    %c1_16 = arith.constant 1 : index
    %c0_17 = arith.constant 0 : index
    %c0_18 = arith.constant 0 : index
    %11 = vector.load %arg9[%c1_16, %c0_17, %c0_18] : memref<18x18x8xf32, #tpu.memory_space<vmem>>, vector<16x16x8xf32>
    %12 = vector.shape_cast %11 : vector<16x16x8xf32> to vector<256x8xf32>
    %c1_19 = arith.constant 1 : index
    %c1_20 = arith.constant 1 : index
    %c0_21 = arith.constant 0 : index
    %13 = vector.load %arg9[%c1_19, %c1_20, %c0_21] : memref<18x18x8xf32, #tpu.memory_space<vmem>>, vector<16x16x8xf32>
    %14 = vector.shape_cast %13 : vector<16x16x8xf32> to vector<256x8xf32>
    %c1_22 = arith.constant 1 : index
    %c2_23 = arith.constant 2 : index
    %c0_24 = arith.constant 0 : index
    %15 = vector.load %arg9[%c1_22, %c2_23, %c0_24] : memref<18x18x8xf32, #tpu.memory_space<vmem>>, vector<16x16x8xf32>
    %16 = vector.shape_cast %15 : vector<16x16x8xf32> to vector<256x8xf32>
    %c2_25 = arith.constant 2 : index
    %c0_26 = arith.constant 0 : index
    %c0_27 = arith.constant 0 : index
    %17 = vector.load %arg9[%c2_25, %c0_26, %c0_27] : memref<18x18x8xf32, #tpu.memory_space<vmem>>, vector<16x16x8xf32>
    %18 = vector.shape_cast %17 : vector<16x16x8xf32> to vector<256x8xf32>
    %c2_28 = arith.constant 2 : index
    %c1_29 = arith.constant 1 : index
    %c0_30 = arith.constant 0 : index
    %19 = vector.load %arg9[%c2_28, %c1_29, %c0_30] : memref<18x18x8xf32, #tpu.memory_space<vmem>>, vector<16x16x8xf32>
    %20 = vector.shape_cast %19 : vector<16x16x8xf32> to vector<256x8xf32>
    %c2_31 = arith.constant 2 : index
    %c2_32 = arith.constant 2 : index
    %c0_33 = arith.constant 0 : index
    %21 = vector.load %arg9[%c2_31, %c2_32, %c0_33] : memref<18x18x8xf32, #tpu.memory_space<vmem>>, vector<16x16x8xf32>
    %22 = vector.shape_cast %21 : vector<16x16x8xf32> to vector<256x8xf32>
    %23 = tpu.concatenate %6, %8, %10, %12, %14, %16, %18, %20, %22 in 1 : vector<256x8xf32>, vector<256x8xf32>, vector<256x8xf32>, vector<256x8xf32>, vector<256x8xf32>, vector<256x8xf32>, vector<256x8xf32>, vector<256x8xf32>, vector<256x8xf32> -> vector<256x72xf32>
    %c0_34 = arith.constant 0 : index
    %c0_35 = arith.constant 0 : index
    %24 = vector.load %arg4[%c0_34, %c0_35] : memref<72x8xf32, #tpu.memory_space<vmem>>, vector<72x8xf32>
    %cst_36 = arith.constant dense<0.000000e+00> : vector<256x8xf32>
    %25 = tpu.matmul %23, %24, %cst_36 {dimension_numbers = #tpu.dot_dimension_numbers<[1], [0], [0], [1], [0, 0, 1, 1], [], []>} : vector<256x72xf32>, vector<72x8xf32>, vector<256x8xf32> -> vector<256x8xf32>
    %c0_37 = arith.constant 0 : index
    %c0_38 = arith.constant 0 : index
    %26 = vector.load %arg5[%c0_37, %c0_38] : memref<1x8xf32, #tpu.memory_space<vmem>>, vector<1x8xf32>
    %27 = vector.broadcast %26 : vector<1x8xf32> to vector<256x8xf32>
    %28 = arith.addf %25, %27 : vector<256x8xf32>
    %29 = vector.shape_cast %28 : vector<256x8xf32> to vector<16x16x8xf32>
    %c0_39 = arith.constant 0 : index
    %c0_40 = arith.constant 0 : index
    %c0_41 = arith.constant 0 : index
    %c0_42 = arith.constant 0 : index
    %30 = vector.load %arg6[%c0_39, %c0_40, %c0_41, %c0_42] : memref<1x16x16x8xf32, #tpu.memory_space<vmem>>, vector<1x16x16x8xf32>
    %31 = vector.shape_cast %30 : vector<1x16x16x8xf32> to vector<16x16x8xf32>
    %32 = vector.shape_cast %29 : vector<16x16x8xf32> to vector<1x16x16x8xf32>
    tpu.vector_store %arg6[%c0_39, %c0_40, %c0_41, %c0_42], %32 {strides = array<i32>} : memref<1x16x16x8xf32, #tpu.memory_space<vmem>>, vector<1x16x16x8xf32>,
    %cst_43 = arith.constant dense<0.000000e+00> : vector<8xf32>
    %33 = vector.multi_reduction <add>, %28, %cst_43 [0] : vector<256x8xf32> to vector<8xf32>
    %34 = vector.shape_cast %33 : vector<8xf32> to vector<1x8xf32>
    %c0_44 = arith.constant 0 : index
    %c0_45 = arith.constant 0 : index
    %c0_46 = arith.constant 0 : index
    %35 = vector.load %arg7[%c0_44, %c0_45, %c0_46] : memref<1x1x8xf32, #tpu.memory_space<vmem>>, vector<1x1x8xf32>
    %36 = vector.shape_cast %35 : vector<1x1x8xf32> to vector<1x8xf32>
    %37 = vector.shape_cast %34 : vector<1x8xf32> to vector<1x1x8xf32>
    tpu.vector_store %arg7[%c0_44, %c0_45, %c0_46], %37 {strides = array<i32>} : memref<1x1x8xf32, #tpu.memory_space<vmem>>, vector<1x1x8xf32>,
    %38 = arith.mulf %28, %28 : vector<256x8xf32>
    %cst_47 = arith.constant dense<0.000000e+00> : vector<8xf32>
    %39 = vector.multi_reduction <add>, %38, %cst_47 [0] : vector<256x8xf32> to vector<8xf32>
    %40 = vector.shape_cast %39 : vector<8xf32> to vector<1x8xf32>
    %c0_48 = arith.constant 0 : index
    %c0_49 = arith.constant 0 : index
    %c0_50 = arith.constant 0 : index
    %41 = vector.load %arg8[%c0_48, %c0_49, %c0_50] : memref<1x1x8xf32, #tpu.memory_space<vmem>>, vector<1x1x8xf32>
    %42 = vector.shape_cast %41 : vector<1x1x8xf32> to vector<1x8xf32>
    %43 = vector.shape_cast %40 : vector<1x8xf32> to vector<1x1x8xf32>
    tpu.vector_store %arg8[%c0_48, %c0_49, %c0_50], %43 {strides = array<i32>} : memref<1x1x8xf32, #tpu.memory_space<vmem>>, vector<1x1x8xf32>,
    return
  }
  func.func @transform_0(%arg0: i32) -> (i32, i32, i32, i32) {
    %c0_i32 = arith.constant 0 : i32
    %c0_i32_0 = arith.constant 0 : i32
    %c0_i32_1 = arith.constant 0 : i32
    %c0_i32_2 = arith.constant 0 : i32
    return %arg0, %c0_i32, %c0_i32_0, %c0_i32_1 : i32, i32, i32, i32
  }
  func.func @transform_1(%arg0: i32) -> (i32, i32) {
    %c0_i32 = arith.constant 0 : i32
    %c0_i32_0 = arith.constant 0 : i32
    %c0_i32_1 = arith.constant 0 : i32
    return %c0_i32, %c0_i32_0 : i32, i32
  }
  func.func @transform_2(%arg0: i32) -> (i32, i32) {
    %c0_i32 = arith.constant 0 : i32
    %c0_i32_0 = arith.constant 0 : i32
    %c0_i32_1 = arith.constant 0 : i32
    return %c0_i32, %c0_i32_0 : i32, i32
  }
  func.func @transform_3(%arg0: i32) -> (i32, i32) {
    %c0_i32 = arith.constant 0 : i32
    %c0_i32_0 = arith.constant 0 : i32
    %c0_i32_1 = arith.constant 0 : i32
    return %c0_i32, %c0_i32_0 : i32, i32
  }
  func.func @transform_4(%arg0: i32) -> (i32, i32) {
    %c0_i32 = arith.constant 0 : i32
    %c0_i32_0 = arith.constant 0 : i32
    %c0_i32_1 = arith.constant 0 : i32
    return %c0_i32, %c0_i32_0 : i32, i32
  }
  func.func @transform_5(%arg0: i32) -> (i32, i32, i32, i32) {
    %c0_i32 = arith.constant 0 : i32
    %c0_i32_0 = arith.constant 0 : i32
    %c0_i32_1 = arith.constant 0 : i32
    %c0_i32_2 = arith.constant 0 : i32
    return %arg0, %c0_i32, %c0_i32_0, %c0_i32_1 : i32, i32, i32, i32
  }
  func.func @transform_6(%arg0: i32) -> (i32, i32, i32) {
    %c0_i32 = arith.constant 0 : i32
    %c0_i32_0 = arith.constant 0 : i32
    %c0_i32_1 = arith.constant 0 : i32
    return %arg0, %c0_i32, %c0_i32_0 : i32, i32, i32
  }
  func.func @transform_7(%arg0: i32) -> (i32, i32, i32) {
    %c0_i32 = arith.constant 0 : i32
    %c0_i32_0 = arith.constant 0 : i32
    %c0_i32_1 = arith.constant 0 : i32
    return %arg0, %c0_i32, %c0_i32_0 : i32, i32, i32
  }
}

module attributes {stable_mosaic.version = 11 : i64} {
  func.func @_bn_relu_kernel(%arg0: i32, %arg1: memref<1x16x128xf32, #tpu.memory_space<vmem>>, %arg2: memref<1x128xf32, #tpu.memory_space<vmem>>, %arg3: memref<1x128xf32, #tpu.memory_space<vmem>>, %arg4: memref<1x16x128xf32, #tpu.memory_space<vmem>>) attributes {dimension_semantics = [#tpu.dimension_semantics<parallel>], iteration_bounds = array<i64: 2>, scalar_prefetch = 0 : i64, scratch_operands = 0 : i64, tpu.core_type = #tpu.core_type<tc>, window_params = [{transform_indices = @transform_0, window_bounds = array<i64: 1, 16, 128>}, {pipeline_mode = #tpu.pipeline_mode<synchronous>, transform_indices = @transform_1, window_bounds = array<i64: 1, 128>}, {pipeline_mode = #tpu.pipeline_mode<synchronous>, transform_indices = @transform_2, window_bounds = array<i64: 1, 128>}, {transform_indices = @transform_3, window_bounds = array<i64: 1, 16, 128>}]} {
    %c0 = arith.constant 0 : index
    %c0_0 = arith.constant 0 : index
    %c0_1 = arith.constant 0 : index
    %0 = vector.load %arg1[%c0, %c0_0, %c0_1] : memref<1x16x128xf32, #tpu.memory_space<vmem>>, vector<1x16x128xf32>
    %1 = vector.shape_cast %0 : vector<1x16x128xf32> to vector<16x128xf32>
    %c0_2 = arith.constant 0 : index
    %c0_3 = arith.constant 0 : index
    %2 = vector.load %arg2[%c0_2, %c0_3] : memref<1x128xf32, #tpu.memory_space<vmem>>, vector<1x128xf32>
    %3 = vector.broadcast %2 : vector<1x128xf32> to vector<16x128xf32>
    %4 = arith.mulf %1, %3 : vector<16x128xf32>
    %c0_4 = arith.constant 0 : index
    %c0_5 = arith.constant 0 : index
    %5 = vector.load %arg3[%c0_4, %c0_5] : memref<1x128xf32, #tpu.memory_space<vmem>>, vector<1x128xf32>
    %6 = vector.broadcast %5 : vector<1x128xf32> to vector<16x128xf32>
    %7 = arith.addf %4, %6 : vector<16x128xf32>
    %cst = arith.constant 0.000000e+00 : f32
    %8 = vector.broadcast %cst : f32 to vector<16x128xf32>
    %9 = arith.maximumf %7, %8 : vector<16x128xf32>
    %c0_6 = arith.constant 0 : index
    %c0_7 = arith.constant 0 : index
    %c0_8 = arith.constant 0 : index
    %10 = vector.load %arg4[%c0_6, %c0_7, %c0_8] : memref<1x16x128xf32, #tpu.memory_space<vmem>>, vector<1x16x128xf32>
    %11 = vector.shape_cast %10 : vector<1x16x128xf32> to vector<16x128xf32>
    %12 = vector.shape_cast %9 : vector<16x128xf32> to vector<1x16x128xf32>
    tpu.vector_store %arg4[%c0_6, %c0_7, %c0_8], %12 {strides = array<i32>} : memref<1x16x128xf32, #tpu.memory_space<vmem>>, vector<1x16x128xf32>,
    return
  }
  func.func @transform_0(%arg0: i32) -> (i32, i32, i32) {
    %c0_i32 = arith.constant 0 : i32
    %c0_i32_0 = arith.constant 0 : i32
    %c0_i32_1 = arith.constant 0 : i32
    return %arg0, %c0_i32, %c0_i32_0 : i32, i32, i32
  }
  func.func @transform_1(%arg0: i32) -> (i32, i32) {
    %c0_i32 = arith.constant 0 : i32
    %c0_i32_0 = arith.constant 0 : i32
    %c0_i32_1 = arith.constant 0 : i32
    return %c0_i32, %c0_i32_0 : i32, i32
  }
  func.func @transform_2(%arg0: i32) -> (i32, i32) {
    %c0_i32 = arith.constant 0 : i32
    %c0_i32_0 = arith.constant 0 : i32
    %c0_i32_1 = arith.constant 0 : i32
    return %c0_i32, %c0_i32_0 : i32, i32
  }
  func.func @transform_3(%arg0: i32) -> (i32, i32, i32) {
    %c0_i32 = arith.constant 0 : i32
    %c0_i32_0 = arith.constant 0 : i32
    %c0_i32_1 = arith.constant 0 : i32
    return %arg0, %c0_i32, %c0_i32_0 : i32, i32, i32
  }
}

</mosaic_0001>

<llo_original>
// kernel: tile.13
$region0: #{tile.13}
  #allocation0 [shape = 's32[1]{0}', space=sflag, size = 0x4, scoped, tag = 'scoped memory for tile.13']
  %s0 = inlined_call_operand.vmem [shape: f32[8], index: 0, kind: input, shape index: {}]
  %s1 = inlined_call_operand.vmem [shape: f32[16,8], index: 1, kind: output, shape index: {}]
  // Predicated region
  $region2: #{tile.13} parent=0 // pred_check
    _
  $region3: #{tile.13} parent=0 // pred_check_branch
    %3 = sbr.rel (0) target = $region5
  $region4: #{tile.13} parent=0 // pred_region
    _
  $region5: #{tile.13} parent=0 // pred_fallthru
    _
  %v4 = vld [vmem:[%s0] ss:$0 sm:$0xff]
  %5 = vst [vmem:[%s1] sm:$0xff] %v4
  %s6 = scalar_lea.vmem %s1, 8
  %7 = vst [vmem:[%s6] sm:$0xff] %v4

// kernel: tile.14
$region0: #{tile.14}
  %s0 = inlined_call_operand.vmem [shape: f32[16,8], index: 0, kind: input, shape index: {}]
  %s1 = inlined_call_operand.vmem [shape: f32[1,128], index: 1, kind: output, shape index: {}]
  $region1: #{tile.14} parent=0
    #allocation0 [shape = 'u8[4096]{0}', space=vmem, size = 0x1000, scoped, tag = 'scoped mem for output reshape']
    %v2 = vld [vmem:[%s0] sm:$0x1]
    %vm3 = vcmask 64512
    %4 = vst.msk [vmem:[#allocation0] sm:$0x1] %vm3, %v2
    %s5 = scalar_lea.vmem %s0, 15
    %v6 = vld [vmem:[%s5] sm:$0x1]
    %7 = vrot.lane.b32.xlu0 %v6, 120
    %v8 = vpop.permute.xlu0 %7
    %vm9 = vcmask 1048512
    %10 = vst.msk [vmem:[#allocation0] sm:$0x1] %vm9, %v8
    %s11 = scalar_lea.vmem %s0, 14
    %v12 = vld [vmem:[%s11] sm:$0x1]
    %13 = vrot.lane.b32.xlu0 %v12, 112
    %v14 = vpop.permute.xlu0 %13
    %vm15 = vcmask 982912
    %16 = vst.msk [vmem:[#allocation0] sm:$0x1] %vm15, %v14
    %s17 = scalar_lea.vmem %s0, 13
    %v18 = vld [vmem:[%s17] sm:$0x1]
    %19 = vrot.lane.b32.xlu0 %v18, 104
    %v20 = vpop.permute.xlu0 %19
    %vm21 = vcmask 917312
    %22 = vst.msk [vmem:[#allocation0] sm:$0x1] %vm21, %v20
    %s23 = scalar_lea.vmem %s0, 12
    %v24 = vld [vmem:[%s23] sm:$0x1]
    %25 = vrot.lane.b32.xlu0 %v24, 96
    %v26 = vpop.permute.xlu0 %25
    %vm27 = vcmask 851712
    %28 = vst.msk [vmem:[#allocation0] sm:$0x1] %vm27, %v26
    %s29 = scalar_lea.vmem %s0, 11
    %v30 = vld [vmem:[%s29] sm:$0x1]
    %31 = vrot.lane.b32.xlu0 %v30, 88
    %v32 = vpop.permute.xlu0 %31
    %vm33 = vcmask 786112
    %34 = vst.msk [vmem:[#allocation0] sm:$0x1] %vm33, %v32
    %s35 = scalar_lea.vmem %s0, 10
    %v36 = vld [vmem:[%s35] sm:$0x1]
    %37 = vrot.lane.b32.xlu0 %v36, 80
    %v38 = vpop.permute.xlu0 %37
    %vm39 = vcmask 720512
    %40 = vst.msk [vmem:[#allocation0] sm:$0x1] %vm39, %v38
    %s41 = scalar_lea.vmem %s0, 9
    %v42 = vld [vmem:[%s41] sm:$0x1]
    %43 = vrot.lane.b32.xlu0 %v42, 72
    %v44 = vpop.permute.xlu0 %43
    %vm45 = vcmask 654912
    %46 = vst.msk [vmem:[#allocation0] sm:$0x1] %vm45, %v44
    %s47 = scalar_lea.vmem %s0, 8
    %v48 = vld [vmem:[%s47] sm:$0x1]
    %49 = vrot.lane.b32.xlu0 %v48, 64
    %v50 = vpop.permute.xlu0 %49
    %vm51 = vcmask 589312
    %52 = vst.msk [vmem:[#allocation0] sm:$0x1] %vm51, %v50
    %s53 = scalar_lea.vmem %s0, 7
    %v54 = vld [vmem:[%s53] sm:$0x1]
    %55 = vrot.lane.b32.xlu0 %v54, 56
    %v56 = vpop.permute.xlu0 %55
    %vm57 = vcmask 523712
    %58 = vst.msk [vmem:[#allocation0] sm:$0x1] %vm57, %v56
    %s59 = scalar_lea.vmem %s0, 6
    %v60 = vld [vmem:[%s59] sm:$0x1]
    %61 = vrot.lane.b32.xlu0 %v60, 48
    %v62 = vpop.permute.xlu0 %61
    %vm63 = vcmask 458112
    %64 = vst.msk [vmem:[#allocation0] sm:$0x1] %vm63, %v62
    %s65 = scalar_lea.vmem %s0, 5
    %v66 = vld [vmem:[%s65] sm:$0x1]
    %67 = vrot.lane.b32.xlu0 %v66, 40
    %v68 = vpop.permute.xlu0 %67
    %vm69 = vcmask 392512
    %70 = vst.msk [vmem:[#allocation0] sm:$0x1] %vm69, %v68
    %s71 = scalar_lea.vmem %s0, 4
    %v72 = vld [vmem:[%s71] sm:$0x1]
    %73 = vrot.lane.b32.xlu0 %v72, 32
    %v74 = vpop.permute.xlu0 %73
    %vm75 = vcmask 326912
    %76 = vst.msk [vmem:[#allocation0] sm:$0x1] %vm75, %v74
    %s77 = scalar_lea.vmem %s0, 3
    %v78 = vld [vmem:[%s77] sm:$0x1]
    %79 = vrot.lane.b32.xlu0 %v78, 24
    %v80 = vpop.permute.xlu0 %79
    %vm81 = vcmask 261312
    %82 = vst.msk [vmem:[#allocation0] sm:$0x1] %vm81, %v80
    %s83 = scalar_lea.vmem %s0, 2
    %v84 = vld [vmem:[%s83] sm:$0x1]
    %85 = vrot.lane.b32.xlu0 %v84, 16
    %v86 = vpop.permute.xlu0 %85
    %vm87 = vcmask 195712
    %88 = vst.msk [vmem:[#allocation0] sm:$0x1] %vm87, %v86
    %s89 = scalar_lea.vmem %s0, 1
    %v90 = vld [vmem:[%s89] sm:$0x1]
    %91 = vrot.lane.b32.xlu0 %v90, 8
    %v92 = vpop.permute.xlu0 %91
    %vm93 = vcmask 130112
    %94 = vst.msk [vmem:[#allocation0] sm:$0x1] %vm93, %v92
    %s96 = ssub.s32 2, 1
    %v97 = vld [vmem:[#allocation0] sm:%s96]
    %s99 = ssub.s32 2, 1
    %100 = vst [vmem:[%s1] sm:%s99] %v97

// kernel: upsampling_block_forward.4
$region0: #{upsampling_block_forward.4}
  #allocation0 [shape = 'u32[]', space=smem, size = 0x4, offset = 0x4, fixed_abs, tag = 'smem constant byte address 0x4 - core index']
  #allocation1 [shape = 'u32[72,128]{1,0:T(1,128)}', space=vmem, size = 0x9000, scoped, tag = 'internal scratch']
  %s0 = inlined_call_operand.vmem [shape: f32[2,8,8,4], index: 0, kind: input, shape index: {}]
  %s1 = inlined_call_operand.vmem [shape: f32[2,4,8], index: 1, kind: input, shape index: {}]
  %s2 = inlined_call_operand.vmem [shape: f32[2,1,8], index: 2, kind: input, shape index: {}]
  %s3 = inlined_call_operand.vmem [shape: f32[2,8,2,8,8], index: 3, kind: output, shape index: {}]
  %s4 = sld [smem:[#allocation0]]
  $region79: #{upsampling_block_forward.4} parent=0
    _
  %s6 = ssub.s32 1, %s4
  %s7 = scalar_select 0, %s6, %s4
  $region1: #{upsampling_block_forward.4} parent=0
    #allocation2 [shape = 'u8[65536]{0}', space=vmem, size = 0x10000, scoped, tag = 'output window, operand 0']
    loop: start=0, step=1, limit=6
    $region2: #{upsampling_block_forward.4} parent=1 // loop_pre_header
      _
    $region3: #{upsampling_block_forward.4} parent=1 // loop_header
      %s9 = sphi 0, %s13
      %p10 = scmp.ge.s32.totalorder %s9, 6
      %s16 = sphi 0, %s28
      %s17 = sphi 0, %s24
      %s18 = sphi 0, %s16
      %s19 = sphi 0, %s17
      %s20 = sphi 0, %s18
      %s21 = sphi 0, %s19
      %s31 = sphi 0, %s33
      %s34 = sphi 0, %s31
      %s35 = sphi 0, %s34
      %s51 = sphi 0, %s35
      %s57 = sphi 0, %s59
      %s60 = sphi 0, %s57
      %s61 = sphi 0, %s60
      %s77 = sphi 0, %s61
      %s83 = sphi 0, %s85
      %s86 = sphi 0, %s83
      %s87 = sphi 0, %s86
      %s103 = sphi 0, %s87
      %s111 = sphi 0, %s113
      %s114 = sphi 0, %s111
      %s115 = sphi 0, %s114
      %s131 = sphi 0, %s115
    $region4: #{upsampling_block_forward.4} parent=1 // loop_header_branch
      %12 = sbr.rel (%p10) target = $region8
    $region5: #{upsampling_block_forward.4} parent=1 // loop_body
      %s14 = ssub.s32 %s9, 1
      %s15 = ssub.s32 %s9, 2
      %s22 = sadd.s32 1, %s17
      %p23 = scmp.ge.s32.totalorder %s22, 2
      %s24 = scalar_select %p23, 0, %s22
      %s25 = sadd.s32 1, %s16
      %s26 = scalar_select %p23, %s25, %s16
      %p27 = scmp.ge.s32.totalorder %s26, 2
      %s28 = scalar_select %p27, 0, %s26
      %s29 = ssub.s32 %s16, %s28
      %p30 = scmp.eq.s32.totalorder %s29, 0
      %s32 = sadd.s32 %s31, 1
      %s33 = scalar_select %p30, %s31, %s32
      %p36 = pneg %p30
      %p37 = scmp.eq.s32.totalorder %s9, 3
      %p38 = por %p36, %p37
      %p39 = scmp.ne.s32.totalorder %s31, %s34
      %p40 = scmp.eq.s32.totalorder %s9, 0
      %p41 = por %p39, %p40
      %p42 = scmp.ne.s32.totalorder %s31, %s34
      %p43 = scmp.eq.s32.totalorder %s14, 3
      %p44 = por %p42, %p43
      %p45 = scmp.ne.s32.totalorder %s34, %s35
      %p46 = scmp.eq.s32.totalorder %s14, 0
      %p47 = por %p45, %p46
      %p48 = scmp.ne.s32.totalorder %s34, %s35
      %p49 = scmp.eq.s32.totalorder %s15, 3
      %p50 = por %p48, %p49
      %p52 = scmp.ne.s32.totalorder %s35, %s51
      %p53 = scmp.eq.s32.totalorder %s15, 0
      %p54 = por %p52, %p53
      %s55 = ssub.s32 %s17, %s24
      %p56 = scmp.eq.s32.totalorder %s55, 0
      %s58 = sadd.s32 %s57, 1
      %s59 = scalar_select %p56, %s57, %s58
      %p62 = pneg %p56
      %p63 = scmp.eq.s32.totalorder %s9, 3
      %p64 = por %p62, %p63
      %p65 = scmp.ne.s32.totalorder %s57, %s60
      %p66 = scmp.eq.s32.totalorder %s9, 0
      %p67 = por %p65, %p66
      %p68 = scmp.ne.s32.totalorder %s57, %s60
      %p69 = scmp.eq.s32.totalorder %s14, 3
      %p70 = por %p68, %p69
      %p71 = scmp.ne.s32.totalorder %s60, %s61
      %p72 = scmp.eq.s32.totalorder %s14, 0
      %p73 = por %p71, %p72
      %p74 = scmp.ne.s32.totalorder %s60, %s61
      %p75 = scmp.eq.s32.totalorder %s15, 3
      %p76 = por %p74, %p75
      %p78 = scmp.ne.s32.totalorder %s61, %s77
      %p79 = scmp.eq.s32.totalorder %s15, 0
      %p80 = por %p78, %p79
      %s81 = ssub.s32 %s17, %s24
      %p82 = scmp.eq.s32.totalorder %s81, 0
      %s84 = sadd.s32 %s83, 1
      %s85 = scalar_select %p82, %s83, %s84
      %p88 = pneg %p82
      %p89 = scmp.eq.s32.totalorder %s9, 3
      %p90 = por %p88, %p89
      %p91 = scmp.ne.s32.totalorder %s83, %s86
      %p92 = scmp.eq.s32.totalorder %s9, 0
      %p93 = por %p91, %p92
      %p94 = scmp.ne.s32.totalorder %s83, %s86
      %p95 = scmp.eq.s32.totalorder %s14, 3
      %p96 = por %p94, %p95
      %p97 = scmp.ne.s32.totalorder %s86, %s87
      %p98 = scmp.eq.s32.totalorder %s14, 0
      %p99 = por %p97, %p98
      %p100 = scmp.ne.s32.totalorder %s86, %s87
      %p101 = scmp.eq.s32.totalorder %s15, 3
      %p102 = por %p100, %p101
      %p104 = scmp.ne.s32.totalorder %s87, %s103
      %p105 = scmp.eq.s32.totalorder %s15, 0
      %p106 = por %p104, %p105
      %s107 = ssub.s32 %s16, %s28
      %s108 = ssub.s32 %s17, %s24
      %s109 = sor.u32 %s107, %s108
      %p110 = scmp.eq.s32.totalorder %s109, 0
      %s112 = sadd.s32 %s111, 1
      %s113 = scalar_select %p110, %s111, %s112
      %p116 = pneg %p110
      %p117 = scmp.eq.s32.totalorder %s9, 3
      %p118 = por %p116, %p117
      %p119 = scmp.ne.s32.totalorder %s111, %s114
      %p120 = scmp.eq.s32.totalorder %s9, 0
      %p121 = por %p119, %p120
      %p122 = scmp.ne.s32.totalorder %s111, %s114
      %p123 = scmp.eq.s32.totalorder %s14, 3
      %p124 = por %p122, %p123
      %p125 = scmp.ne.s32.totalorder %s114, %s115
      %p126 = scmp.eq.s32.totalorder %s14, 0
      %p127 = por %p125, %p126
      %p128 = scmp.ne.s32.totalorder %s114, %s115
      %p129 = scmp.eq.s32.totalorder %s15, 3
      %p130 = por %p128, %p129
      %p132 = scmp.ne.s32.totalorder %s115, %s131
      %p133 = scmp.eq.s32.totalorder %s15, 0
      %p134 = por %p132, %p133
      %p135 = scmp.le.s32.totalorder 1, %s9
      %p136 = scmp.lt.s32.totalorder %s9, 5
      %p137 = pnand %p135, %p136
      %p138 = pneg %p137
      // Predicated region
      $region9: #{upsampling_block_forward.4} parent=5 // pred_check
        _
      $region10: #{upsampling_block_forward.4} parent=5 // pred_check_branch
        %140 = sbr.rel (%p137) target = $region12
      $region11: #{upsampling_block_forward.4} parent=5 // pred_region
        %s141 = ssub.s32 %s9, 1
      $region12: #{upsampling_block_forward.4} parent=5 // pred_fallthru
        _
      %p142 = scmp.lt.s32.totalorder %s9, 4
      // Predicated region
      $region13: #{upsampling_block_forward.4} parent=5 // pred_check
        %p143 = pneg %p142
      $region14: #{upsampling_block_forward.4} parent=5 // pred_check_branch
        %145 = sbr.rel (%p143) target = $region16
      $region15: #{upsampling_block_forward.4} parent=5 // pred_region
        // Predicated region
        $region17: #{upsampling_block_forward.4} parent=15 // pred_check
          %p146 = pneg %p41
        $region18: #{upsampling_block_forward.4} parent=15 // pred_check_branch
          %148 = sbr.rel (%p146) target = $region20
        $region19: #{upsampling_block_forward.4} parent=15 // pred_region
          %p149 = scmp.lt.s32.totalorder %s16, 1
          %s150 = scalar_select %p149, %s16, 1
          %s151 = smul.addr %s150, 8
          %s152 = smul.addr %s151, 8
          %s153 = scalar_lea.vmem %s0, %s152
        $region20: #{upsampling_block_forward.4} parent=15 // pred_fallthru
          _
        // Predicated region
        $region21: #{upsampling_block_forward.4} parent=15 // pred_check
          %p154 = pneg %p67
        $region22: #{upsampling_block_forward.4} parent=15 // pred_check_branch
          %156 = sbr.rel (%p154) target = $region24
        $region23: #{upsampling_block_forward.4} parent=15 // pred_region
          %p157 = scmp.lt.s32.totalorder %s17, 1
          %s158 = scalar_select %p157, %s17, 1
          %s159 = smul.addr %s158, 4
          %s160 = scalar_lea.vmem %s1, %s159
        $region24: #{upsampling_block_forward.4} parent=15 // pred_fallthru
          _
        // Predicated region
        $region25: #{upsampling_block_forward.4} parent=15 // pred_check
          %p161 = pneg %p93
        $region26: #{upsampling_block_forward.4} parent=15 // pred_check_branch
          %163 = sbr.rel (%p161) target = $region28
        $region27: #{upsampling_block_forward.4} parent=15 // pred_region
          %p164 = scmp.lt.s32.totalorder %s17, 1
          %s165 = scalar_select %p164, %s17, 1
          %s166 = scalar_lea.vmem %s2, %s165
        $region28: #{upsampling_block_forward.4} parent=15 // pred_fallthru
          _
      $region16: #{upsampling_block_forward.4} parent=5 // pred_fallthru
        _
      %p167 = scmp.le.s32.totalorder 1, %s9
      %p168 = scmp.lt.s32.totalorder %s9, 5
      %p169 = pnand %p167, %p168
      %p170 = pneg %p169
      // Predicated region
      $region29: #{upsampling_block_forward.4} parent=5 // pred_check
        _
      $region30: #{upsampling_block_forward.4} parent=5 // pred_check_branch
        %172 = sbr.rel (%p169) target = $region32
      $region31: #{upsampling_block_forward.4} parent=5 // pred_region
        %s173 = ssub.s32 %s9, 1
        %p174 = scmp.lt.s32.totalorder %s18, 1
        %s175 = scalar_select %p174, %s18, 1
        %s176 = smul.addr %s175, 8
        %s177 = smul.addr %s176, 8
        %s178 = scalar_lea.vmem %s0, %s177
        %p179 = pneg %p47
        %p180 = pneg %p44
        %p181 = scmp.lt.s32.totalorder %s19, 1
        %s182 = scalar_select %p181, %s19, 1
        %s183 = smul.addr %s182, 4
        %s184 = scalar_lea.vmem %s1, %s183
        %p185 = pneg %p73
        %p186 = pneg %p70
        %p187 = scmp.lt.s32.totalorder %s19, 1
        %s188 = scalar_select %p187, %s19, 1
        %s189 = scalar_lea.vmem %s2, %s188
        %p190 = pneg %p99
        %p191 = pneg %p96
        %p192 = pneg %p127
        %p193 = pneg %p124
        %s194 = sand.u32 %s114, 1
        %s195 = sand.u32 %s114, 1
        %s196 = smul.addr %s195, 64
        %s197 = scalar_lea.vmem [#allocation2], %s196
        %p198 = scmp.lt.s32.totalorder %s18, 1
        %s199 = scalar_select %p198, %s18, 1
        %s200 = smul.addr %s199, 8
        %s201 = smul.addr %s200, 8
        %s202 = scalar_lea.vmem %s0, %s201
        %p203 = scmp.lt.s32.totalorder %s19, 1
        %s204 = scalar_select %p203, %s19, 1
        %s205 = smul.addr %s204, 4
        %s206 = scalar_lea.vmem %s1, %s205
        %p207 = scmp.lt.s32.totalorder %s19, 1
        %s208 = scalar_select %p207, %s19, 1
        %s209 = scalar_lea.vmem %s2, %s208
        %v210 = vld [vmem:[%s202] sm:$0xff]
        %v211 = vld [vmem:[%s202 + $0x8] sm:$0xff]
        %v212 = vld [vmem:[%s202 + $0x10] sm:$0xff]
        %v213 = vld [vmem:[%s202 + $0x18] sm:$0xff]
        %v214 = vld [vmem:[%s202 + $0x20] sm:$0xff]
        %v215 = vld [vmem:[%s202 + $0x28] sm:$0xff]
        %v216 = vld [vmem:[%s202 + $0x30] sm:$0xff]
        %v217 = vld [vmem:[%s202 + $0x38] sm:$0xff]
        %v218 = vld [vmem:[%s206] sm:$0xf]
        %v219 = vld [vmem:[%s209] sm:$0x1]
        %v221 = vperm.slane %v219, 0
        %vm223 = vcmask 31744
        %v225 = vsel %vm223, %v210, 0
        %v228 = vsel %vm223, %v211, 0
        %v231 = vsel %vm223, %v212, 0
        %v234 = vsel %vm223, %v213, 0
        %v237 = vsel %vm223, %v214, 0
        %v240 = vsel %vm223, %v215, 0
        %v243 = vsel %vm223, %v216, 0
        %v246 = vsel %vm223, %v217, 0
        %vm248 = vcmask 1043456
        %v250 = vsel %vm248, %v218, 0
        %252 = vmatpush.msra.mxu0 0.0
        %253 = vmatpush.msra.mxu0 0.0
        %254 = vmatpush.msra.mxu0 0.0
        %255 = vmatpush.msra.mxu0 0.0
        %256 = vmatpush.msra.mxu0 0.0
        %257 = vmatpush.msra.mxu0 0.0
        %258 = vmatpush.msra.mxu0 0.0
        %259 = vmatpush.msra.mxu0 0.0
        %260 = vmatpush.msra.mxu0 0.0
        %261 = vmatpush.msra.mxu0 0.0
        %262 = vmatpush.msra.mxu0 0.0
        %263 = vmatpush.msra.mxu0 0.0
        %264 = vmatpush.msra.mxu0 0.0
        %265 = vmatpush.msra.mxu0 0.0
        %266 = vmatpush.msra.mxu0 0.0
        %267 = vmatpush.msra.mxu0 %v250
        %268 = vmatmul.f32.gmra.mxu0 %v225
        %v269 = vpop.f32.mrf.mxu0
        %v270 = vadd.f32 %v221, %v269
        %271 = vmatmul.f32.gmra.mxu0 %v228
        %v272 = vpop.f32.mrf.mxu0
        %v273 = vadd.f32 %v221, %v272
        %274 = vmatmul.f32.gmra.mxu0 %v231
        %v275 = vpop.f32.mrf.mxu0
        %v276 = vadd.f32 %v221, %v275
        %277 = vmatmul.f32.gmra.mxu0 %v234
        %v278 = vpop.f32.mrf.mxu0
        %v279 = vadd.f32 %v221, %v278
        %280 = vmatmul.f32.gmra.mxu0 %v237
        %v281 = vpop.f32.mrf.mxu0
        %v282 = vadd.f32 %v221, %v281
        %283 = vmatmul.f32.gmra.mxu0 %v240
        %v284 = vpop.f32.mrf.mxu0
        %v285 = vadd.f32 %v221, %v284
        %286 = vmatmul.f32.gmra.mxu0 %v243
        %v287 = vpop.f32.mrf.mxu0
        %v288 = vadd.f32 %v221, %v287
        %289 = vmatmul.f32.gmra.mxu0 %v246
        %v290 = vpop.f32.mrf.mxu0
        %v291 = vadd.f32 %v221, %v290
        %292 = vdwg.mxu0
        %vm293 = vcmask 64512
        %294 = vst.msk [vmem:[%s197] sm:$0xff] %vm293, %v270
        %295 = vst.msk [vmem:[%s197 + $0x8] sm:$0xff] %vm293, %v273
        %296 = vst.msk [vmem:[%s197 + $0x10] sm:$0xff] %vm293, %v276
        %297 = vst.msk [vmem:[%s197 + $0x18] sm:$0xff] %vm293, %v279
        %298 = vst.msk [vmem:[%s197 + $0x20] sm:$0xff] %vm293, %v282
        %299 = vst.msk [vmem:[%s197 + $0x28] sm:$0xff] %vm293, %v285
        %300 = vst.msk [vmem:[%s197 + $0x30] sm:$0xff] %vm293, %v288
        %301 = vst.msk [vmem:[%s197 + $0x38] sm:$0xff] %vm293, %v291
        %s302 = sand.u32 %s114, 1
        %s303 = sand.u32 %s114, 1
        %s304 = smul.addr %s303, 64
        %s305 = scalar_lea.vmem [#allocation2], %s304
        // Predicated region
        $region33: #{upsampling_block_forward.4} parent=31 // pred_check
          %p306 = pneg %p124
        $region34: #{upsampling_block_forward.4} parent=31 // pred_check_branch
          %308 = sbr.rel (%p306) target = $region36
        $region35: #{upsampling_block_forward.4} parent=31 // pred_region
          %s309 = smul.addr %s18, 16
          %s310 = sadd.s32 %s19, %s309
          %s311 = smul.addr %s310, 8
          %s312 = scalar_lea.vmem %s3, %s311
          // Predicated region
          $region37: #{upsampling_block_forward.4} parent=35 // pred_check
            _
          $region38: #{upsampling_block_forward.4} parent=35 // pred_check_branch
            %314 = sbr.rel (0) target = $region40
          $region39: #{upsampling_block_forward.4} parent=35 // pred_region
            // Predicated region
            $region41: #{upsampling_block_forward.4} parent=39 // pred_check
              _
            $region42: #{upsampling_block_forward.4} parent=39 // pred_check_branch
              %316 = sbr.rel (0) target = $region44
            $region43: #{upsampling_block_forward.4} parent=39 // pred_region
              // Predicated region
              $region56: #{upsampling_block_forward.4} parent=43 // pred_check
                _
              $region57: #{upsampling_block_forward.4} parent=43 // pred_check_branch
                %346 = sbr.rel (0) target = $region59
              $region58: #{upsampling_block_forward.4} parent=43 // pred_region
                loop: start=0, step=1, limit=1
                $region60: #{upsampling_block_forward.4} parent=58 // loop_pre_header
                  _
                $region61: #{upsampling_block_forward.4} parent=58 // loop_header
                  %s348 = sphi 0, %s352
                  %p349 = scmp.ge.s32.totalorder %s348, 1
                  %s353 = sphi %s305, %s305
                  %s354 = sphi %s312, %s312
                $region62: #{upsampling_block_forward.4} parent=58 // loop_header_branch
                  %351 = sbr.rel (%p349) target = $region66
                $region63: #{upsampling_block_forward.4} parent=58 // loop_body
                  %v355 = vld [vmem:[%s353] sm:$0xff]
                  %356 = vst [vmem:[%s354] sm:$0xff] %v355
                  %v357 = vld [vmem:[%s353 + $0x8] sm:$0xff]
                  %358 = vst [vmem:[%s354 + $0x10] sm:$0xff] %v357
                  %v359 = vld [vmem:[%s353 + $0x10] sm:$0xff]
                  %360 = vst [vmem:[%s354 + $0x20] sm:$0xff] %v359
                  %v361 = vld [vmem:[%s353 + $0x18] sm:$0xff]
                  %362 = vst [vmem:[%s354 + $0x30] sm:$0xff] %v361
                  %v363 = vld [vmem:[%s353 + $0x20] sm:$0xff]
                  %364 = vst [vmem:[%s354 + $0x40] sm:$0xff] %v363
                  %v365 = vld [vmem:[%s353 + $0x28] sm:$0xff]
                  %366 = vst [vmem:[%s354 + $0x50] sm:$0xff] %v365
                  %v367 = vld [vmem:[%s353 + $0x30] sm:$0xff]
                  %368 = vst [vmem:[%s354 + $0x60] sm:$0xff] %v367
                  %v369 = vld [vmem:[%s353 + $0x38] sm:$0xff]
                  %370 = vst [vmem:[%s354 + $0x70] sm:$0xff] %v369
                $region64: #{upsampling_block_forward.4} parent=58 // loop_footer
                  %s352 = sadd.s32 1, %s348
                $region65: #{upsampling_block_forward.4} parent=58 // loop_footer_branch
                  %347 = sbr.rel target = $region61
                $region66: #{upsampling_block_forward.4} parent=58 // loop_exit
                  _
              $region59: #{upsampling_block_forward.4} parent=43 // pred_fallthru
                _
              // Predicated region
              $region67: #{upsampling_block_forward.4} parent=43 // pred_check
                _
              $region68: #{upsampling_block_forward.4} parent=43 // pred_check_branch
                %372 = sbr.rel target = $region70
              $region69: #{upsampling_block_forward.4} parent=43 // pred_region
                _
              $region70: #{upsampling_block_forward.4} parent=43 // pred_fallthru
                _
            $region44: #{upsampling_block_forward.4} parent=39 // pred_fallthru
              _
            // Predicated region
            $region45: #{upsampling_block_forward.4} parent=39 // pred_check
              _
            $region46: #{upsampling_block_forward.4} parent=39 // pred_check_branch
              %318 = sbr.rel target = $region48
            $region47: #{upsampling_block_forward.4} parent=39 // pred_region
              %s320 = ssub.s32 256, 1
              loop: start=0, step=1, limit=1
              $region49: #{upsampling_block_forward.4} parent=47 // loop_pre_header
                _
              $region50: #{upsampling_block_forward.4} parent=47 // loop_header
                %s322 = sphi 0, %s326
                %p323 = scmp.ge.s32.totalorder %s322, 1
                %s327 = sphi %s305, %s305
                %s328 = sphi %s312, %s312
              $region51: #{upsampling_block_forward.4} parent=47 // loop_header_branch
                %325 = sbr.rel (%p323) target = $region55
              $region52: #{upsampling_block_forward.4} parent=47 // loop_body
                %v329 = vld [vmem:[%s327] sm:%s320]
                %330 = vst [vmem:[%s328] sm:%s320] %v329
                %v331 = vld [vmem:[%s327 + $0x8] sm:%s320]
                %332 = vst [vmem:[%s328 + $0x10] sm:%s320] %v331
                %v333 = vld [vmem:[%s327 + $0x10] sm:%s320]
                %334 = vst [vmem:[%s328 + $0x20] sm:%s320] %v333
                %v335 = vld [vmem:[%s327 + $0x18] sm:%s320]
                %336 = vst [vmem:[%s328 + $0x30] sm:%s320] %v335
                %v337 = vld [vmem:[%s327 + $0x20] sm:%s320]
                %338 = vst [vmem:[%s328 + $0x40] sm:%s320] %v337
                %v339 = vld [vmem:[%s327 + $0x28] sm:%s320]
                %340 = vst [vmem:[%s328 + $0x50] sm:%s320] %v339
                %v341 = vld [vmem:[%s327 + $0x30] sm:%s320]
                %342 = vst [vmem:[%s328 + $0x60] sm:%s320] %v341
                %v343 = vld [vmem:[%s327 + $0x38] sm:%s320]
                %344 = vst [vmem:[%s328 + $0x70] sm:%s320] %v343
              $region53: #{upsampling_block_forward.4} parent=47 // loop_footer
                %s326 = sadd.s32 1, %s322
              $region54: #{upsampling_block_forward.4} parent=47 // loop_footer_branch
                %321 = sbr.rel target = $region50
              $region55: #{upsampling_block_forward.4} parent=47 // loop_exit
                _
            $region48: #{upsampling_block_forward.4} parent=39 // pred_fallthru
              _
          $region40: #{upsampling_block_forward.4} parent=35 // pred_fallthru
            _
          %373 = vnop
        $region36: #{upsampling_block_forward.4} parent=31 // pred_fallthru
          _
      $region32: #{upsampling_block_forward.4} parent=5 // pred_fallthru
        _
      %p374 = scmp.le.s32.totalorder 2, %s9
      // Predicated region
      $region71: #{upsampling_block_forward.4} parent=5 // pred_check
        %p375 = pneg %p374
      $region72: #{upsampling_block_forward.4} parent=5 // pred_check_branch
        %377 = sbr.rel (%p375) target = $region74
      $region73: #{upsampling_block_forward.4} parent=5 // pred_region
        %s378 = ssub.s32 %s9, 2
        // Predicated region
        $region75: #{upsampling_block_forward.4} parent=73 // pred_check
          %p379 = pneg %p130
        $region76: #{upsampling_block_forward.4} parent=73 // pred_check_branch
          %381 = sbr.rel (%p379) target = $region78
        $region77: #{upsampling_block_forward.4} parent=73 // pred_region
          %s382 = sand.u32 %s115, 1
          %s383 = sand.u32 %s115, 1
          %s384 = smul.addr %s383, 64
          %s385 = scalar_lea.vmem [#allocation2], %s384
        $region78: #{upsampling_block_forward.4} parent=73 // pred_fallthru
          _
      $region74: #{upsampling_block_forward.4} parent=5 // pred_fallthru
        _
    $region6: #{upsampling_block_forward.4} parent=1 // loop_footer
      %s13 = sadd.s32 1, %s9
    $region7: #{upsampling_block_forward.4} parent=1 // loop_footer_branch
      %8 = sbr.rel target = $region3
    $region8: #{upsampling_block_forward.4} parent=1 // loop_exit
      _

// kernel: upsampling_block_forward.6
$region0: #{upsampling_block_forward.6}
  #allocation0 [shape = 'u32[]', space=smem, size = 0x4, offset = 0x4, fixed_abs, tag = 'smem constant byte address 0x4 - core index']
  #allocation1 [shape = 'u32[72,128]{1,0:T(1,128)}', space=vmem, size = 0x9000, scoped, tag = 'internal scratch']
  #allocation2 [shape = 'f32[18,18,8]{2,1,0:T(8,128)}', space=vmem, size = 0x36000, scoped, tag = 'scratch operand']
  %s0 = inlined_call_operand.vmem [shape: f32[2,16,16,8], index: 0, kind: input, shape index: {}]
  %s1 = inlined_call_operand.vmem [shape: f32[1,8], index: 1, kind: input, shape index: {}]
  %s2 = inlined_call_operand.vmem [shape: f32[1,8], index: 2, kind: input, shape index: {}]
  %s3 = inlined_call_operand.vmem [shape: f32[72,8], index: 3, kind: input, shape index: {}]
  %s4 = inlined_call_operand.vmem [shape: f32[1,8], index: 4, kind: input, shape index: {}]
  %s5 = inlined_call_operand.vmem [shape: f32[2,16,16,8], index: 5, kind: output, shape index: {0}]
  %s6 = inlined_call_operand.vmem [shape: f32[2,1,8], index: 6, kind: output, shape index: {1}]
  %s7 = inlined_call_operand.vmem [shape: f32[2,1,8], index: 7, kind: output, shape index: {2}]
  %8 = xla_tuple %s5, %s6, %s7
  %s9 = sld [smem:[#allocation0]]
  $region69: #{upsampling_block_forward.6} parent=0
    _
  %s11 = ssub.s32 1, %s9
  %s12 = scalar_select 0, %s11, %s9
  loop: start=0, step=1, limit=4
  $region2: #{upsampling_block_forward.6} parent=0 // loop_pre_header
    _
  $region3: #{upsampling_block_forward.6} parent=0 // loop_header
    %s14 = sphi 0, %s18
    %p15 = scmp.ge.s32.totalorder %s14, 4
    %s24 = sphi 0, %s26
    %s27 = sphi 0, %s24
    %s28 = sphi 0, %s27
    %s44 = sphi 0, %s28
    %s48 = sphi 0, %s48
    %s50 = sphi 0, %s48
    %s51 = sphi 0, %s50
    %s65 = sphi 0, %s51
    %s69 = sphi 0, %s69
    %s71 = sphi 0, %s69
    %s72 = sphi 0, %s71
    %s86 = sphi 0, %s72
    %s90 = sphi 0, %s90
    %s92 = sphi 0, %s90
    %s93 = sphi 0, %s92
    %s107 = sphi 0, %s93
    %s111 = sphi 0, %s111
    %s113 = sphi 0, %s111
    %s114 = sphi 0, %s113
    %s128 = sphi 0, %s114
    %s134 = sphi 0, %s136
    %s137 = sphi 0, %s134
    %s138 = sphi 0, %s137
    %s154 = sphi 0, %s138
    %s160 = sphi 0, %s162
    %s163 = sphi 0, %s160
    %s164 = sphi 0, %s163
    %s180 = sphi 0, %s164
    %s186 = sphi 0, %s188
    %s189 = sphi 0, %s186
    %s190 = sphi 0, %s189
    %s206 = sphi 0, %s190
  $region4: #{upsampling_block_forward.6} parent=0 // loop_header_branch
    %17 = sbr.rel (%p15) target = $region8
  $region5: #{upsampling_block_forward.6} parent=0 // loop_body
    %s19 = ssub.s32 %s14, 1
    %s20 = ssub.s32 %s14, 2
    %s21 = sadd.s32 %s14, 1
    %s22 = ssub.s32 %s14, %s21
    %p23 = scmp.eq.s32.totalorder %s22, 0
    %s25 = sadd.s32 %s24, 1
    %s26 = scalar_select %p23, %s24, %s25
    %p29 = pneg %p23
    %p30 = scmp.eq.s32.totalorder %s14, 1
    %p31 = por %p29, %p30
    %p32 = scmp.ne.s32.totalorder %s24, %s27
    %p33 = scmp.eq.s32.totalorder %s14, 0
    %p34 = por %p32, %p33
    %p35 = scmp.ne.s32.totalorder %s24, %s27
    %p36 = scmp.eq.s32.totalorder %s19, 1
    %p37 = por %p35, %p36
    %p38 = scmp.ne.s32.totalorder %s27, %s28
    %p39 = scmp.eq.s32.totalorder %s19, 0
    %p40 = por %p38, %p39
    %p41 = scmp.ne.s32.totalorder %s27, %s28
    %p42 = scmp.eq.s32.totalorder %s20, 1
    %p43 = por %p41, %p42
    %p45 = scmp.ne.s32.totalorder %s28, %s44
    %p46 = scmp.eq.s32.totalorder %s20, 0
    %p47 = por %p45, %p46
    %s49 = sadd.s32 %s48, 1
    %p52 = scmp.eq.s32.totalorder %s14, 1
    %p53 = scmp.ne.s32.totalorder %s48, %s50
    %p54 = scmp.eq.s32.totalorder %s14, 0
    %p55 = por %p53, %p54
    %p56 = scmp.ne.s32.totalorder %s48, %s50
    %p57 = scmp.eq.s32.totalorder %s19, 1
    %p58 = por %p56, %p57
    %p59 = scmp.ne.s32.totalorder %s50, %s51
    %p60 = scmp.eq.s32.totalorder %s19, 0
    %p61 = por %p59, %p60
    %p62 = scmp.ne.s32.totalorder %s50, %s51
    %p63 = scmp.eq.s32.totalorder %s20, 1
    %p64 = por %p62, %p63
    %p66 = scmp.ne.s32.totalorder %s51, %s65
    %p67 = scmp.eq.s32.totalorder %s20, 0
    %p68 = por %p66, %p67
    %s70 = sadd.s32 %s69, 1
    %p73 = scmp.eq.s32.totalorder %s14, 1
    %p74 = scmp.ne.s32.totalorder %s69, %s71
    %p75 = scmp.eq.s32.totalorder %s14, 0
    %p76 = por %p74, %p75
    %p77 = scmp.ne.s32.totalorder %s69, %s71
    %p78 = scmp.eq.s32.totalorder %s19, 1
    %p79 = por %p77, %p78
    %p80 = scmp.ne.s32.totalorder %s71, %s72
    %p81 = scmp.eq.s32.totalorder %s19, 0
    %p82 = por %p80, %p81
    %p83 = scmp.ne.s32.totalorder %s71, %s72
    %p84 = scmp.eq.s32.totalorder %s20, 1
    %p85 = por %p83, %p84
    %p87 = scmp.ne.s32.totalorder %s72, %s86
    %p88 = scmp.eq.s32.totalorder %s20, 0
    %p89 = por %p87, %p88
    %s91 = sadd.s32 %s90, 1
    %p94 = scmp.eq.s32.totalorder %s14, 1
    %p95 = scmp.ne.s32.totalorder %s90, %s92
    %p96 = scmp.eq.s32.totalorder %s14, 0
    %p97 = por %p95, %p96
    %p98 = scmp.ne.s32.totalorder %s90, %s92
    %p99 = scmp.eq.s32.totalorder %s19, 1
    %p100 = por %p98, %p99
    %p101 = scmp.ne.s32.totalorder %s92, %s93
    %p102 = scmp.eq.s32.totalorder %s19, 0
    %p103 = por %p101, %p102
    %p104 = scmp.ne.s32.totalorder %s92, %s93
    %p105 = scmp.eq.s32.totalorder %s20, 1
    %p106 = por %p104, %p105
    %p108 = scmp.ne.s32.totalorder %s93, %s107
    %p109 = scmp.eq.s32.totalorder %s20, 0
    %p110 = por %p108, %p109
    %s112 = sadd.s32 %s111, 1
    %p115 = scmp.eq.s32.totalorder %s14, 1
    %p116 = scmp.ne.s32.totalorder %s111, %s113
    %p117 = scmp.eq.s32.totalorder %s14, 0
    %p118 = por %p116, %p117
    %p119 = scmp.ne.s32.totalorder %s111, %s113
    %p120 = scmp.eq.s32.totalorder %s19, 1
    %p121 = por %p119, %p120
    %p122 = scmp.ne.s32.totalorder %s113, %s114
    %p123 = scmp.eq.s32.totalorder %s19, 0
    %p124 = por %p122, %p123
    %p125 = scmp.ne.s32.totalorder %s113, %s114
    %p126 = scmp.eq.s32.totalorder %s20, 1
    %p127 = por %p125, %p126
    %p129 = scmp.ne.s32.totalorder %s114, %s128
    %p130 = scmp.eq.s32.totalorder %s20, 0
    %p131 = por %p129, %p130
    %s132 = ssub.s32 %s14, %s21
    %p133 = scmp.eq.s32.totalorder %s132, 0
    %s135 = sadd.s32 %s134, 1
    %s136 = scalar_select %p133, %s134, %s135
    %p139 = pneg %p133
    %p140 = scmp.eq.s32.totalorder %s14, 1
    %p141 = por %p139, %p140
    %p142 = scmp.ne.s32.totalorder %s134, %s137
    %p143 = scmp.eq.s32.totalorder %s14, 0
    %p144 = por %p142, %p143
    %p145 = scmp.ne.s32.totalorder %s134, %s137
    %p146 = scmp.eq.s32.totalorder %s19, 1
    %p147 = por %p145, %p146
    %p148 = scmp.ne.s32.totalorder %s137, %s138
    %p149 = scmp.eq.s32.totalorder %s19, 0
    %p150 = por %p148, %p149
    %p151 = scmp.ne.s32.totalorder %s137, %s138
    %p152 = scmp.eq.s32.totalorder %s20, 1
    %p153 = por %p151, %p152
    %p155 = scmp.ne.s32.totalorder %s138, %s154
    %p156 = scmp.eq.s32.totalorder %s20, 0
    %p157 = por %p155, %p156
    %s158 = ssub.s32 %s14, %s21
    %p159 = scmp.eq.s32.totalorder %s158, 0
    %s161 = sadd.s32 %s160, 1
    %s162 = scalar_select %p159, %s160, %s161
    %p165 = pneg %p159
    %p166 = scmp.eq.s32.totalorder %s14, 1
    %p167 = por %p165, %p166
    %p168 = scmp.ne.s32.totalorder %s160, %s163
    %p169 = scmp.eq.s32.totalorder %s14, 0
    %p170 = por %p168, %p169
    %p171 = scmp.ne.s32.totalorder %s160, %s163
    %p172 = scmp.eq.s32.totalorder %s19, 1
    %p173 = por %p171, %p172
    %p174 = scmp.ne.s32.totalorder %s163, %s164
    %p175 = scmp.eq.s32.totalorder %s19, 0
    %p176 = por %p174, %p175
    %p177 = scmp.ne.s32.totalorder %s163, %s164
    %p178 = scmp.eq.s32.totalorder %s20, 1
    %p179 = por %p177, %p178
    %p181 = scmp.ne.s32.totalorder %s164, %s180
    %p182 = scmp.eq.s32.totalorder %s20, 0
    %p183 = por %p181, %p182
    %s184 = ssub.s32 %s14, %s21
    %p185 = scmp.eq.s32.totalorder %s184, 0
    %s187 = sadd.s32 %s186, 1
    %s188 = scalar_select %p185, %s186, %s187
    %p191 = pneg %p185
    %p192 = scmp.eq.s32.totalorder %s14, 1
    %p193 = por %p191, %p192
    %p194 = scmp.ne.s32.totalorder %s186, %s189
    %p195 = scmp.eq.s32.totalorder %s14, 0
    %p196 = por %p194, %p195
    %p197 = scmp.ne.s32.totalorder %s186, %s189
    %p198 = scmp.eq.s32.totalorder %s19, 1
    %p199 = por %p197, %p198
    %p200 = scmp.ne.s32.totalorder %s189, %s190
    %p201 = scmp.eq.s32.totalorder %s19, 0
    %p202 = por %p200, %p201
    %p203 = scmp.ne.s32.totalorder %s189, %s190
    %p204 = scmp.eq.s32.totalorder %s20, 1
    %p205 = por %p203, %p204
    %p207 = scmp.ne.s32.totalorder %s190, %s206
    %p208 = scmp.eq.s32.totalorder %s20, 0
    %p209 = por %p207, %p208
    %p210 = scmp.le.s32.totalorder 1, %s14
    %p211 = scmp.lt.s32.totalorder %s14, 3
    %p212 = pnand %p210, %p211
    %p213 = pneg %p212
    // Predicated region
    $region9: #{upsampling_block_forward.6} parent=5 // pred_check
      _
    $region10: #{upsampling_block_forward.6} parent=5 // pred_check_branch
      %215 = sbr.rel (%p212) target = $region12
    $region11: #{upsampling_block_forward.6} parent=5 // pred_region
      %s216 = ssub.s32 %s14, 1
      // Predicated region
      $region13: #{upsampling_block_forward.6} parent=11 // pred_check
        %p217 = pneg %p61
      $region14: #{upsampling_block_forward.6} parent=11 // pred_check_branch
        %219 = sbr.rel (%p217) target = $region16
      $region15: #{upsampling_block_forward.6} parent=11 // pred_region
        _
      $region16: #{upsampling_block_forward.6} parent=11 // pred_fallthru
        _
      // Predicated region
      $region17: #{upsampling_block_forward.6} parent=11 // pred_check
        %p220 = pneg %p82
      $region18: #{upsampling_block_forward.6} parent=11 // pred_check_branch
        %222 = sbr.rel (%p220) target = $region20
      $region19: #{upsampling_block_forward.6} parent=11 // pred_region
        _
      $region20: #{upsampling_block_forward.6} parent=11 // pred_fallthru
        _
      // Predicated region
      $region21: #{upsampling_block_forward.6} parent=11 // pred_check
        %p223 = pneg %p103
      $region22: #{upsampling_block_forward.6} parent=11 // pred_check_branch
        %225 = sbr.rel (%p223) target = $region24
      $region23: #{upsampling_block_forward.6} parent=11 // pred_region
        _
      $region24: #{upsampling_block_forward.6} parent=11 // pred_fallthru
        _
      // Predicated region
      $region25: #{upsampling_block_forward.6} parent=11 // pred_check
        %p226 = pneg %p124
      $region26: #{upsampling_block_forward.6} parent=11 // pred_check_branch
        %228 = sbr.rel (%p226) target = $region28
      $region27: #{upsampling_block_forward.6} parent=11 // pred_region
        _
      $region28: #{upsampling_block_forward.6} parent=11 // pred_fallthru
        _
    $region12: #{upsampling_block_forward.6} parent=5 // pred_fallthru
      _
    %p229 = scmp.lt.s32.totalorder %s14, 2
    // Predicated region
    $region29: #{upsampling_block_forward.6} parent=5 // pred_check
      %p230 = pneg %p229
    $region30: #{upsampling_block_forward.6} parent=5 // pred_check_branch
      %232 = sbr.rel (%p230) target = $region32
    $region31: #{upsampling_block_forward.6} parent=5 // pred_region
      // Predicated region
      $region33: #{upsampling_block_forward.6} parent=31 // pred_check
        %p233 = pneg %p34
      $region34: #{upsampling_block_forward.6} parent=31 // pred_check_branch
        %235 = sbr.rel (%p233) target = $region36
      $region35: #{upsampling_block_forward.6} parent=31 // pred_region
        %p236 = scmp.lt.s32.totalorder %s14, 1
        %s237 = scalar_select %p236, %s14, 1
        %s238 = smul.addr %s237, 32
        %s239 = smul.addr %s238, 8
        %s240 = scalar_lea.vmem %s0, %s239
      $region36: #{upsampling_block_forward.6} parent=31 // pred_fallthru
        _
    $region32: #{upsampling_block_forward.6} parent=5 // pred_fallthru
      _
    %p241 = scmp.le.s32.totalorder 1, %s14
    %p242 = scmp.lt.s32.totalorder %s14, 3
    %p243 = pnand %p241, %p242
    %p244 = pneg %p243
    // Predicated region
    $region37: #{upsampling_block_forward.6} parent=5 // pred_check
      _
    $region38: #{upsampling_block_forward.6} parent=5 // pred_check_branch
      %246 = sbr.rel (%p243) target = $region40
    $region39: #{upsampling_block_forward.6} parent=5 // pred_region
      %s247 = ssub.s32 %s14, 1
      %p248 = scmp.lt.s32.totalorder %s19, 1
      %s249 = scalar_select %p248, %s19, 1
      %s250 = smul.addr %s249, 32
      %s251 = smul.addr %s250, 8
      %s252 = scalar_lea.vmem %s0, %s251
      %p253 = pneg %p40
      %p254 = pneg %p37
      %p255 = pneg %p61
      %p256 = pneg %p58
      %p257 = pneg %p82
      %p258 = pneg %p79
      %p259 = pneg %p103
      %p260 = pneg %p100
      %p261 = pneg %p124
      %p262 = pneg %p121
      %p263 = pneg %p150
      %p264 = pneg %p147
      %p265 = scmp.lt.s32.totalorder %s19, 1
      %s266 = scalar_select %p265, %s19, 1
      %s267 = smul.addr %s266, 32
      %s268 = smul.addr %s267, 8
      %s269 = scalar_lea.vmem %s5, %s268
      %p270 = pneg %p176
      %p271 = pneg %p173
      %p272 = scmp.lt.s32.totalorder %s19, 1
      %s273 = scalar_select %p272, %s19, 1
      %s274 = scalar_lea.vmem %s6, %s273
      %p275 = pneg %p202
      %p276 = pneg %p199
      %p277 = scmp.lt.s32.totalorder %s19, 1
      %s278 = scalar_select %p277, %s19, 1
      %s279 = scalar_lea.vmem %s7, %s278
      %p280 = scmp.lt.s32.totalorder %s19, 1
      %s281 = scalar_select %p280, %s19, 1
      %s282 = smul.addr %s281, 32
      %s283 = smul.addr %s282, 8
      %s284 = scalar_lea.vmem %s0, %s283
      %p285 = scmp.lt.s32.totalorder %s19, 1
      %s286 = scalar_select %p285, %s19, 1
      %s287 = smul.addr %s286, 32
      %s288 = smul.addr %s287, 8
      %s289 = scalar_lea.vmem %s5, %s288
      %p290 = scmp.lt.s32.totalorder %s19, 1
      %s291 = scalar_select %p290, %s19, 1
      %s292 = scalar_lea.vmem %s6, %s291
      %p293 = scmp.lt.s32.totalorder %s19, 1
      %s294 = scalar_select %p293, %s19, 1
      %s295 = scalar_lea.vmem %s7, %s294
      %v296 = vld [vmem:[%s284] sm:$0xff]
      %v297 = vld [vmem:[%s284 + $0x8] sm:$0xff]
      %v298 = vld [vmem:[%s284 + $0x10] sm:$0xff]
      %v299 = vld [vmem:[%s284 + $0x18] sm:$0xff]
      %v300 = vld [vmem:[%s284 + $0x20] sm:$0xff]
      %v301 = vld [vmem:[%s284 + $0x28] sm:$0xff]
      %v302 = vld [vmem:[%s284 + $0x30] sm:$0xff]
      %v303 = vld [vmem:[%s284 + $0x38] sm:$0xff]
      %v304 = vld [vmem:[%s284 + $0x40] sm:$0xff]
      %v305 = vld [vmem:[%s284 + $0x48] sm:$0xff]
      %v306 = vld [vmem:[%s284 + $0x50] sm:$0xff]
      %v307 = vld [vmem:[%s284 + $0x58] sm:$0xff]
      %v308 = vld [vmem:[%s284 + $0x60] sm:$0xff]
      %v309 = vld [vmem:[%s284 + $0x68] sm:$0xff]
      %v310 = vld [vmem:[%s284 + $0x70] sm:$0xff]
      %v311 = vld [vmem:[%s284 + $0x78] sm:$0xff]
      %v312 = vld [vmem:[%s284 + $0x80] sm:$0xff]
      %v313 = vld [vmem:[%s284 + $0x88] sm:$0xff]
      %v314 = vld [vmem:[%s284 + $0x90] sm:$0xff]
      %v315 = vld [vmem:[%s284 + $0x98] sm:$0xff]
      %v316 = vld [vmem:[%s284 + $0xa0] sm:$0xff]
      %v317 = vld [vmem:[%s284 + $0xa8] sm:$0xff]
      %v318 = vld [vmem:[%s284 + $0xb0] sm:$0xff]
      %v319 = vld [vmem:[%s284 + $0xb8] sm:$0xff]
      %v320 = vld [vmem:[%s284 + $0xc0] sm:$0xff]
      %v321 = vld [vmem:[%s284 + $0xc8] sm:$0xff]
      %v322 = vld [vmem:[%s284 + $0xd0] sm:$0xff]
      %v323 = vld [vmem:[%s284 + $0xd8] sm:$0xff]
      %v324 = vld [vmem:[%s284 + $0xe0] sm:$0xff]
      %v325 = vld [vmem:[%s284 + $0xe8] sm:$0xff]
      %v326 = vld [vmem:[%s284 + $0xf0] sm:$0xff]
      %v327 = vld [vmem:[%s284 + $0xf8] sm:$0xff]
      %v328 = vld [vmem:[%s1] sm:$0x1]
      %v330 = vperm.slane %v328, 0
      %v332 = vmul.f32 %v296, %v330
      %v333 = vmul.f32 %v297, %v330
      %v334 = vmul.f32 %v298, %v330
      %v335 = vmul.f32 %v299, %v330
      %v336 = vmul.f32 %v300, %v330
      %v337 = vmul.f32 %v301, %v330
      %v338 = vmul.f32 %v302, %v330
      %v339 = vmul.f32 %v303, %v330
      %v340 = vmul.f32 %v304, %v330
      %v341 = vmul.f32 %v305, %v330
      %v342 = vmul.f32 %v306, %v330
      %v343 = vmul.f32 %v307, %v330
      %v344 = vmul.f32 %v308, %v330
      %v345 = vmul.f32 %v309, %v330
      %v346 = vmul.f32 %v310, %v330
      %v347 = vmul.f32 %v311, %v330
      %v348 = vmul.f32 %v312, %v330
      %v349 = vmul.f32 %v313, %v330
      %v350 = vmul.f32 %v314, %v330
      %v351 = vmul.f32 %v315, %v330
      %v352 = vmul.f32 %v316, %v330
      %v353 = vmul.f32 %v317, %v330
      %v354 = vmul.f32 %v318, %v330
      %v355 = vmul.f32 %v319, %v330
      %v356 = vmul.f32 %v320, %v330
      %v357 = vmul.f32 %v321, %v330
      %v358 = vmul.f32 %v322, %v330
      %v359 = vmul.f32 %v323, %v330
      %v360 = vmul.f32 %v324, %v330
      %v361 = vmul.f32 %v325, %v330
      %v362 = vmul.f32 %v326, %v330
      %v363 = vmul.f32 %v327, %v330
      %v364 = vld [vmem:[%s2] sm:$0x1]
      %v366 = vperm.slane %v364, 0
      %v368 = vadd.f32 %v332, %v366
      %v369 = vadd.f32 %v333, %v366
      %v370 = vadd.f32 %v334, %v366
      %v371 = vadd.f32 %v335, %v366
      %v372 = vadd.f32 %v336, %v366
      %v373 = vadd.f32 %v337, %v366
      %v374 = vadd.f32 %v338, %v366
      %v375 = vadd.f32 %v339, %v366
      %v376 = vadd.f32 %v340, %v366
      %v377 = vadd.f32 %v341, %v366
      %v378 = vadd.f32 %v342, %v366
      %v379 = vadd.f32 %v343, %v366
      %v380 = vadd.f32 %v344, %v366
      %v381 = vadd.f32 %v345, %v366
      %v382 = vadd.f32 %v346, %v366
      %v383 = vadd.f32 %v347, %v366
      %v384 = vadd.f32 %v348, %v366
      %v385 = vadd.f32 %v349, %v366
      %v386 = vadd.f32 %v350, %v366
      %v387 = vadd.f32 %v351, %v366
      %v388 = vadd.f32 %v352, %v366
      %v389 = vadd.f32 %v353, %v366
      %v390 = vadd.f32 %v354, %v366
      %v391 = vadd.f32 %v355, %v366
      %v392 = vadd.f32 %v356, %v366
      %v393 = vadd.f32 %v357, %v366
      %v394 = vadd.f32 %v358, %v366
      %v395 = vadd.f32 %v359, %v366
      %v396 = vadd.f32 %v360, %v366
      %v397 = vadd.f32 %v361, %v366
      %v398 = vadd.f32 %v362, %v366
      %v399 = vadd.f32 %v363, %v366
      %v400 = vmax.f32 %v368, 0.0
      %v401 = vmax.f32 %v369, 0.0
      %v402 = vmax.f32 %v370, 0.0
      %v403 = vmax.f32 %v371, 0.0
      %v404 = vmax.f32 %v372, 0.0
      %v405 = vmax.f32 %v373, 0.0
      %v406 = vmax.f32 %v374, 0.0
      %v407 = vmax.f32 %v375, 0.0
      %v408 = vmax.f32 %v376, 0.0
      %v409 = vmax.f32 %v377, 0.0
      %v410 = vmax.f32 %v378, 0.0
      %v411 = vmax.f32 %v379, 0.0
      %v412 = vmax.f32 %v380, 0.0
      %v413 = vmax.f32 %v381, 0.0
      %v414 = vmax.f32 %v382, 0.0
      %v415 = vmax.f32 %v383, 0.0
      %v416 = vmax.f32 %v384, 0.0
      %v417 = vmax.f32 %v385, 0.0
      %v418 = vmax.f32 %v386, 0.0
      %v419 = vmax.f32 %v387, 0.0
      %v420 = vmax.f32 %v388, 0.0
      %v421 = vmax.f32 %v389, 0.0
      %v422 = vmax.f32 %v390, 0.0
      %v423 = vmax.f32 %v391, 0.0
      %v424 = vmax.f32 %v392, 0.0
      %v425 = vmax.f32 %v393, 0.0
      %v426 = vmax.f32 %v394, 0.0
      %v427 = vmax.f32 %v395, 0.0
      %v428 = vmax.f32 %v396, 0.0
      %v429 = vmax.f32 %v397, 0.0
      %v430 = vmax.f32 %v398, 0.0
      %v431 = vmax.f32 %v399, 0.0
      %vm432 = vcmask 64512
      %433 = vst.msk [vmem:[#allocation2] sm:$0xff] %vm432, 0.0
      %434 = vst.msk [vmem:[#allocation2 + $0x8] sm:$0xff] %vm432, 0.0
      %vm435 = vcmask 58368
      %436 = vst.msk [vmem:[#allocation2 + $0x10] sm:$0x3] %vm435, 0.0
      %437 = vst.msk [vmem:[#allocation2 + $0x18] sm:$0xff] %vm432, 0.0
      %438 = vst.msk [vmem:[#allocation2 + $0x20] sm:$0xff] %vm432, 0.0
      %439 = vst.msk [vmem:[#allocation2 + $0x28] sm:$0x3] %vm435, 0.0
      %440 = vst.msk [vmem:[#allocation2 + $0x30] sm:$0xff] %vm432, 0.0
      %441 = vst.msk [vmem:[#allocation2 + $0x38] sm:$0xff] %vm432, 0.0
      %442 = vst.msk [vmem:[#allocation2 + $0x40] sm:$0x3] %vm435, 0.0
      %443 = vst.msk [vmem:[#allocation2 + $0x48] sm:$0xff] %vm432, 0.0
      %444 = vst.msk [vmem:[#allocation2 + $0x50] sm:$0xff] %vm432, 0.0
      %445 = vst.msk [vmem:[#allocation2 + $0x58] sm:$0x3] %vm435, 0.0
      %446 = vst.msk [vmem:[#allocation2 + $0x60] sm:$0xff] %vm432, 0.0
      %447 = vst.msk [vmem:[#allocation2 + $0x68] sm:$0xff] %vm432, 0.0
      %448 = vst.msk [vmem:[#allocation2 + $0x70] sm:$0x3] %vm435, 0.0
      %449 = vst.msk [vmem:[#allocation2 + $0x78] sm:$0xff] %vm432, 0.0
      %450 = vst.msk [vmem:[#allocation2 + $0x80] sm:$0xff] %vm432, 0.0
      %451 = vst.msk [vmem:[#allocation2 + $0x88] sm:$0x3] %vm435, 0.0
      %452 = vst.msk [vmem:[#allocation2 + $0x90] sm:$0xff] %vm432, 0.0
      %453 = vst.msk [vmem:[#allocation2 + $0x98] sm:$0xff] %vm432, 0.0
      %454 = vst.msk [vmem:[#allocation2 + $0xa0] sm:$0x3] %vm435, 0.0
      %455 = vst.msk [vmem:[#allocation2 + $0xa8] sm:$0xff] %vm432, 0.0
      %456 = vst.msk [vmem:[#allocation2 + $0xb0] sm:$0xff] %vm432, 0.0
      %457 = vst.msk [vmem:[#allocation2 + $0xb8] sm:$0x3] %vm435, 0.0
      %458 = vst.msk [vmem:[#allocation2 + $0xc0] sm:$0xff] %vm432, 0.0
      %459 = vst.msk [vmem:[#allocation2 + $0xc8] sm:$0xff] %vm432, 0.0
      %460 = vst.msk [vmem:[#allocation2 + $0xd0] sm:$0x3] %vm435, 0.0
      %461 = vst.msk [vmem:[#allocation2 + $0xd8] sm:$0xff] %vm432, 0.0
      %462 = vst.msk [vmem:[#allocation2 + $0xe0] sm:$0xff] %vm432, 0.0
      %463 = vst.msk [vmem:[#allocation2 + $0xe8] sm:$0x3] %vm435, 0.0
      %464 = vst.msk [vmem:[#allocation2 + $0xf0] sm:$0xff] %vm432, 0.0
      %465 = vst.msk [vmem:[#allocation2 + $0xf8] sm:$0xff] %vm432, 0.0
      %466 = vst.msk [vmem:[#allocation2 + $0x100] sm:$0x3] %vm435, 0.0
      %467 = vst.msk [vmem:[#allocation2 + $0x108] sm:$0xff] %vm432, 0.0
      %468 = vst.msk [vmem:[#allocation2 + $0x110] sm:$0xff] %vm432, 0.0
      %469 = vst.msk [vmem:[#allocation2 + $0x118] sm:$0x3] %vm435, 0.0
      %470 = vst.msk [vmem:[#allocation2 + $0x120] sm:$0xff] %vm432, 0.0
      %471 = vst.msk [vmem:[#allocation2 + $0x128] sm:$0xff] %vm432, 0.0
      %472 = vst.msk [vmem:[#allocation2 + $0x130] sm:$0x3] %vm435, 0.0
      %473 = vst.msk [vmem:[#allocation2 + $0x138] sm:$0xff] %vm432, 0.0
      %474 = vst.msk [vmem:[#allocation2 + $0x140] sm:$0xff] %vm432, 0.0
      %475 = vst.msk [vmem:[#allocation2 + $0x148] sm:$0x3] %vm435, 0.0
      %476 = vst.msk [vmem:[#allocation2 + $0x150] sm:$0xff] %vm432, 0.0
      %477 = vst.msk [vmem:[#allocation2 + $0x158] sm:$0xff] %vm432, 0.0
      %478 = vst.msk [vmem:[#allocation2 + $0x160] sm:$0x3] %vm435, 0.0
      %479 = vst.msk [vmem:[#allocation2 + $0x168] sm:$0xff] %vm432, 0.0
      %480 = vst.msk [vmem:[#allocation2 + $0x170] sm:$0xff] %vm432, 0.0
      %481 = vst.msk [vmem:[#allocation2 + $0x178] sm:$0x3] %vm435, 0.0
      %482 = vst.msk [vmem:[#allocation2 + $0x180] sm:$0xff] %vm432, 0.0
      %483 = vst.msk [vmem:[#allocation2 + $0x188] sm:$0xff] %vm432, 0.0
      %484 = vst.msk [vmem:[#allocation2 + $0x190] sm:$0x3] %vm435, 0.0
      %485 = vst.msk [vmem:[#allocation2 + $0x198] sm:$0xff] %vm432, 0.0
      %486 = vst.msk [vmem:[#allocation2 + $0x1a0] sm:$0xff] %vm432, 0.0
      %487 = vst.msk [vmem:[#allocation2 + $0x1a8] sm:$0x3] %vm435, 0.0
      %s488 = scalar_lea.vmem [#allocation2], 24
      %489 = vst.msk [vmem:[%s488 + $0x1] sm:$0xff] %vm432, %v400
      %490 = vst.msk [vmem:[%s488 + $0x9] sm:$0xff] %vm432, %v401
      %491 = vst.msk [vmem:[%s488 + $0x19] sm:$0xff] %vm432, %v402
      %492 = vst.msk [vmem:[%s488 + $0x21] sm:$0xff] %vm432, %v403
      %493 = vst.msk [vmem:[%s488 + $0x31] sm:$0xff] %vm432, %v404
      %494 = vst.msk [vmem:[%s488 + $0x39] sm:$0xff] %vm432, %v405
      %495 = vst.msk [vmem:[%s488 + $0x49] sm:$0xff] %vm432, %v406
      %496 = vst.msk [vmem:[%s488 + $0x51] sm:$0xff] %vm432, %v407
      %497 = vst.msk [vmem:[%s488 + $0x61] sm:$0xff] %vm432, %v408
      %498 = vst.msk [vmem:[%s488 + $0x69] sm:$0xff] %vm432, %v409
      %499 = vst.msk [vmem:[%s488 + $0x79] sm:$0xff] %vm432, %v410
      %500 = vst.msk [vmem:[%s488 + $0x81] sm:$0xff] %vm432, %v411
      %501 = vst.msk [vmem:[%s488 + $0x91] sm:$0xff] %vm432, %v412
      %502 = vst.msk [vmem:[%s488 + $0x99] sm:$0xff] %vm432, %v413
      %503 = vst.msk [vmem:[%s488 + $0xa9] sm:$0xff] %vm432, %v414
      %504 = vst.msk [vmem:[%s488 + $0xb1] sm:$0xff] %vm432, %v415
      %505 = vst.msk [vmem:[%s488 + $0xc1] sm:$0xff] %vm432, %v416
      %506 = vst.msk [vmem:[%s488 + $0xc9] sm:$0xff] %vm432, %v417
      %507 = vst.msk [vmem:[%s488 + $0xd9] sm:$0xff] %vm432, %v418
      %508 = vst.msk [vmem:[%s488 + $0xe1] sm:$0xff] %vm432, %v419
      %509 = vst.msk [vmem:[%s488 + $0xf1] sm:$0xff] %vm432, %v420
      %510 = vst.msk [vmem:[%s488 + $0xf9] sm:$0xff] %vm432, %v421
      %511 = vst.msk [vmem:[%s488 + $0x109] sm:$0xff] %vm432, %v422
      %512 = vst.msk [vmem:[%s488 + $0x111] sm:$0xff] %vm432, %v423
      %513 = vst.msk [vmem:[%s488 + $0x121] sm:$0xff] %vm432, %v424
      %514 = vst.msk [vmem:[%s488 + $0x129] sm:$0xff] %vm432, %v425
      %515 = vst.msk [vmem:[%s488 + $0x139] sm:$0xff] %vm432, %v426
      %516 = vst.msk [vmem:[%s488 + $0x141] sm:$0xff] %vm432, %v427
      %517 = vst.msk [vmem:[%s488 + $0x151] sm:$0xff] %vm432, %v428
      %518 = vst.msk [vmem:[%s488 + $0x159] sm:$0xff] %vm432, %v429
      %519 = vst.msk [vmem:[%s488 + $0x169] sm:$0xff] %vm432, %v430
      %520 = vst.msk [vmem:[%s488 + $0x171] sm:$0xff] %vm432, %v431
      %v521 = vld [vmem:[#allocation2] sm:$0xff]
      %v522 = vld [vmem:[#allocation2 + $0x8] sm:$0xff]
      %v523 = vld [vmem:[#allocation2 + $0x18] sm:$0xff]
      %v524 = vld [vmem:[#allocation2 + $0x20] sm:$0xff]
      %v525 = vld [vmem:[#allocation2 + $0x30] sm:$0xff]
      %v526 = vld [vmem:[#allocation2 + $0x38] sm:$0xff]
      %v527 = vld [vmem:[#allocation2 + $0x48] sm:$0xff]
      %v528 = vld [vmem:[#allocation2 + $0x50] sm:$0xff]
      %v529 = vld [vmem:[#allocation2 + $0x60] sm:$0xff]
      %v530 = vld [vmem:[#allocation2 + $0x68] sm:$0xff]
      %v531 = vld [vmem:[#allocation2 + $0x78] sm:$0xff]
      %v532 = vld [vmem:[#allocation2 + $0x80] sm:$0xff]
      %v533 = vld [vmem:[#allocation2 + $0x90] sm:$0xff]
      %v534 = vld [vmem:[#allocation2 + $0x98] sm:$0xff]
      %v535 = vld [vmem:[#allocation2 + $0xa8] sm:$0xff]
      %v536 = vld [vmem:[#allocation2 + $0xb0] sm:$0xff]
      %v537 = vld [vmem:[#allocation2 + $0xc0] sm:$0xff]
      %v538 = vld [vmem:[#allocation2 + $0xc8] sm:$0xff]
      %v539 = vld [vmem:[#allocation2 + $0xd8] sm:$0xff]
      %v540 = vld [vmem:[#allocation2 + $0xe0] sm:$0xff]
      %v541 = vld [vmem:[#allocation2 + $0xf0] sm:$0xff]
      %v542 = vld [vmem:[#allocation2 + $0xf8] sm:$0xff]
      %v543 = vld [vmem:[#allocation2 + $0x108] sm:$0xff]
      %v544 = vld [vmem:[#allocation2 + $0x110] sm:$0xff]
      %v545 = vld [vmem:[#allocation2 + $0x120] sm:$0xff]
      %v546 = vld [vmem:[#allocation2 + $0x128] sm:$0xff]
      %v547 = vld [vmem:[#allocation2 + $0x138] sm:$0xff]
      %v548 = vld [vmem:[#allocation2 + $0x140] sm:$0xff]
      %v549 = vld [vmem:[#allocation2 + $0x150] sm:$0xff]
      %v550 = vld [vmem:[#allocation2 + $0x158] sm:$0xff]
      %v551 = vld [vmem:[#allocation2 + $0x168] sm:$0xff]
      %v552 = vld [vmem:[#allocation2 + $0x170] sm:$0xff]
      %v553 = vld [vmem:[#allocation2 + $0x1] sm:$0xff]
      %v554 = vld [vmem:[#allocation2 + $0x9] sm:$0xff]
      %v555 = vld [vmem:[#allocation2 + $0x19] sm:$0xff]
      %v556 = vld [vmem:[#allocation2 + $0x21] sm:$0xff]
      %v557 = vld [vmem:[#allocation2 + $0x31] sm:$0xff]
      %v558 = vld [vmem:[#allocation2 + $0x39] sm:$0xff]
      %v559 = vld [vmem:[#allocation2 + $0x49] sm:$0xff]
      %v560 = vld [vmem:[#allocation2 + $0x51] sm:$0xff]
      %v561 = vld [vmem:[#allocation2 + $0x61] sm:$0xff]
      %v562 = vld [vmem:[#allocation2 + $0x69] sm:$0xff]
      %v563 = vld [vmem:[#allocation2 + $0x79] sm:$0xff]
      %v564 = vld [vmem:[#allocation2 + $0x81] sm:$0xff]
      %v565 = vld [vmem:[#allocation2 + $0x91] sm:$0xff]
      %v566 = vld [vmem:[#allocation2 + $0x99] sm:$0xff]
      %v567 = vld [vmem:[#allocation2 + $0xa9] sm:$0xff]
      %v568 = vld [vmem:[#allocation2 + $0xb1] sm:$0xff]
      %v569 = vld [vmem:[#allocation2 + $0xc1] sm:$0xff]
      %v570 = vld [vmem:[#allocation2 + $0xc9] sm:$0xff]
      %v571 = vld [vmem:[#allocation2 + $0xd9] sm:$0xff]
      %v572 = vld [vmem:[#allocation2 + $0xe1] sm:$0xff]
      %v573 = vld [vmem:[#allocation2 + $0xf1] sm:$0xff]
      %v574 = vld [vmem:[#allocation2 + $0xf9] sm:$0xff]
      %v575 = vld [vmem:[#allocation2 + $0x109] sm:$0xff]
      %v576 = vld [vmem:[#allocation2 + $0x111] sm:$0xff]
      %v577 = vld [vmem:[#allocation2 + $0x121] sm:$0xff]
      %v578 = vld [vmem:[#allocation2 + $0x129] sm:$0xff]
      %v579 = vld [vmem:[#allocation2 + $0x139] sm:$0xff]
      %v580 = vld [vmem:[#allocation2 + $0x141] sm:$0xff]
      %v581 = vld [vmem:[#allocation2 + $0x151] sm:$0xff]
      %v582 = vld [vmem:[#allocation2 + $0x159] sm:$0xff]
      %v583 = vld [vmem:[#allocation2 + $0x169] sm:$0xff]
      %v584 = vld [vmem:[#allocation2 + $0x171] sm:$0xff]
      %v585 = vld [vmem:[#allocation2 + $0x2] sm:$0xff]
      %v586 = vld [vmem:[#allocation2 + $0xa] sm:$0xff]
      %v587 = vld [vmem:[#allocation2 + $0x1a] sm:$0xff]
      %v588 = vld [vmem:[#allocation2 + $0x22] sm:$0xff]
      %v589 = vld [vmem:[#allocation2 + $0x32] sm:$0xff]
      %v590 = vld [vmem:[#allocation2 + $0x3a] sm:$0xff]
      %v591 = vld [vmem:[#allocation2 + $0x4a] sm:$0xff]
      %v592 = vld [vmem:[#allocation2 + $0x52] sm:$0xff]
      %v593 = vld [vmem:[#allocation2 + $0x62] sm:$0xff]
      %v594 = vld [vmem:[#allocation2 + $0x6a] sm:$0xff]
      %v595 = vld [vmem:[#allocation2 + $0x7a] sm:$0xff]
      %v596 = vld [vmem:[#allocation2 + $0x82] sm:$0xff]
      %v597 = vld [vmem:[#allocation2 + $0x92] sm:$0xff]
      %v598 = vld [vmem:[#allocation2 + $0x9a] sm:$0xff]
      %v599 = vld [vmem:[#allocation2 + $0xaa] sm:$0xff]
      %v600 = vld [vmem:[#allocation2 + $0xb2] sm:$0xff]
      %v601 = vld [vmem:[#allocation2 + $0xc2] sm:$0xff]
      %v602 = vld [vmem:[#allocation2 + $0xca] sm:$0xff]
      %v603 = vld [vmem:[#allocation2 + $0xda] sm:$0xff]
      %v604 = vld [vmem:[#allocation2 + $0xe2] sm:$0xff]
      %v605 = vld [vmem:[#allocation2 + $0xf2] sm:$0xff]
      %v606 = vld [vmem:[#allocation2 + $0xfa] sm:$0xff]
      %v607 = vld [vmem:[#allocation2 + $0x10a] sm:$0xff]
      %v608 = vld [vmem:[#allocation2 + $0x112] sm:$0xff]
      %v609 = vld [vmem:[#allocation2 + $0x122] sm:$0xff]
      %v610 = vld [vmem:[#allocation2 + $0x12a] sm:$0xff]
      %v611 = vld [vmem:[#allocation2 + $0x13a] sm:$0xff]
      %v612 = vld [vmem:[#allocation2 + $0x142] sm:$0xff]
      %v613 = vld [vmem:[#allocation2 + $0x152] sm:$0xff]
      %v614 = vld [vmem:[#allocation2 + $0x15a] sm:$0xff]
      %v615 = vld [vmem:[#allocation2 + $0x16a] sm:$0xff]
      %v616 = vld [vmem:[#allocation2 + $0x172] sm:$0xff]
      %v617 = vld [vmem:[%s488] sm:$0xff]
      %v618 = vld [vmem:[%s488 + $0x8] sm:$0xff]
      %v619 = vld [vmem:[%s488 + $0x18] sm:$0xff]
      %v620 = vld [vmem:[%s488 + $0x20] sm:$0xff]
      %v621 = vld [vmem:[%s488 + $0x30] sm:$0xff]
      %v622 = vld [vmem:[%s488 + $0x38] sm:$0xff]
      %v623 = vld [vmem:[%s488 + $0x48] sm:$0xff]
      %v624 = vld [vmem:[%s488 + $0x50] sm:$0xff]
      %v625 = vld [vmem:[%s488 + $0x60] sm:$0xff]
      %v626 = vld [vmem:[%s488 + $0x68] sm:$0xff]
      %v627 = vld [vmem:[%s488 + $0x78] sm:$0xff]
      %v628 = vld [vmem:[%s488 + $0x80] sm:$0xff]
      %v629 = vld [vmem:[%s488 + $0x90] sm:$0xff]
      %v630 = vld [vmem:[%s488 + $0x98] sm:$0xff]
      %v631 = vld [vmem:[%s488 + $0xa8] sm:$0xff]
      %v632 = vld [vmem:[%s488 + $0xb0] sm:$0xff]
      %v633 = vld [vmem:[%s488 + $0xc0] sm:$0xff]
      %v634 = vld [vmem:[%s488 + $0xc8] sm:$0xff]
      %v635 = vld [vmem:[%s488 + $0xd8] sm:$0xff]
      %v636 = vld [vmem:[%s488 + $0xe0] sm:$0xff]
      %v637 = vld [vmem:[%s488 + $0xf0] sm:$0xff]
      %v638 = vld [vmem:[%s488 + $0xf8] sm:$0xff]
      %v639 = vld [vmem:[%s488 + $0x108] sm:$0xff]
      %v640 = vld [vmem:[%s488 + $0x110] sm:$0xff]
      %v641 = vld [vmem:[%s488 + $0x120] sm:$0xff]
      %v642 = vld [vmem:[%s488 + $0x128] sm:$0xff]
      %v643 = vld [vmem:[%s488 + $0x138] sm:$0xff]
      %v644 = vld [vmem:[%s488 + $0x140] sm:$0xff]
      %v645 = vld [vmem:[%s488 + $0x150] sm:$0xff]
      %v646 = vld [vmem:[%s488 + $0x158] sm:$0xff]
      %v647 = vld [vmem:[%s488 + $0x168] sm:$0xff]
      %v648 = vld [vmem:[%s488 + $0x170] sm:$0xff]
      %v649 = vld [vmem:[%s488 + $0x1] sm:$0xff]
      %v650 = vld [vmem:[%s488 + $0x9] sm:$0xff]
      %v651 = vld [vmem:[%s488 + $0x19] sm:$0xff]
      %v652 = vld [vmem:[%s488 + $0x21] sm:$0xff]
      %v653 = vld [vmem:[%s488 + $0x31] sm:$0xff]
      %v654 = vld [vmem:[%s488 + $0x39] sm:$0xff]
      %v655 = vld [vmem:[%s488 + $0x49] sm:$0xff]
      %v656 = vld [vmem:[%s488 + $0x51] sm:$0xff]
      %v657 = vld [vmem:[%s488 + $0x61] sm:$0xff]
      %v658 = vld [vmem:[%s488 + $0x69] sm:$0xff]
      %v659 = vld [vmem:[%s488 + $0x79] sm:$0xff]
      %v660 = vld [vmem:[%s488 + $0x81] sm:$0xff]
      %v661 = vld [vmem:[%s488 + $0x91] sm:$0xff]
      %v662 = vld [vmem:[%s488 + $0x99] sm:$0xff]
      %v663 = vld [vmem:[%s488 + $0xa9] sm:$0xff]
      %v664 = vld [vmem:[%s488 + $0xb1] sm:$0xff]
      %v665 = vld [vmem:[%s488 + $0xc1] sm:$0xff]
      %v666 = vld [vmem:[%s488 + $0xc9] sm:$0xff]
      %v667 = vld [vmem:[%s488 + $0xd9] sm:$0xff]
      %v668 = vld [vmem:[%s488 + $0xe1] sm:$0xff]
      %v669 = vld [vmem:[%s488 + $0xf1] sm:$0xff]
      %v670 = vld [vmem:[%s488 + $0xf9] sm:$0xff]
      %v671 = vld [vmem:[%s488 + $0x109] sm:$0xff]
      %v672 = vld [vmem:[%s488 + $0x111] sm:$0xff]
      %v673 = vld [vmem:[%s488 + $0x121] sm:$0xff]
      %v674 = vld [vmem:[%s488 + $0x129] sm:$0xff]
      %v675 = vld [vmem:[%s488 + $0x139] sm:$0xff]
      %v676 = vld [vmem:[%s488 + $0x141] sm:$0xff]
      %v677 = vld [vmem:[%s488 + $0x151] sm:$0xff]
      %v678 = vld [vmem:[%s488 + $0x159] sm:$0xff]
      %v679 = vld [vmem:[%s488 + $0x169] sm:$0xff]
      %v680 = vld [vmem:[%s488 + $0x171] sm:$0xff]
      %v681 = vld [vmem:[%s488 + $0x2] sm:$0xff]
      %v682 = vld [vmem:[%s488 + $0xa] sm:$0xff]
      %v683 = vld [vmem:[%s488 + $0x1a] sm:$0xff]
      %v684 = vld [vmem:[%s488 + $0x22] sm:$0xff]
      %v685 = vld [vmem:[%s488 + $0x32] sm:$0xff]
      %v686 = vld [vmem:[%s488 + $0x3a] sm:$0xff]
      %v687 = vld [vmem:[%s488 + $0x4a] sm:$0xff]
      %v688 = vld [vmem:[%s488 + $0x52] sm:$0xff]
      %v689 = vld [vmem:[%s488 + $0x62] sm:$0xff]
      %v690 = vld [vmem:[%s488 + $0x6a] sm:$0xff]
      %v691 = vld [vmem:[%s488 + $0x7a] sm:$0xff]
      %v692 = vld [vmem:[%s488 + $0x82] sm:$0xff]
      %v693 = vld [vmem:[%s488 + $0x92] sm:$0xff]
      %v694 = vld [vmem:[%s488 + $0x9a] sm:$0xff]
      %v695 = vld [vmem:[%s488 + $0xaa] sm:$0xff]
      %v696 = vld [vmem:[%s488 + $0xb2] sm:$0xff]
      %v697 = vld [vmem:[%s488 + $0xc2] sm:$0xff]
      %v698 = vld [vmem:[%s488 + $0xca] sm:$0xff]
      %v699 = vld [vmem:[%s488 + $0xda] sm:$0xff]
      %v700 = vld [vmem:[%s488 + $0xe2] sm:$0xff]
      %v701 = vld [vmem:[%s488 + $0xf2] sm:$0xff]
      %v702 = vld [vmem:[%s488 + $0xfa] sm:$0xff]
      %v703 = vld [vmem:[%s488 + $0x10a] sm:$0xff]
      %v704 = vld [vmem:[%s488 + $0x112] sm:$0xff]
      %v705 = vld [vmem:[%s488 + $0x122] sm:$0xff]
      %v706 = vld [vmem:[%s488 + $0x12a] sm:$0xff]
      %v707 = vld [vmem:[%s488 + $0x13a] sm:$0xff]
      %v708 = vld [vmem:[%s488 + $0x142] sm:$0xff]
      %v709 = vld [vmem:[%s488 + $0x152] sm:$0xff]
      %v710 = vld [vmem:[%s488 + $0x15a] sm:$0xff]
      %v711 = vld [vmem:[%s488 + $0x16a] sm:$0xff]
      %v712 = vld [vmem:[%s488 + $0x172] sm:$0xff]
      %s713 = scalar_lea.vmem [#allocation2], 48
      %v714 = vld [vmem:[%s713] sm:$0xff]
      %v715 = vld [vmem:[%s713 + $0x8] sm:$0xff]
      %v716 = vld [vmem:[%s713 + $0x18] sm:$0xff]
      %v717 = vld [vmem:[%s713 + $0x20] sm:$0xff]
      %v718 = vld [vmem:[%s713 + $0x30] sm:$0xff]
      %v719 = vld [vmem:[%s713 + $0x38] sm:$0xff]
      %v720 = vld [vmem:[%s713 + $0x48] sm:$0xff]
      %v721 = vld [vmem:[%s713 + $0x50] sm:$0xff]
      %v722 = vld [vmem:[%s713 + $0x60] sm:$0xff]
      %v723 = vld [vmem:[%s713 + $0x68] sm:$0xff]
      %v724 = vld [vmem:[%s713 + $0x78] sm:$0xff]
      %v725 = vld [vmem:[%s713 + $0x80] sm:$0xff]
      %v726 = vld [vmem:[%s713 + $0x90] sm:$0xff]
      %v727 = vld [vmem:[%s713 + $0x98] sm:$0xff]
      %v728 = vld [vmem:[%s713 + $0xa8] sm:$0xff]
      %v729 = vld [vmem:[%s713 + $0xb0] sm:$0xff]
      %v730 = vld [vmem:[%s713 + $0xc0] sm:$0xff]
      %v731 = vld [vmem:[%s713 + $0xc8] sm:$0xff]
      %v732 = vld [vmem:[%s713 + $0xd8] sm:$0xff]
      %v733 = vld [vmem:[%s713 + $0xe0] sm:$0xff]
      %v734 = vld [vmem:[%s713 + $0xf0] sm:$0xff]
      %v735 = vld [vmem:[%s713 + $0xf8] sm:$0xff]
      %v736 = vld [vmem:[%s713 + $0x108] sm:$0xff]
      %v737 = vld [vmem:[%s713 + $0x110] sm:$0xff]
      %v738 = vld [vmem:[%s713 + $0x120] sm:$0xff]
      %v739 = vld [vmem:[%s713 + $0x128] sm:$0xff]
      %v740 = vld [vmem:[%s713 + $0x138] sm:$0xff]
      %v741 = vld [vmem:[%s713 + $0x140] sm:$0xff]
      %v742 = vld [vmem:[%s713 + $0x150] sm:$0xff]
      %v743 = vld [vmem:[%s713 + $0x158] sm:$0xff]
      %v744 = vld [vmem:[%s713 + $0x168] sm:$0xff]
      %v745 = vld [vmem:[%s713 + $0x170] sm:$0xff]
      %v746 = vld [vmem:[%s713 + $0x1] sm:$0xff]
      %v747 = vld [vmem:[%s713 + $0x9] sm:$0xff]
      %v748 = vld [vmem:[%s713 + $0x19] sm:$0xff]
      %v749 = vld [vmem:[%s713 + $0x21] sm:$0xff]
      %v750 = vld [vmem:[%s713 + $0x31] sm:$0xff]
      %v751 = vld [vmem:[%s713 + $0x39] sm:$0xff]
      %v752 = vld [vmem:[%s713 + $0x49] sm:$0xff]
      %v753 = vld [vmem:[%s713 + $0x51] sm:$0xff]
      %v754 = vld [vmem:[%s713 + $0x61] sm:$0xff]
      %v755 = vld [vmem:[%s713 + $0x69] sm:$0xff]
      %v756 = vld [vmem:[%s713 + $0x79] sm:$0xff]
      %v757 = vld [vmem:[%s713 + $0x81] sm:$0xff]
      %v758 = vld [vmem:[%s713 + $0x91] sm:$0xff]
      %v759 = vld [vmem:[%s713 + $0x99] sm:$0xff]
      %v760 = vld [vmem:[%s713 + $0xa9] sm:$0xff]
      %v761 = vld [vmem:[%s713 + $0xb1] sm:$0xff]
      %v762 = vld [vmem:[%s713 + $0xc1] sm:$0xff]
      %v763 = vld [vmem:[%s713 + $0xc9] sm:$0xff]
      %v764 = vld [vmem:[%s713 + $0xd9] sm:$0xff]
      %v765 = vld [vmem:[%s713 + $0xe1] sm:$0xff]
      %v766 = vld [vmem:[%s713 + $0xf1] sm:$0xff]
      %v767 = vld [vmem:[%s713 + $0xf9] sm:$0xff]
      %v768 = vld [vmem:[%s713 + $0x109] sm:$0xff]
      %v769 = vld [vmem:[%s713 + $0x111] sm:$0xff]
      %v770 = vld [vmem:[%s713 + $0x121] sm:$0xff]
      %v771 = vld [vmem:[%s713 + $0x129] sm:$0xff]
      %v772 = vld [vmem:[%s713 + $0x139] sm:$0xff]
      %v773 = vld [vmem:[%s713 + $0x141] sm:$0xff]
      %v774 = vld [vmem:[%s713 + $0x151] sm:$0xff]
      %v775 = vld [vmem:[%s713 + $0x159] sm:$0xff]
      %v776 = vld [vmem:[%s713 + $0x169] sm:$0xff]
      %v777 = vld [vmem:[%s713 + $0x171] sm:$0xff]
      %v778 = vld [vmem:[%s713 + $0x2] sm:$0xff]
      %v779 = vld [vmem:[%s713 + $0xa] sm:$0xff]
      %v780 = vld [vmem:[%s713 + $0x1a] sm:$0xff]
      %v781 = vld [vmem:[%s713 + $0x22] sm:$0xff]
      %v782 = vld [vmem:[%s713 + $0x32] sm:$0xff]
      %v783 = vld [vmem:[%s713 + $0x3a] sm:$0xff]
      %v784 = vld [vmem:[%s713 + $0x4a] sm:$0xff]
      %v785 = vld [vmem:[%s713 + $0x52] sm:$0xff]
      %v786 = vld [vmem:[%s713 + $0x62] sm:$0xff]
      %v787 = vld [vmem:[%s713 + $0x6a] sm:$0xff]
      %v788 = vld [vmem:[%s713 + $0x7a] sm:$0xff]
      %v789 = vld [vmem:[%s713 + $0x82] sm:$0xff]
      %v790 = vld [vmem:[%s713 + $0x92] sm:$0xff]
      %v791 = vld [vmem:[%s713 + $0x9a] sm:$0xff]
      %v792 = vld [vmem:[%s713 + $0xaa] sm:$0xff]
      %v793 = vld [vmem:[%s713 + $0xb2] sm:$0xff]
      %v794 = vld [vmem:[%s713 + $0xc2] sm:$0xff]
      %v795 = vld [vmem:[%s713 + $0xca] sm:$0xff]
      %v796 = vld [vmem:[%s713 + $0xda] sm:$0xff]
      %v797 = vld [vmem:[%s713 + $0xe2] sm:$0xff]
      %v798 = vld [vmem:[%s713 + $0xf2] sm:$0xff]
      %v799 = vld [vmem:[%s713 + $0xfa] sm:$0xff]
      %v800 = vld [vmem:[%s713 + $0x10a] sm:$0xff]
      %v801 = vld [vmem:[%s713 + $0x112] sm:$0xff]
      %v802 = vld [vmem:[%s713 + $0x122] sm:$0xff]
      %v803 = vld [vmem:[%s713 + $0x12a] sm:$0xff]
      %v804 = vld [vmem:[%s713 + $0x13a] sm:$0xff]
      %v805 = vld [vmem:[%s713 + $0x142] sm:$0xff]
      %v806 = vld [vmem:[%s713 + $0x152] sm:$0xff]
      %v807 = vld [vmem:[%s713 + $0x15a] sm:$0xff]
      %v808 = vld [vmem:[%s713 + $0x16a] sm:$0xff]
      %v809 = vld [vmem:[%s713 + $0x172] sm:$0xff]
      %842 = vrot.lane.b32.xlu0 %v553, 8
      %v843 = vpop.permute.xlu0 %842
      %844 = vrot.lane.b32.xlu0 %v554, 8
      %v845 = vpop.permute.xlu0 %844
      %846 = vrot.lane.b32.xlu0 %v555, 8
      %v847 = vpop.permute.xlu0 %846
      %848 = vrot.lane.b32.xlu0 %v556, 8
      %v849 = vpop.permute.xlu0 %848
      %850 = vrot.lane.b32.xlu0 %v557, 8
      %v851 = vpop.permute.xlu0 %850
      %852 = vrot.lane.b32.xlu0 %v558, 8
      %v853 = vpop.permute.xlu0 %852
      %854 = vrot.lane.b32.xlu0 %v559, 8
      %v855 = vpop.permute.xlu0 %854
      %856 = vrot.lane.b32.xlu0 %v560, 8
      %v857 = vpop.permute.xlu0 %856
      %858 = vrot.lane.b32.xlu0 %v561, 8
      %v859 = vpop.permute.xlu0 %858
      %860 = vrot.lane.b32.xlu0 %v562, 8
      %v861 = vpop.permute.xlu0 %860
      %862 = vrot.lane.b32.xlu0 %v563, 8
      %v863 = vpop.permute.xlu0 %862
      %864 = vrot.lane.b32.xlu0 %v564, 8
      %v865 = vpop.permute.xlu0 %864
      %866 = vrot.lane.b32.xlu0 %v565, 8
      %v867 = vpop.permute.xlu0 %866
      %868 = vrot.lane.b32.xlu0 %v566, 8
      %v869 = vpop.permute.xlu0 %868
      %870 = vrot.lane.b32.xlu0 %v567, 8
      %v871 = vpop.permute.xlu0 %870
      %872 = vrot.lane.b32.xlu0 %v568, 8
      %v873 = vpop.permute.xlu0 %872
      %874 = vrot.lane.b32.xlu0 %v569, 8
      %v875 = vpop.permute.xlu0 %874
      %876 = vrot.lane.b32.xlu0 %v570, 8
      %v877 = vpop.permute.xlu0 %876
      %878 = vrot.lane.b32.xlu0 %v571, 8
      %v879 = vpop.permute.xlu0 %878
      %880 = vrot.lane.b32.xlu0 %v572, 8
      %v881 = vpop.permute.xlu0 %880
      %882 = vrot.lane.b32.xlu0 %v573, 8
      %v883 = vpop.permute.xlu0 %882
      %884 = vrot.lane.b32.xlu0 %v574, 8
      %v885 = vpop.permute.xlu0 %884
      %886 = vrot.lane.b32.xlu0 %v575, 8
      %v887 = vpop.permute.xlu0 %886
      %888 = vrot.lane.b32.xlu0 %v576, 8
      %v889 = vpop.permute.xlu0 %888
      %890 = vrot.lane.b32.xlu0 %v577, 8
      %v891 = vpop.permute.xlu0 %890
      %892 = vrot.lane.b32.xlu0 %v578, 8
      %v893 = vpop.permute.xlu0 %892
      %894 = vrot.lane.b32.xlu0 %v579, 8
      %v895 = vpop.permute.xlu0 %894
      %896 = vrot.lane.b32.xlu0 %v580, 8
      %v897 = vpop.permute.xlu0 %896
      %898 = vrot.lane.b32.xlu0 %v581, 8
      %v899 = vpop.permute.xlu0 %898
      %900 = vrot.lane.b32.xlu0 %v582, 8
      %v901 = vpop.permute.xlu0 %900
      %902 = vrot.lane.b32.xlu0 %v583, 8
      %v903 = vpop.permute.xlu0 %902
      %904 = vrot.lane.b32.xlu0 %v584, 8
      %v905 = vpop.permute.xlu0 %904
      %970 = vrot.lane.b32.xlu0 %v585, 16
      %v971 = vpop.permute.xlu0 %970
      %972 = vrot.lane.b32.xlu0 %v586, 16
      %v973 = vpop.permute.xlu0 %972
      %974 = vrot.lane.b32.xlu0 %v587, 16
      %v975 = vpop.permute.xlu0 %974
      %976 = vrot.lane.b32.xlu0 %v588, 16
      %v977 = vpop.permute.xlu0 %976
      %978 = vrot.lane.b32.xlu0 %v589, 16
      %v979 = vpop.permute.xlu0 %978
      %980 = vrot.lane.b32.xlu0 %v590, 16
      %v981 = vpop.permute.xlu0 %980
      %982 = vrot.lane.b32.xlu0 %v591, 16
      %v983 = vpop.permute.xlu0 %982
      %984 = vrot.lane.b32.xlu0 %v592, 16
      %v985 = vpop.permute.xlu0 %984
      %986 = vrot.lane.b32.xlu0 %v593, 16
      %v987 = vpop.permute.xlu0 %986
      %988 = vrot.lane.b32.xlu0 %v594, 16
      %v989 = vpop.permute.xlu0 %988
      %990 = vrot.lane.b32.xlu0 %v595, 16
      %v991 = vpop.permute.xlu0 %990
      %992 = vrot.lane.b32.xlu0 %v596, 16
      %v993 = vpop.permute.xlu0 %992
      %994 = vrot.lane.b32.xlu0 %v597, 16
      %v995 = vpop.permute.xlu0 %994
      %996 = vrot.lane.b32.xlu0 %v598, 16
      %v997 = vpop.permute.xlu0 %996
      %998 = vrot.lane.b32.xlu0 %v599, 16
      %v999 = vpop.permute.xlu0 %998
      %1000 = vrot.lane.b32.xlu0 %v600, 16
      %v1001 = vpop.permute.xlu0 %1000
      %1002 = vrot.lane.b32.xlu0 %v601, 16
      %v1003 = vpop.permute.xlu0 %1002
      %1004 = vrot.lane.b32.xlu0 %v602, 16
      %v1005 = vpop.permute.xlu0 %1004
      %1006 = vrot.lane.b32.xlu0 %v603, 16
      %v1007 = vpop.permute.xlu0 %1006
      %1008 = vrot.lane.b32.xlu0 %v604, 16
      %v1009 = vpop.permute.xlu0 %1008
      %1010 = vrot.lane.b32.xlu0 %v605, 16
      %v1011 = vpop.permute.xlu0 %1010
      %1012 = vrot.lane.b32.xlu0 %v606, 16
      %v1013 = vpop.permute.xlu0 %1012
      %1014 = vrot.lane.b32.xlu0 %v607, 16
      %v1015 = vpop.permute.xlu0 %1014
      %1016 = vrot.lane.b32.xlu0 %v608, 16
      %v1017 = vpop.permute.xlu0 %1016
      %1018 = vrot.lane.b32.xlu0 %v609, 16
      %v1019 = vpop.permute.xlu0 %1018
      %1020 = vrot.lane.b32.xlu0 %v610, 16
      %v1021 = vpop.permute.xlu0 %1020
      %1022 = vrot.lane.b32.xlu0 %v611, 16
      %v1023 = vpop.permute.xlu0 %1022
      %1024 = vrot.lane.b32.xlu0 %v612, 16
      %v1025 = vpop.permute.xlu0 %1024
      %1026 = vrot.lane.b32.xlu0 %v613, 16
      %v1027 = vpop.permute.xlu0 %1026
      %1028 = vrot.lane.b32.xlu0 %v614, 16
      %v1029 = vpop.permute.xlu0 %1028
      %1030 = vrot.lane.b32.xlu0 %v615, 16
      %v1031 = vpop.permute.xlu0 %1030
      %1032 = vrot.lane.b32.xlu0 %v616, 16
      %v1033 = vpop.permute.xlu0 %1032
      %1098 = vrot.lane.b32.xlu0 %v617, 24
      %v1099 = vpop.permute.xlu0 %1098
      %1100 = vrot.lane.b32.xlu0 %v618, 24
      %v1101 = vpop.permute.xlu0 %1100
      %1102 = vrot.lane.b32.xlu0 %v619, 24
      %v1103 = vpop.permute.xlu0 %1102
      %1104 = vrot.lane.b32.xlu0 %v620, 24
      %v1105 = vpop.permute.xlu0 %1104
      %1106 = vrot.lane.b32.xlu0 %v621, 24
      %v1107 = vpop.permute.xlu0 %1106
      %1108 = vrot.lane.b32.xlu0 %v622, 24
      %v1109 = vpop.permute.xlu0 %1108
      %1110 = vrot.lane.b32.xlu0 %v623, 24
      %v1111 = vpop.permute.xlu0 %1110
      %1112 = vrot.lane.b32.xlu0 %v624, 24
      %v1113 = vpop.permute.xlu0 %1112
      %1114 = vrot.lane.b32.xlu0 %v625, 24
      %v1115 = vpop.permute.xlu0 %1114
      %1116 = vrot.lane.b32.xlu0 %v626, 24
      %v1117 = vpop.permute.xlu0 %1116
      %1118 = vrot.lane.b32.xlu0 %v627, 24
      %v1119 = vpop.permute.xlu0 %1118
      %1120 = vrot.lane.b32.xlu0 %v628, 24
      %v1121 = vpop.permute.xlu0 %1120
      %1122 = vrot.lane.b32.xlu0 %v629, 24
      %v1123 = vpop.permute.xlu0 %1122
      %1124 = vrot.lane.b32.xlu0 %v630, 24
      %v1125 = vpop.permute.xlu0 %1124
      %1126 = vrot.lane.b32.xlu0 %v631, 24
      %v1127 = vpop.permute.xlu0 %1126
      %1128 = vrot.lane.b32.xlu0 %v632, 24
      %v1129 = vpop.permute.xlu0 %1128
      %1130 = vrot.lane.b32.xlu0 %v633, 24
      %v1131 = vpop.permute.xlu0 %1130
      %1132 = vrot.lane.b32.xlu0 %v634, 24
      %v1133 = vpop.permute.xlu0 %1132
      %1134 = vrot.lane.b32.xlu0 %v635, 24
      %v1135 = vpop.permute.xlu0 %1134
      %1136 = vrot.lane.b32.xlu0 %v636, 24
      %v1137 = vpop.permute.xlu0 %1136
      %1138 = vrot.lane.b32.xlu0 %v637, 24
      %v1139 = vpop.permute.xlu0 %1138
      %1140 = vrot.lane.b32.xlu0 %v638, 24
      %v1141 = vpop.permute.xlu0 %1140
      %1142 = vrot.lane.b32.xlu0 %v639, 24
      %v1143 = vpop.permute.xlu0 %1142
      %1144 = vrot.lane.b32.xlu0 %v640, 24
      %v1145 = vpop.permute.xlu0 %1144
      %1146 = vrot.lane.b32.xlu0 %v641, 24
      %v1147 = vpop.permute.xlu0 %1146
      %1148 = vrot.lane.b32.xlu0 %v642, 24
      %v1149 = vpop.permute.xlu0 %1148
      %1150 = vrot.lane.b32.xlu0 %v643, 24
      %v1151 = vpop.permute.xlu0 %1150
      %1152 = vrot.lane.b32.xlu0 %v644, 24
      %v1153 = vpop.permute.xlu0 %1152
      %1154 = vrot.lane.b32.xlu0 %v645, 24
      %v1155 = vpop.permute.xlu0 %1154
      %1156 = vrot.lane.b32.xlu0 %v646, 24
      %v1157 = vpop.permute.xlu0 %1156
      %1158 = vrot.lane.b32.xlu0 %v647, 24
      %v1159 = vpop.permute.xlu0 %1158
      %1160 = vrot.lane.b32.xlu0 %v648, 24
      %v1161 = vpop.permute.xlu0 %1160
      %1226 = vrot.lane.b32.xlu0 %v649, 32
      %v1227 = vpop.permute.xlu0 %1226
      %1228 = vrot.lane.b32.xlu0 %v650, 32
      %v1229 = vpop.permute.xlu0 %1228
      %1230 = vrot.lane.b32.xlu0 %v651, 32
      %v1231 = vpop.permute.xlu0 %1230
      %1232 = vrot.lane.b32.xlu0 %v652, 32
      %v1233 = vpop.permute.xlu0 %1232
      %1234 = vrot.lane.b32.xlu0 %v653, 32
      %v1235 = vpop.permute.xlu0 %1234
      %1236 = vrot.lane.b32.xlu0 %v654, 32
      %v1237 = vpop.permute.xlu0 %1236
      %1238 = vrot.lane.b32.xlu0 %v655, 32
      %v1239 = vpop.permute.xlu0 %1238
      %1240 = vrot.lane.b32.xlu0 %v656, 32
      %v1241 = vpop.permute.xlu0 %1240
      %1242 = vrot.lane.b32.xlu0 %v657, 32
      %v1243 = vpop.permute.xlu0 %1242
      %1244 = vrot.lane.b32.xlu0 %v658, 32
      %v1245 = vpop.permute.xlu0 %1244
      %1246 = vrot.lane.b32.xlu0 %v659, 32
      %v1247 = vpop.permute.xlu0 %1246
      %1248 = vrot.lane.b32.xlu0 %v660, 32
      %v1249 = vpop.permute.xlu0 %1248
      %1250 = vrot.lane.b32.xlu0 %v661, 32
      %v1251 = vpop.permute.xlu0 %1250
      %1252 = vrot.lane.b32.xlu0 %v662, 32
      %v1253 = vpop.permute.xlu0 %1252
      %1254 = vrot.lane.b32.xlu0 %v663, 32
      %v1255 = vpop.permute.xlu0 %1254
      %1256 = vrot.lane.b32.xlu0 %v664, 32
      %v1257 = vpop.permute.xlu0 %1256
      %1258 = vrot.lane.b32.xlu0 %v665, 32
      %v1259 = vpop.permute.xlu0 %1258
      %1260 = vrot.lane.b32.xlu0 %v666, 32
      %v1261 = vpop.permute.xlu0 %1260
      %1262 = vrot.lane.b32.xlu0 %v667, 32
      %v1263 = vpop.permute.xlu0 %1262
      %1264 = vrot.lane.b32.xlu0 %v668, 32
      %v1265 = vpop.permute.xlu0 %1264
      %1266 = vrot.lane.b32.xlu0 %v669, 32
      %v1267 = vpop.permute.xlu0 %1266
      %1268 = vrot.lane.b32.xlu0 %v670, 32
      %v1269 = vpop.permute.xlu0 %1268
      %1270 = vrot.lane.b32.xlu0 %v671, 32
      %v1271 = vpop.permute.xlu0 %1270
      %1272 = vrot.lane.b32.xlu0 %v672, 32
      %v1273 = vpop.permute.xlu0 %1272
      %1274 = vrot.lane.b32.xlu0 %v673, 32
      %v1275 = vpop.permute.xlu0 %1274
      %1276 = vrot.lane.b32.xlu0 %v674, 32
      %v1277 = vpop.permute.xlu0 %1276
      %1278 = vrot.lane.b32.xlu0 %v675, 32
      %v1279 = vpop.permute.xlu0 %1278
      %1280 = vrot.lane.b32.xlu0 %v676, 32
      %v1281 = vpop.permute.xlu0 %1280
      %1282 = vrot.lane.b32.xlu0 %v677, 32
      %v1283 = vpop.permute.xlu0 %1282
      %1284 = vrot.lane.b32.xlu0 %v678, 32
      %v1285 = vpop.permute.xlu0 %1284
      %1286 = vrot.lane.b32.xlu0 %v679, 32
      %v1287 = vpop.permute.xlu0 %1286
      %1288 = vrot.lane.b32.xlu0 %v680, 32
      %v1289 = vpop.permute.xlu0 %1288
      %1354 = vrot.lane.b32.xlu0 %v681, 40
      %v1355 = vpop.permute.xlu0 %1354
      %1356 = vrot.lane.b32.xlu0 %v682, 40
      %v1357 = vpop.permute.xlu0 %1356
      %1358 = vrot.lane.b32.xlu0 %v683, 40
      %v1359 = vpop.permute.xlu0 %1358
      %1360 = vrot.lane.b32.xlu0 %v684, 40
      %v1361 = vpop.permute.xlu0 %1360
      %1362 = vrot.lane.b32.xlu0 %v685, 40
      %v1363 = vpop.permute.xlu0 %1362
      %1364 = vrot.lane.b32.xlu0 %v686, 40
      %v1365 = vpop.permute.xlu0 %1364
      %1366 = vrot.lane.b32.xlu0 %v687, 40
      %v1367 = vpop.permute.xlu0 %1366
      %1368 = vrot.lane.b32.xlu0 %v688, 40
      %v1369 = vpop.permute.xlu0 %1368
      %1370 = vrot.lane.b32.xlu0 %v689, 40
      %v1371 = vpop.permute.xlu0 %1370
      %1372 = vrot.lane.b32.xlu0 %v690, 40
      %v1373 = vpop.permute.xlu0 %1372
      %1374 = vrot.lane.b32.xlu0 %v691, 40
      %v1375 = vpop.permute.xlu0 %1374
      %1376 = vrot.lane.b32.xlu0 %v692, 40
      %v1377 = vpop.permute.xlu0 %1376
      %1378 = vrot.lane.b32.xlu0 %v693, 40
      %v1379 = vpop.permute.xlu0 %1378
      %1380 = vrot.lane.b32.xlu0 %v694, 40
      %v1381 = vpop.permute.xlu0 %1380
      %1382 = vrot.lane.b32.xlu0 %v695, 40
      %v1383 = vpop.permute.xlu0 %1382
      %1384 = vrot.lane.b32.xlu0 %v696, 40
      %v1385 = vpop.permute.xlu0 %1384
      %1386 = vrot.lane.b32.xlu0 %v697, 40
      %v1387 = vpop.permute.xlu0 %1386
      %1388 = vrot.lane.b32.xlu0 %v698, 40
      %v1389 = vpop.permute.xlu0 %1388
      %1390 = vrot.lane.b32.xlu0 %v699, 40
      %v1391 = vpop.permute.xlu0 %1390
      %1392 = vrot.lane.b32.xlu0 %v700, 40
      %v1393 = vpop.permute.xlu0 %1392
      %1394 = vrot.lane.b32.xlu0 %v701, 40
      %v1395 = vpop.permute.xlu0 %1394
      %1396 = vrot.lane.b32.xlu0 %v702, 40
      %v1397 = vpop.permute.xlu0 %1396
      %1398 = vrot.lane.b32.xlu0 %v703, 40
      %v1399 = vpop.permute.xlu0 %1398
      %1400 = vrot.lane.b32.xlu0 %v704, 40
      %v1401 = vpop.permute.xlu0 %1400
      %1402 = vrot.lane.b32.xlu0 %v705, 40
      %v1403 = vpop.permute.xlu0 %1402
      %1404 = vrot.lane.b32.xlu0 %v706, 40
      %v1405 = vpop.permute.xlu0 %1404
      %1406 = vrot.lane.b32.xlu0 %v707, 40
      %v1407 = vpop.permute.xlu0 %1406
      %1408 = vrot.lane.b32.xlu0 %v708, 40
      %v1409 = vpop.permute.xlu0 %1408
      %1410 = vrot.lane.b32.xlu0 %v709, 40
      %v1411 = vpop.permute.xlu0 %1410
      %1412 = vrot.lane.b32.xlu0 %v710, 40
      %v1413 = vpop.permute.xlu0 %1412
      %1414 = vrot.lane.b32.xlu0 %v711, 40
      %v1415 = vpop.permute.xlu0 %1414
      %1416 = vrot.lane.b32.xlu0 %v712, 40
      %v1417 = vpop.permute.xlu0 %1416
      %1482 = vrot.lane.b32.xlu0 %v714, 48
      %v1483 = vpop.permute.xlu0 %1482
      %1484 = vrot.lane.b32.xlu0 %v715, 48
      %v1485 = vpop.permute.xlu0 %1484
      %1486 = vrot.lane.b32.xlu0 %v716, 48
      %v1487 = vpop.permute.xlu0 %1486
      %1488 = vrot.lane.b32.xlu0 %v717, 48
      %v1489 = vpop.permute.xlu0 %1488
      %1490 = vrot.lane.b32.xlu0 %v718, 48
      %v1491 = vpop.permute.xlu0 %1490
      %1492 = vrot.lane.b32.xlu0 %v719, 48
      %v1493 = vpop.permute.xlu0 %1492
      %1494 = vrot.lane.b32.xlu0 %v720, 48
      %v1495 = vpop.permute.xlu0 %1494
      %1496 = vrot.lane.b32.xlu0 %v721, 48
      %v1497 = vpop.permute.xlu0 %1496
      %1498 = vrot.lane.b32.xlu0 %v722, 48
      %v1499 = vpop.permute.xlu0 %1498
      %1500 = vrot.lane.b32.xlu0 %v723, 48
      %v1501 = vpop.permute.xlu0 %1500
      %1502 = vrot.lane.b32.xlu0 %v724, 48
      %v1503 = vpop.permute.xlu0 %1502
      %1504 = vrot.lane.b32.xlu0 %v725, 48
      %v1505 = vpop.permute.xlu0 %1504
      %1506 = vrot.lane.b32.xlu0 %v726, 48
      %v1507 = vpop.permute.xlu0 %1506
      %1508 = vrot.lane.b32.xlu0 %v727, 48
      %v1509 = vpop.permute.xlu0 %1508
      %1510 = vrot.lane.b32.xlu0 %v728, 48
      %v1511 = vpop.permute.xlu0 %1510
      %1512 = vrot.lane.b32.xlu0 %v729, 48
      %v1513 = vpop.permute.xlu0 %1512
      %1514 = vrot.lane.b32.xlu0 %v730, 48
      %v1515 = vpop.permute.xlu0 %1514
      %1516 = vrot.lane.b32.xlu0 %v731, 48
      %v1517 = vpop.permute.xlu0 %1516
      %1518 = vrot.lane.b32.xlu0 %v732, 48
      %v1519 = vpop.permute.xlu0 %1518
      %1520 = vrot.lane.b32.xlu0 %v733, 48
      %v1521 = vpop.permute.xlu0 %1520
      %1522 = vrot.lane.b32.xlu0 %v734, 48
      %v1523 = vpop.permute.xlu0 %1522
      %1524 = vrot.lane.b32.xlu0 %v735, 48
      %v1525 = vpop.permute.xlu0 %1524
      %1526 = vrot.lane.b32.xlu0 %v736, 48
      %v1527 = vpop.permute.xlu0 %1526
      %1528 = vrot.lane.b32.xlu0 %v737, 48
      %v1529 = vpop.permute.xlu0 %1528
      %1530 = vrot.lane.b32.xlu0 %v738, 48
      %v1531 = vpop.permute.xlu0 %1530
      %1532 = vrot.lane.b32.xlu0 %v739, 48
      %v1533 = vpop.permute.xlu0 %1532
      %1534 = vrot.lane.b32.xlu0 %v740, 48
      %v1535 = vpop.permute.xlu0 %1534
      %1536 = vrot.lane.b32.xlu0 %v741, 48
      %v1537 = vpop.permute.xlu0 %1536
      %1538 = vrot.lane.b32.xlu0 %v742, 48
      %v1539 = vpop.permute.xlu0 %1538
      %1540 = vrot.lane.b32.xlu0 %v743, 48
      %v1541 = vpop.permute.xlu0 %1540
      %1542 = vrot.lane.b32.xlu0 %v744, 48
      %v1543 = vpop.permute.xlu0 %1542
      %1544 = vrot.lane.b32.xlu0 %v745, 48
      %v1545 = vpop.permute.xlu0 %1544
      %1610 = vrot.lane.b32.xlu0 %v746, 56
      %v1611 = vpop.permute.xlu0 %1610
      %1612 = vrot.lane.b32.xlu0 %v747, 56
      %v1613 = vpop.permute.xlu0 %1612
      %1614 = vrot.lane.b32.xlu0 %v748, 56
      %v1615 = vpop.permute.xlu0 %1614
      %1616 = vrot.lane.b32.xlu0 %v749, 56
      %v1617 = vpop.permute.xlu0 %1616
      %1618 = vrot.lane.b32.xlu0 %v750, 56
      %v1619 = vpop.permute.xlu0 %1618
      %1620 = vrot.lane.b32.xlu0 %v751, 56
      %v1621 = vpop.permute.xlu0 %1620
      %1622 = vrot.lane.b32.xlu0 %v752, 56
      %v1623 = vpop.permute.xlu0 %1622
      %1624 = vrot.lane.b32.xlu0 %v753, 56
      %v1625 = vpop.permute.xlu0 %1624
      %1626 = vrot.lane.b32.xlu0 %v754, 56
      %v1627 = vpop.permute.xlu0 %1626
      %1628 = vrot.lane.b32.xlu0 %v755, 56
      %v1629 = vpop.permute.xlu0 %1628
      %1630 = vrot.lane.b32.xlu0 %v756, 56
      %v1631 = vpop.permute.xlu0 %1630
      %1632 = vrot.lane.b32.xlu0 %v757, 56
      %v1633 = vpop.permute.xlu0 %1632
      %1634 = vrot.lane.b32.xlu0 %v758, 56
      %v1635 = vpop.permute.xlu0 %1634
      %1636 = vrot.lane.b32.xlu0 %v759, 56
      %v1637 = vpop.permute.xlu0 %1636
      %1638 = vrot.lane.b32.xlu0 %v760, 56
      %v1639 = vpop.permute.xlu0 %1638
      %1640 = vrot.lane.b32.xlu0 %v761, 56
      %v1641 = vpop.permute.xlu0 %1640
      %1642 = vrot.lane.b32.xlu0 %v762, 56
      %v1643 = vpop.permute.xlu0 %1642
      %1644 = vrot.lane.b32.xlu0 %v763, 56
      %v1645 = vpop.permute.xlu0 %1644
      %1646 = vrot.lane.b32.xlu0 %v764, 56
      %v1647 = vpop.permute.xlu0 %1646
      %1648 = vrot.lane.b32.xlu0 %v765, 56
      %v1649 = vpop.permute.xlu0 %1648
      %1650 = vrot.lane.b32.xlu0 %v766, 56
      %v1651 = vpop.permute.xlu0 %1650
      %1652 = vrot.lane.b32.xlu0 %v767, 56
      %v1653 = vpop.permute.xlu0 %1652
      %1654 = vrot.lane.b32.xlu0 %v768, 56
      %v1655 = vpop.permute.xlu0 %1654
      %1656 = vrot.lane.b32.xlu0 %v769, 56
      %v1657 = vpop.permute.xlu0 %1656
      %1658 = vrot.lane.b32.xlu0 %v770, 56
      %v1659 = vpop.permute.xlu0 %1658
      %1660 = vrot.lane.b32.xlu0 %v771, 56
      %v1661 = vpop.permute.xlu0 %1660
      %1662 = vrot.lane.b32.xlu0 %v772, 56
      %v1663 = vpop.permute.xlu0 %1662
      %1664 = vrot.lane.b32.xlu0 %v773, 56
      %v1665 = vpop.permute.xlu0 %1664
      %1666 = vrot.lane.b32.xlu0 %v774, 56
      %v1667 = vpop.permute.xlu0 %1666
      %1668 = vrot.lane.b32.xlu0 %v775, 56
      %v1669 = vpop.permute.xlu0 %1668
      %1670 = vrot.lane.b32.xlu0 %v776, 56
      %v1671 = vpop.permute.xlu0 %1670
      %1672 = vrot.lane.b32.xlu0 %v777, 56
      %v1673 = vpop.permute.xlu0 %1672
      %1738 = vrot.lane.b32.xlu0 %v778, 64
      %v1739 = vpop.permute.xlu0 %1738
      %1740 = vrot.lane.b32.xlu0 %v779, 64
      %v1741 = vpop.permute.xlu0 %1740
      %1742 = vrot.lane.b32.xlu0 %v780, 64
      %v1743 = vpop.permute.xlu0 %1742
      %1744 = vrot.lane.b32.xlu0 %v781, 64
      %v1745 = vpop.permute.xlu0 %1744
      %1746 = vrot.lane.b32.xlu0 %v782, 64
      %v1747 = vpop.permute.xlu0 %1746
      %1748 = vrot.lane.b32.xlu0 %v783, 64
      %v1749 = vpop.permute.xlu0 %1748
      %1750 = vrot.lane.b32.xlu0 %v784, 64
      %v1751 = vpop.permute.xlu0 %1750
      %1752 = vrot.lane.b32.xlu0 %v785, 64
      %v1753 = vpop.permute.xlu0 %1752
      %1754 = vrot.lane.b32.xlu0 %v786, 64
      %v1755 = vpop.permute.xlu0 %1754
      %1756 = vrot.lane.b32.xlu0 %v787, 64
      %v1757 = vpop.permute.xlu0 %1756
      %1758 = vrot.lane.b32.xlu0 %v788, 64
      %v1759 = vpop.permute.xlu0 %1758
      %1760 = vrot.lane.b32.xlu0 %v789, 64
      %v1761 = vpop.permute.xlu0 %1760
      %1762 = vrot.lane.b32.xlu0 %v790, 64
      %v1763 = vpop.permute.xlu0 %1762
      %1764 = vrot.lane.b32.xlu0 %v791, 64
      %v1765 = vpop.permute.xlu0 %1764
      %1766 = vrot.lane.b32.xlu0 %v792, 64
      %v1767 = vpop.permute.xlu0 %1766
      %1768 = vrot.lane.b32.xlu0 %v793, 64
      %v1769 = vpop.permute.xlu0 %1768
      %1770 = vrot.lane.b32.xlu0 %v794, 64
      %v1771 = vpop.permute.xlu0 %1770
      %1772 = vrot.lane.b32.xlu0 %v795, 64
      %v1773 = vpop.permute.xlu0 %1772
      %1774 = vrot.lane.b32.xlu0 %v796, 64
      %v1775 = vpop.permute.xlu0 %1774
      %1776 = vrot.lane.b32.xlu0 %v797, 64
      %v1777 = vpop.permute.xlu0 %1776
      %1778 = vrot.lane.b32.xlu0 %v798, 64
      %v1779 = vpop.permute.xlu0 %1778
      %1780 = vrot.lane.b32.xlu0 %v799, 64
      %v1781 = vpop.permute.xlu0 %1780
      %1782 = vrot.lane.b32.xlu0 %v800, 64
      %v1783 = vpop.permute.xlu0 %1782
      %1784 = vrot.lane.b32.xlu0 %v801, 64
      %v1785 = vpop.permute.xlu0 %1784
      %1786 = vrot.lane.b32.xlu0 %v802, 64
      %v1787 = vpop.permute.xlu0 %1786
      %1788 = vrot.lane.b32.xlu0 %v803, 64
      %v1789 = vpop.permute.xlu0 %1788
      %1790 = vrot.lane.b32.xlu0 %v804, 64
      %v1791 = vpop.permute.xlu0 %1790
      %1792 = vrot.lane.b32.xlu0 %v805, 64
      %v1793 = vpop.permute.xlu0 %1792
      %1794 = vrot.lane.b32.xlu0 %v806, 64
      %v1795 = vpop.permute.xlu0 %1794
      %1796 = vrot.lane.b32.xlu0 %v807, 64
      %v1797 = vpop.permute.xlu0 %1796
      %1798 = vrot.lane.b32.xlu0 %v808, 64
      %v1799 = vpop.permute.xlu0 %1798
      %1800 = vrot.lane.b32.xlu0 %v809, 64
      %v1801 = vpop.permute.xlu0 %1800
      %v1834 = vsel %vm432, %v521, %v843
      %v1835 = vsel %vm432, %v522, %v845
      %v1836 = vsel %vm432, %v523, %v847
      %v1837 = vsel %vm432, %v524, %v849
      %v1838 = vsel %vm432, %v525, %v851
      %v1839 = vsel %vm432, %v526, %v853
      %v1840 = vsel %vm432, %v527, %v855
      %v1841 = vsel %vm432, %v528, %v857
      %v1842 = vsel %vm432, %v529, %v859
      %v1843 = vsel %vm432, %v530, %v861
      %v1844 = vsel %vm432, %v531, %v863
      %v1845 = vsel %vm432, %v532, %v865
      %v1846 = vsel %vm432, %v533, %v867
      %v1847 = vsel %vm432, %v534, %v869
      %v1848 = vsel %vm432, %v535, %v871
      %v1849 = vsel %vm432, %v536, %v873
      %v1850 = vsel %vm432, %v537, %v875
      %v1851 = vsel %vm432, %v538, %v877
      %v1852 = vsel %vm432, %v539, %v879
      %v1853 = vsel %vm432, %v540, %v881
      %v1854 = vsel %vm432, %v541, %v883
      %v1855 = vsel %vm432, %v542, %v885
      %v1856 = vsel %vm432, %v543, %v887
      %v1857 = vsel %vm432, %v544, %v889
      %v1858 = vsel %vm432, %v545, %v891
      %v1859 = vsel %vm432, %v546, %v893
      %v1860 = vsel %vm432, %v547, %v895
      %v1861 = vsel %vm432, %v548, %v897
      %v1862 = vsel %vm432, %v549, %v899
      %v1863 = vsel %vm432, %v550, %v901
      %v1864 = vsel %vm432, %v551, %v903
      %v1865 = vsel %vm432, %v552, %v905
      %vm1866 = vcmask 130048
      %v1867 = vsel %vm1866, %v1834, %v971
      %v1868 = vsel %vm1866, %v1835, %v973
      %v1869 = vsel %vm1866, %v1836, %v975
      %v1870 = vsel %vm1866, %v1837, %v977
      %v1871 = vsel %vm1866, %v1838, %v979
      %v1872 = vsel %vm1866, %v1839, %v981
      %v1873 = vsel %vm1866, %v1840, %v983
      %v1874 = vsel %vm1866, %v1841, %v985
      %v1875 = vsel %vm1866, %v1842, %v987
      %v1876 = vsel %vm1866, %v1843, %v989
      %v1877 = vsel %vm1866, %v1844, %v991
      %v1878 = vsel %vm1866, %v1845, %v993
      %v1879 = vsel %vm1866, %v1846, %v995
      %v1880 = vsel %vm1866, %v1847, %v997
      %v1881 = vsel %vm1866, %v1848, %v999
      %v1882 = vsel %vm1866, %v1849, %v1001
      %v1883 = vsel %vm1866, %v1850, %v1003
      %v1884 = vsel %vm1866, %v1851, %v1005
      %v1885 = vsel %vm1866, %v1852, %v1007
      %v1886 = vsel %vm1866, %v1853, %v1009
      %v1887 = vsel %vm1866, %v1854, %v1011
      %v1888 = vsel %vm1866, %v1855, %v1013
      %v1889 = vsel %vm1866, %v1856, %v1015
      %v1890 = vsel %vm1866, %v1857, %v1017
      %v1891 = vsel %vm1866, %v1858, %v1019
      %v1892 = vsel %vm1866, %v1859, %v1021
      %v1893 = vsel %vm1866, %v1860, %v1023
      %v1894 = vsel %vm1866, %v1861, %v1025
      %v1895 = vsel %vm1866, %v1862, %v1027
      %v1896 = vsel %vm1866, %v1863, %v1029
      %v1897 = vsel %vm1866, %v1864, %v1031
      %v1898 = vsel %vm1866, %v1865, %v1033
      %vm1899 = vcmask 195584
      %v1900 = vsel %vm1899, %v1867, %v1099
      %v1901 = vsel %vm1899, %v1868, %v1101
      %v1902 = vsel %vm1899, %v1869, %v1103
      %v1903 = vsel %vm1899, %v1870, %v1105
      %v1904 = vsel %vm1899, %v1871, %v1107
      %v1905 = vsel %vm1899, %v1872, %v1109
      %v1906 = vsel %vm1899, %v1873, %v1111
      %v1907 = vsel %vm1899, %v1874, %v1113
      %v1908 = vsel %vm1899, %v1875, %v1115
      %v1909 = vsel %vm1899, %v1876, %v1117
      %v1910 = vsel %vm1899, %v1877, %v1119
      %v1911 = vsel %vm1899, %v1878, %v1121
      %v1912 = vsel %vm1899, %v1879, %v1123
      %v1913 = vsel %vm1899, %v1880, %v1125
      %v1914 = vsel %vm1899, %v1881, %v1127
      %v1915 = vsel %vm1899, %v1882, %v1129
      %v1916 = vsel %vm1899, %v1883, %v1131
      %v1917 = vsel %vm1899, %v1884, %v1133
      %v1918 = vsel %vm1899, %v1885, %v1135
      %v1919 = vsel %vm1899, %v1886, %v1137
      %v1920 = vsel %vm1899, %v1887, %v1139
      %v1921 = vsel %vm1899, %v1888, %v1141
      %v1922 = vsel %vm1899, %v1889, %v1143
      %v1923 = vsel %vm1899, %v1890, %v1145
      %v1924 = vsel %vm1899, %v1891, %v1147
      %v1925 = vsel %vm1899, %v1892, %v1149
      %v1926 = vsel %vm1899, %v1893, %v1151
      %v1927 = vsel %vm1899, %v1894, %v1153
      %v1928 = vsel %vm1899, %v1895, %v1155
      %v1929 = vsel %vm1899, %v1896, %v1157
      %v1930 = vsel %vm1899, %v1897, %v1159
      %v1931 = vsel %vm1899, %v1898, %v1161
      %vm1932 = vcmask 261120
      %v1933 = vsel %vm1932, %v1900, %v1227
      %v1934 = vsel %vm1932, %v1901, %v1229
      %v1935 = vsel %vm1932, %v1902, %v1231
      %v1936 = vsel %vm1932, %v1903, %v1233
      %v1937 = vsel %vm1932, %v1904, %v1235
      %v1938 = vsel %vm1932, %v1905, %v1237
      %v1939 = vsel %vm1932, %v1906, %v1239
      %v1940 = vsel %vm1932, %v1907, %v1241
      %v1941 = vsel %vm1932, %v1908, %v1243
      %v1942 = vsel %vm1932, %v1909, %v1245
      %v1943 = vsel %vm1932, %v1910, %v1247
      %v1944 = vsel %vm1932, %v1911, %v1249
      %v1945 = vsel %vm1932, %v1912, %v1251
      %v1946 = vsel %vm1932, %v1913, %v1253
      %v1947 = vsel %vm1932, %v1914, %v1255
      %v1948 = vsel %vm1932, %v1915, %v1257
      %v1949 = vsel %vm1932, %v1916, %v1259
      %v1950 = vsel %vm1932, %v1917, %v1261
      %v1951 = vsel %vm1932, %v1918, %v1263
      %v1952 = vsel %vm1932, %v1919, %v1265
      %v1953 = vsel %vm1932, %v1920, %v1267
      %v1954 = vsel %vm1932, %v1921, %v1269
      %v1955 = vsel %vm1932, %v1922, %v1271
      %v1956 = vsel %vm1932, %v1923, %v1273
      %v1957 = vsel %vm1932, %v1924, %v1275
      %v1958 = vsel %vm1932, %v1925, %v1277
      %v1959 = vsel %vm1932, %v1926, %v1279
      %v1960 = vsel %vm1932, %v1927, %v1281
      %v1961 = vsel %vm1932, %v1928, %v1283
      %v1962 = vsel %vm1932, %v1929, %v1285
      %v1963 = vsel %vm1932, %v1930, %v1287
      %v1964 = vsel %vm1932, %v1931, %v1289
      %vm1965 = vcmask 326656
      %v1966 = vsel %vm1965, %v1933, %v1355
      %v1967 = vsel %vm1965, %v1934, %v1357
      %v1968 = vsel %vm1965, %v1935, %v1359
      %v1969 = vsel %vm1965, %v1936, %v1361
      %v1970 = vsel %vm1965, %v1937, %v1363
      %v1971 = vsel %vm1965, %v1938, %v1365
      %v1972 = vsel %vm1965, %v1939, %v1367
      %v1973 = vsel %vm1965, %v1940, %v1369
      %v1974 = vsel %vm1965, %v1941, %v1371
      %v1975 = vsel %vm1965, %v1942, %v1373
      %v1976 = vsel %vm1965, %v1943, %v1375
      %v1977 = vsel %vm1965, %v1944, %v1377
      %v1978 = vsel %vm1965, %v1945, %v1379
      %v1979 = vsel %vm1965, %v1946, %v1381
      %v1980 = vsel %vm1965, %v1947, %v1383
      %v1981 = vsel %vm1965, %v1948, %v1385
      %v1982 = vsel %vm1965, %v1949, %v1387
      %v1983 = vsel %vm1965, %v1950, %v1389
      %v1984 = vsel %vm1965, %v1951, %v1391
      %v1985 = vsel %vm1965, %v1952, %v1393
      %v1986 = vsel %vm1965, %v1953, %v1395
      %v1987 = vsel %vm1965, %v1954, %v1397
      %v1988 = vsel %vm1965, %v1955, %v1399
      %v1989 = vsel %vm1965, %v1956, %v1401
      %v1990 = vsel %vm1965, %v1957, %v1403
      %v1991 = vsel %vm1965, %v1958, %v1405
      %v1992 = vsel %vm1965, %v1959, %v1407
      %v1993 = vsel %vm1965, %v1960, %v1409
      %v1994 = vsel %vm1965, %v1961, %v1411
      %v1995 = vsel %vm1965, %v1962, %v1413
      %v1996 = vsel %vm1965, %v1963, %v1415
      %v1997 = vsel %vm1965, %v1964, %v1417
      %vm1998 = vcmask 392192
      %v1999 = vsel %vm1998, %v1966, %v1483
      %v2000 = vsel %vm1998, %v1967, %v1485
      %v2001 = vsel %vm1998, %v1968, %v1487
      %v2002 = vsel %vm1998, %v1969, %v1489
      %v2003 = vsel %vm1998, %v1970, %v1491
      %v2004 = vsel %vm1998, %v1971, %v1493
      %v2005 = vsel %vm1998, %v1972, %v1495
      %v2006 = vsel %vm1998, %v1973, %v1497
      %v2007 = vsel %vm1998, %v1974, %v1499
      %v2008 = vsel %vm1998, %v1975, %v1501
      %v2009 = vsel %vm1998, %v1976, %v1503
      %v2010 = vsel %vm1998, %v1977, %v1505
      %v2011 = vsel %vm1998, %v1978, %v1507
      %v2012 = vsel %vm1998, %v1979, %v1509
      %v2013 = vsel %vm1998, %v1980, %v1511
      %v2014 = vsel %vm1998, %v1981, %v1513
      %v2015 = vsel %vm1998, %v1982, %v1515
      %v2016 = vsel %vm1998, %v1983, %v1517
      %v2017 = vsel %vm1998, %v1984, %v1519
      %v2018 = vsel %vm1998, %v1985, %v1521
      %v2019 = vsel %vm1998, %v1986, %v1523
      %v2020 = vsel %vm1998, %v1987, %v1525
      %v2021 = vsel %vm1998, %v1988, %v1527
      %v2022 = vsel %vm1998, %v1989, %v1529
      %v2023 = vsel %vm1998, %v1990, %v1531
      %v2024 = vsel %vm1998, %v1991, %v1533
      %v2025 = vsel %vm1998, %v1992, %v1535
      %v2026 = vsel %vm1998, %v1993, %v1537
      %v2027 = vsel %vm1998, %v1994, %v1539
      %v2028 = vsel %vm1998, %v1995, %v1541
      %v2029 = vsel %vm1998, %v1996, %v1543
      %v2030 = vsel %vm1998, %v1997, %v1545
      %vm2031 = vcmask 457728
      %v2032 = vsel %vm2031, %v1999, %v1611
      %v2033 = vsel %vm2031, %v2000, %v1613
      %v2034 = vsel %vm2031, %v2001, %v1615
      %v2035 = vsel %vm2031, %v2002, %v1617
      %v2036 = vsel %vm2031, %v2003, %v1619
      %v2037 = vsel %vm2031, %v2004, %v1621
      %v2038 = vsel %vm2031, %v2005, %v1623
      %v2039 = vsel %vm2031, %v2006, %v1625
      %v2040 = vsel %vm2031, %v2007, %v1627
      %v2041 = vsel %vm2031, %v2008, %v1629
      %v2042 = vsel %vm2031, %v2009, %v1631
      %v2043 = vsel %vm2031, %v2010, %v1633
      %v2044 = vsel %vm2031, %v2011, %v1635
      %v2045 = vsel %vm2031, %v2012, %v1637
      %v2046 = vsel %vm2031, %v2013, %v1639
      %v2047 = vsel %vm2031, %v2014, %v1641
      %v2048 = vsel %vm2031, %v2015, %v1643
      %v2049 = vsel %vm2031, %v2016, %v1645
      %v2050 = vsel %vm2031, %v2017, %v1647
      %v2051 = vsel %vm2031, %v2018, %v1649
      %v2052 = vsel %vm2031, %v2019, %v1651
      %v2053 = vsel %vm2031, %v2020, %v1653
      %v2054 = vsel %vm2031, %v2021, %v1655
      %v2055 = vsel %vm2031, %v2022, %v1657
      %v2056 = vsel %vm2031, %v2023, %v1659
      %v2057 = vsel %vm2031, %v2024, %v1661
      %v2058 = vsel %vm2031, %v2025, %v1663
      %v2059 = vsel %vm2031, %v2026, %v1665
      %v2060 = vsel %vm2031, %v2027, %v1667
      %v2061 = vsel %vm2031, %v2028, %v1669
      %v2062 = vsel %vm2031, %v2029, %v1671
      %v2063 = vsel %vm2031, %v2030, %v1673
      %vm2064 = vcmask 523264
      %v2065 = vsel %vm2064, %v2032, %v1739
      %v2066 = vsel %vm2064, %v2033, %v1741
      %v2067 = vsel %vm2064, %v2034, %v1743
      %v2068 = vsel %vm2064, %v2035, %v1745
      %v2069 = vsel %vm2064, %v2036, %v1747
      %v2070 = vsel %vm2064, %v2037, %v1749
      %v2071 = vsel %vm2064, %v2038, %v1751
      %v2072 = vsel %vm2064, %v2039, %v1753
      %v2073 = vsel %vm2064, %v2040, %v1755
      %v2074 = vsel %vm2064, %v2041, %v1757
      %v2075 = vsel %vm2064, %v2042, %v1759
      %v2076 = vsel %vm2064, %v2043, %v1761
      %v2077 = vsel %vm2064, %v2044, %v1763
      %v2078 = vsel %vm2064, %v2045, %v1765
      %v2079 = vsel %vm2064, %v2046, %v1767
      %v2080 = vsel %vm2064, %v2047, %v1769
      %v2081 = vsel %vm2064, %v2048, %v1771
      %v2082 = vsel %vm2064, %v2049, %v1773
      %v2083 = vsel %vm2064, %v2050, %v1775
      %v2084 = vsel %vm2064, %v2051, %v1777
      %v2085 = vsel %vm2064, %v2052, %v1779
      %v2086 = vsel %vm2064, %v2053, %v1781
      %v2087 = vsel %vm2064, %v2054, %v1783
      %v2088 = vsel %vm2064, %v2055, %v1785
      %v2089 = vsel %vm2064, %v2056, %v1787
      %v2090 = vsel %vm2064, %v2057, %v1789
      %v2091 = vsel %vm2064, %v2058, %v1791
      %v2092 = vsel %vm2064, %v2059, %v1793
      %v2093 = vsel %vm2064, %v2060, %v1795
      %v2094 = vsel %vm2064, %v2061, %v1797
      %v2095 = vsel %vm2064, %v2062, %v1799
      %v2096 = vsel %vm2064, %v2063, %v1801
      %v2097 = vld [vmem:[%s3] sm:$0xff]
      %v2098 = vld [vmem:[%s3 + $0x8] sm:$0xff]
      %v2099 = vld [vmem:[%s3 + $0x10] sm:$0xff]
      %v2100 = vld [vmem:[%s3 + $0x18] sm:$0xff]
      %v2101 = vld [vmem:[%s3 + $0x20] sm:$0xff]
      %v2102 = vld [vmem:[%s3 + $0x28] sm:$0xff]
      %v2103 = vld [vmem:[%s3 + $0x30] sm:$0xff]
      %v2104 = vld [vmem:[%s3 + $0x38] sm:$0xff]
      %v2105 = vld [vmem:[%s3 + $0x40] sm:$0xff]
      %v2106 = vld [vmem:[%s4] sm:$0x1]
      %v2108 = vperm.slane %v2106, 0
      %vm2110 = vcmask 588800
      %v2112 = vsel %vm2110, %v2065, 0
      %v2115 = vsel %vm2110, %v2066, 0
      %v2118 = vsel %vm2110, %v2067, 0
      %v2121 = vsel %vm2110, %v2068, 0
      %v2124 = vsel %vm2110, %v2069, 0
      %v2127 = vsel %vm2110, %v2070, 0
      %v2130 = vsel %vm2110, %v2071, 0
      %v2133 = vsel %vm2110, %v2072, 0
      %v2136 = vsel %vm2110, %v2073, 0
      %v2139 = vsel %vm2110, %v2074, 0
      %v2142 = vsel %vm2110, %v2075, 0
      %v2145 = vsel %vm2110, %v2076, 0
      %v2148 = vsel %vm2110, %v2077, 0
      %v2151 = vsel %vm2110, %v2078, 0
      %v2154 = vsel %vm2110, %v2079, 0
      %v2157 = vsel %vm2110, %v2080, 0
      %v2160 = vsel %vm2110, %v2081, 0
      %v2163 = vsel %vm2110, %v2082, 0
      %v2166 = vsel %vm2110, %v2083, 0
      %v2169 = vsel %vm2110, %v2084, 0
      %v2172 = vsel %vm2110, %v2085, 0
      %v2175 = vsel %vm2110, %v2086, 0
      %v2178 = vsel %vm2110, %v2087, 0
      %v2181 = vsel %vm2110, %v2088, 0
      %v2184 = vsel %vm2110, %v2089, 0
      %v2187 = vsel %vm2110, %v2090, 0
      %v2190 = vsel %vm2110, %v2091, 0
      %v2193 = vsel %vm2110, %v2092, 0
      %v2196 = vsel %vm2110, %v2093, 0
      %v2199 = vsel %vm2110, %v2094, 0
      %v2202 = vsel %vm2110, %v2095, 0
      %v2205 = vsel %vm2110, %v2096, 0
      %2207 = vmatpush.msra.mxu0 0.0
      %2208 = vmatpush.msra.mxu0 0.0
      %2209 = vmatpush.msra.mxu0 0.0
      %2210 = vmatpush.msra.mxu0 0.0
      %2211 = vmatpush.msra.mxu0 0.0
      %2212 = vmatpush.msra.mxu0 0.0
      %2213 = vmatpush.msra.mxu0 0.0
      %2214 = vmatpush.msra.mxu0 %v2105
      %2215 = vmatpush.msra.mxu0 %v2104
      %2216 = vmatpush.msra.mxu0 %v2103
      %2217 = vmatpush.msra.mxu0 %v2102
      %2218 = vmatpush.msra.mxu0 %v2101
      %2219 = vmatpush.msra.mxu0 %v2100
      %2220 = vmatpush.msra.mxu0 %v2099
      %2221 = vmatpush.msra.mxu0 %v2098
      %2222 = vmatpush.msra.mxu0 %v2097
      %2223 = vmatmul.f32.gmra.mxu0 %v2112
      %v2224 = vpop.f32.mrf.mxu0
      %v2225 = vadd.f32 %v2108, %v2224
      %2226 = vmatmul.f32.gmra.mxu0 %v2115
      %v2227 = vpop.f32.mrf.mxu0
      %v2228 = vadd.f32 %v2108, %v2227
      %2229 = vmatmul.f32.gmra.mxu0 %v2118
      %v2230 = vpop.f32.mrf.mxu0
      %v2231 = vadd.f32 %v2108, %v2230
      %2232 = vmatmul.f32.gmra.mxu0 %v2121
      %v2233 = vpop.f32.mrf.mxu0
      %v2234 = vadd.f32 %v2108, %v2233
      %2235 = vmatmul.f32.gmra.mxu0 %v2124
      %v2236 = vpop.f32.mrf.mxu0
      %v2237 = vadd.f32 %v2108, %v2236
      %2238 = vmatmul.f32.gmra.mxu0 %v2127
      %v2239 = vpop.f32.mrf.mxu0
      %v2240 = vadd.f32 %v2108, %v2239
      %2241 = vmatmul.f32.gmra.mxu0 %v2130
      %v2242 = vpop.f32.mrf.mxu0
      %v2243 = vadd.f32 %v2108, %v2242
      %2244 = vmatmul.f32.gmra.mxu0 %v2133
      %v2245 = vpop.f32.mrf.mxu0
      %v2246 = vadd.f32 %v2108, %v2245
      %2247 = vmatmul.f32.gmra.mxu0 %v2136
      %v2248 = vpop.f32.mrf.mxu0
      %v2249 = vadd.f32 %v2108, %v2248
      %2250 = vmatmul.f32.gmra.mxu0 %v2139
      %v2251 = vpop.f32.mrf.mxu0
      %v2252 = vadd.f32 %v2108, %v2251
      %2253 = vmatmul.f32.gmra.mxu0 %v2142
      %v2254 = vpop.f32.mrf.mxu0
      %v2255 = vadd.f32 %v2108, %v2254
      %2256 = vmatmul.f32.gmra.mxu0 %v2145
      %v2257 = vpop.f32.mrf.mxu0
      %v2258 = vadd.f32 %v2108, %v2257
      %2259 = vmatmul.f32.gmra.mxu0 %v2148
      %v2260 = vpop.f32.mrf.mxu0
      %v2261 = vadd.f32 %v2108, %v2260
      %2262 = vmatmul.f32.gmra.mxu0 %v2151
      %v2263 = vpop.f32.mrf.mxu0
      %v2264 = vadd.f32 %v2108, %v2263
      %2265 = vmatmul.f32.gmra.mxu0 %v2154
      %v2266 = vpop.f32.mrf.mxu0
      %v2267 = vadd.f32 %v2108, %v2266
      %2268 = vmatmul.f32.gmra.mxu0 %v2157
      %v2269 = vpop.f32.mrf.mxu0
      %v2270 = vadd.f32 %v2108, %v2269
      %2271 = vmatmul.f32.gmra.mxu0 %v2160
      %v2272 = vpop.f32.mrf.mxu0
      %v2273 = vadd.f32 %v2108, %v2272
      %2274 = vmatmul.f32.gmra.mxu0 %v2163
      %v2275 = vpop.f32.mrf.mxu0
      %v2276 = vadd.f32 %v2108, %v2275
      %2277 = vmatmul.f32.gmra.mxu0 %v2166
      %v2278 = vpop.f32.mrf.mxu0
      %v2279 = vadd.f32 %v2108, %v2278
      %2280 = vmatmul.f32.gmra.mxu0 %v2169
      %v2281 = vpop.f32.mrf.mxu0
      %v2282 = vadd.f32 %v2108, %v2281
      %2283 = vmatmul.f32.gmra.mxu0 %v2172
      %v2284 = vpop.f32.mrf.mxu0
      %v2285 = vadd.f32 %v2108, %v2284
      %2286 = vmatmul.f32.gmra.mxu0 %v2175
      %v2287 = vpop.f32.mrf.mxu0
      %v2288 = vadd.f32 %v2108, %v2287
      %2289 = vmatmul.f32.gmra.mxu0 %v2178
      %v2290 = vpop.f32.mrf.mxu0
      %v2291 = vadd.f32 %v2108, %v2290
      %2292 = vmatmul.f32.gmra.mxu0 %v2181
      %v2293 = vpop.f32.mrf.mxu0
      %v2294 = vadd.f32 %v2108, %v2293
      %2295 = vmatmul.f32.gmra.mxu0 %v2184
      %v2296 = vpop.f32.mrf.mxu0
      %v2297 = vadd.f32 %v2108, %v2296
      %2298 = vmatmul.f32.gmra.mxu0 %v2187
      %v2299 = vpop.f32.mrf.mxu0
      %v2300 = vadd.f32 %v2108, %v2299
      %2301 = vmatmul.f32.gmra.mxu0 %v2190
      %v2302 = vpop.f32.mrf.mxu0
      %v2303 = vadd.f32 %v2108, %v2302
      %2304 = vmatmul.f32.gmra.mxu0 %v2193
      %v2305 = vpop.f32.mrf.mxu0
      %v2306 = vadd.f32 %v2108, %v2305
      %2307 = vmatmul.f32.gmra.mxu0 %v2196
      %v2308 = vpop.f32.mrf.mxu0
      %v2309 = vadd.f32 %v2108, %v2308
      %2310 = vmatmul.f32.gmra.mxu0 %v2199
      %v2311 = vpop.f32.mrf.mxu0
      %v2312 = vadd.f32 %v2108, %v2311
      %2313 = vmatmul.f32.gmra.mxu0 %v2202
      %v2314 = vpop.f32.mrf.mxu0
      %v2315 = vadd.f32 %v2108, %v2314
      %2316 = vmatmul.f32.gmra.mxu0 %v2205
      %v2317 = vpop.f32.mrf.mxu0
      %v2318 = vadd.f32 %v2108, %v2317
      %2319 = vdwg.mxu0
      %2320 = vst.msk [vmem:[%s289] sm:$0xff] %vm432, %v2225
      %2321 = vst.msk [vmem:[%s289 + $0x8] sm:$0xff] %vm432, %v2228
      %2322 = vst.msk [vmem:[%s289 + $0x10] sm:$0xff] %vm432, %v2231
      %2323 = vst.msk [vmem:[%s289 + $0x18] sm:$0xff] %vm432, %v2234
      %2324 = vst.msk [vmem:[%s289 + $0x20] sm:$0xff] %vm432, %v2237
      %2325 = vst.msk [vmem:[%s289 + $0x28] sm:$0xff] %vm432, %v2240
      %2326 = vst.msk [vmem:[%s289 + $0x30] sm:$0xff] %vm432, %v2243
      %2327 = vst.msk [vmem:[%s289 + $0x38] sm:$0xff] %vm432, %v2246
      %2328 = vst.msk [vmem:[%s289 + $0x40] sm:$0xff] %vm432, %v2249
      %2329 = vst.msk [vmem:[%s289 + $0x48] sm:$0xff] %vm432, %v2252
      %2330 = vst.msk [vmem:[%s289 + $0x50] sm:$0xff] %vm432, %v2255
      %2331 = vst.msk [vmem:[%s289 + $0x58] sm:$0xff] %vm432, %v2258
      %2332 = vst.msk [vmem:[%s289 + $0x60] sm:$0xff] %vm432, %v2261
      %2333 = vst.msk [vmem:[%s289 + $0x68] sm:$0xff] %vm432, %v2264
      %2334 = vst.msk [vmem:[%s289 + $0x70] sm:$0xff] %vm432, %v2267
      %2335 = vst.msk [vmem:[%s289 + $0x78] sm:$0xff] %vm432, %v2270
      %2336 = vst.msk [vmem:[%s289 + $0x80] sm:$0xff] %vm432, %v2273
      %2337 = vst.msk [vmem:[%s289 + $0x88] sm:$0xff] %vm432, %v2276
      %2338 = vst.msk [vmem:[%s289 + $0x90] sm:$0xff] %vm432, %v2279
      %2339 = vst.msk [vmem:[%s289 + $0x98] sm:$0xff] %vm432, %v2282
      %2340 = vst.msk [vmem:[%s289 + $0xa0] sm:$0xff] %vm432, %v2285
      %2341 = vst.msk [vmem:[%s289 + $0xa8] sm:$0xff] %vm432, %v2288
      %2342 = vst.msk [vmem:[%s289 + $0xb0] sm:$0xff] %vm432, %v2291
      %2343 = vst.msk [vmem:[%s289 + $0xb8] sm:$0xff] %vm432, %v2294
      %2344 = vst.msk [vmem:[%s289 + $0xc0] sm:$0xff] %vm432, %v2297
      %2345 = vst.msk [vmem:[%s289 + $0xc8] sm:$0xff] %vm432, %v2300
      %2346 = vst.msk [vmem:[%s289 + $0xd0] sm:$0xff] %vm432, %v2303
      %2347 = vst.msk [vmem:[%s289 + $0xd8] sm:$0xff] %vm432, %v2306
      %2348 = vst.msk [vmem:[%s289 + $0xe0] sm:$0xff] %vm432, %v2309
      %2349 = vst.msk [vmem:[%s289 + $0xe8] sm:$0xff] %vm432, %v2312
      %2350 = vst.msk [vmem:[%s289 + $0xf0] sm:$0xff] %vm432, %v2315
      %2351 = vst.msk [vmem:[%s289 + $0xf8] sm:$0xff] %vm432, %v2318
      %v2352 = vsel %vm432, %v2225, 0.0
      %v2353 = vsel %vm432, %v2228, 0.0
      %v2354 = vadd.f32 %v2352, %v2353
      %v2355 = vsel %vm432, %v2231, 0.0
      %v2356 = vadd.f32 %v2354, %v2355
      %v2357 = vsel %vm432, %v2234, 0.0
      %v2358 = vadd.f32 %v2356, %v2357
      %v2359 = vsel %vm432, %v2237, 0.0
      %v2360 = vadd.f32 %v2358, %v2359
      %v2361 = vsel %vm432, %v2240, 0.0
      %v2362 = vadd.f32 %v2360, %v2361
      %v2363 = vsel %vm432, %v2243, 0.0
      %v2364 = vadd.f32 %v2362, %v2363
      %v2365 = vsel %vm432, %v2246, 0.0
      %v2366 = vadd.f32 %v2364, %v2365
      %v2367 = vsel %vm432, %v2249, 0.0
      %v2368 = vadd.f32 %v2366, %v2367
      %v2369 = vsel %vm432, %v2252, 0.0
      %v2370 = vadd.f32 %v2368, %v2369
      %v2371 = vsel %vm432, %v2255, 0.0
      %v2372 = vadd.f32 %v2370, %v2371
      %v2373 = vsel %vm432, %v2258, 0.0
      %v2374 = vadd.f32 %v2372, %v2373
      %v2375 = vsel %vm432, %v2261, 0.0
      %v2376 = vadd.f32 %v2374, %v2375
      %v2377 = vsel %vm432, %v2264, 0.0
      %v2378 = vadd.f32 %v2376, %v2377
      %v2379 = vsel %vm432, %v2267, 0.0
      %v2380 = vadd.f32 %v2378, %v2379
      %v2381 = vsel %vm432, %v2270, 0.0
      %v2382 = vadd.f32 %v2380, %v2381
      %v2383 = vsel %vm432, %v2273, 0.0
      %v2384 = vadd.f32 %v2382, %v2383
      %v2385 = vsel %vm432, %v2276, 0.0
      %v2386 = vadd.f32 %v2384, %v2385
      %v2387 = vsel %vm432, %v2279, 0.0
      %v2388 = vadd.f32 %v2386, %v2387
      %v2389 = vsel %vm432, %v2282, 0.0
      %v2390 = vadd.f32 %v2388, %v2389
      %v2391 = vsel %vm432, %v2285, 0.0
      %v2392 = vadd.f32 %v2390, %v2391
      %v2393 = vsel %vm432, %v2288, 0.0
      %v2394 = vadd.f32 %v2392, %v2393
      %v2395 = vsel %vm432, %v2291, 0.0
      %v2396 = vadd.f32 %v2394, %v2395
      %v2397 = vsel %vm432, %v2294, 0.0
      %v2398 = vadd.f32 %v2396, %v2397
      %v2399 = vsel %vm432, %v2297, 0.0
      %v2400 = vadd.f32 %v2398, %v2399
      %v2401 = vsel %vm432, %v2300, 0.0
      %v2402 = vadd.f32 %v2400, %v2401
      %v2403 = vsel %vm432, %v2303, 0.0
      %v2404 = vadd.f32 %v2402, %v2403
      %v2405 = vsel %vm432, %v2306, 0.0
      %v2406 = vadd.f32 %v2404, %v2405
      %v2407 = vsel %vm432, %v2309, 0.0
      %v2408 = vadd.f32 %v2406, %v2407
      %v2409 = vsel %vm432, %v2312, 0.0
      %v2410 = vadd.f32 %v2408, %v2409
      %v2411 = vsel %vm432, %v2315, 0.0
      %v2412 = vadd.f32 %v2410, %v2411
      %v2413 = vsel %vm432, %v2318, 0.0
      %v2414 = vadd.f32 %v2412, %v2413
      %v2415 = vrot.slane %v2414, 4
      %v2416 = vadd.f32 %v2414, %v2415
      %v2417 = vrot.slane %v2416, 2
      %v2418 = vadd.f32 %v2416, %v2417
      %v2419 = vrot.slane %v2418, 1
      %v2420 = vadd.f32 %v2418, %v2419
      %vm2421 = vcmask 57344
      %2422 = vst.msk [vmem:[%s292] sm:$0x1] %vm2421, %v2420
      %v2423 = vmul.f32 %v2225, %v2225
      %v2424 = vmul.f32 %v2228, %v2228
      %v2425 = vmul.f32 %v2231, %v2231
      %v2426 = vmul.f32 %v2234, %v2234
      %v2427 = vmul.f32 %v2237, %v2237
      %v2428 = vmul.f32 %v2240, %v2240
      %v2429 = vmul.f32 %v2243, %v2243
      %v2430 = vmul.f32 %v2246, %v2246
      %v2431 = vmul.f32 %v2249, %v2249
      %v2432 = vmul.f32 %v2252, %v2252
      %v2433 = vmul.f32 %v2255, %v2255
      %v2434 = vmul.f32 %v2258, %v2258
      %v2435 = vmul.f32 %v2261, %v2261
      %v2436 = vmul.f32 %v2264, %v2264
      %v2437 = vmul.f32 %v2267, %v2267
      %v2438 = vmul.f32 %v2270, %v2270
      %v2439 = vmul.f32 %v2273, %v2273
      %v2440 = vmul.f32 %v2276, %v2276
      %v2441 = vmul.f32 %v2279, %v2279
      %v2442 = vmul.f32 %v2282, %v2282
      %v2443 = vmul.f32 %v2285, %v2285
      %v2444 = vmul.f32 %v2288, %v2288
      %v2445 = vmul.f32 %v2291, %v2291
      %v2446 = vmul.f32 %v2294, %v2294
      %v2447 = vmul.f32 %v2297, %v2297
      %v2448 = vmul.f32 %v2300, %v2300
      %v2449 = vmul.f32 %v2303, %v2303
      %v2450 = vmul.f32 %v2306, %v2306
      %v2451 = vmul.f32 %v2309, %v2309
      %v2452 = vmul.f32 %v2312, %v2312
      %v2453 = vmul.f32 %v2315, %v2315
      %v2454 = vmul.f32 %v2318, %v2318
      %v2455 = vsel %vm432, %v2423, 0.0
      %v2456 = vsel %vm432, %v2424, 0.0
      %v2457 = vadd.f32 %v2455, %v2456
      %v2458 = vsel %vm432, %v2425, 0.0
      %v2459 = vadd.f32 %v2457, %v2458
      %v2460 = vsel %vm432, %v2426, 0.0
      %v2461 = vadd.f32 %v2459, %v2460
      %v2462 = vsel %vm432, %v2427, 0.0
      %v2463 = vadd.f32 %v2461, %v2462
      %v2464 = vsel %vm432, %v2428, 0.0
      %v2465 = vadd.f32 %v2463, %v2464
      %v2466 = vsel %vm432, %v2429, 0.0
      %v2467 = vadd.f32 %v2465, %v2466
      %v2468 = vsel %vm432, %v2430, 0.0
      %v2469 = vadd.f32 %v2467, %v2468
      %v2470 = vsel %vm432, %v2431, 0.0
      %v2471 = vadd.f32 %v2469, %v2470
      %v2472 = vsel %vm432, %v2432, 0.0
      %v2473 = vadd.f32 %v2471, %v2472
      %v2474 = vsel %vm432, %v2433, 0.0
      %v2475 = vadd.f32 %v2473, %v2474
      %v2476 = vsel %vm432, %v2434, 0.0
      %v2477 = vadd.f32 %v2475, %v2476
      %v2478 = vsel %vm432, %v2435, 0.0
      %v2479 = vadd.f32 %v2477, %v2478
      %v2480 = vsel %vm432, %v2436, 0.0
      %v2481 = vadd.f32 %v2479, %v2480
      %v2482 = vsel %vm432, %v2437, 0.0
      %v2483 = vadd.f32 %v2481, %v2482
      %v2484 = vsel %vm432, %v2438, 0.0
      %v2485 = vadd.f32 %v2483, %v2484
      %v2486 = vsel %vm432, %v2439, 0.0
      %v2487 = vadd.f32 %v2485, %v2486
      %v2488 = vsel %vm432, %v2440, 0.0
      %v2489 = vadd.f32 %v2487, %v2488
      %v2490 = vsel %vm432, %v2441, 0.0
      %v2491 = vadd.f32 %v2489, %v2490
      %v2492 = vsel %vm432, %v2442, 0.0
      %v2493 = vadd.f32 %v2491, %v2492
      %v2494 = vsel %vm432, %v2443, 0.0
      %v2495 = vadd.f32 %v2493, %v2494
      %v2496 = vsel %vm432, %v2444, 0.0
      %v2497 = vadd.f32 %v2495, %v2496
      %v2498 = vsel %vm432, %v2445, 0.0
      %v2499 = vadd.f32 %v2497, %v2498
      %v2500 = vsel %vm432, %v2446, 0.0
      %v2501 = vadd.f32 %v2499, %v2500
      %v2502 = vsel %vm432, %v2447, 0.0
      %v2503 = vadd.f32 %v2501, %v2502
      %v2504 = vsel %vm432, %v2448, 0.0
      %v2505 = vadd.f32 %v2503, %v2504
      %v2506 = vsel %vm432, %v2449, 0.0
      %v2507 = vadd.f32 %v2505, %v2506
      %v2508 = vsel %vm432, %v2450, 0.0
      %v2509 = vadd.f32 %v2507, %v2508
      %v2510 = vsel %vm432, %v2451, 0.0
      %v2511 = vadd.f32 %v2509, %v2510
      %v2512 = vsel %vm432, %v2452, 0.0
      %v2513 = vadd.f32 %v2511, %v2512
      %v2514 = vsel %vm432, %v2453, 0.0
      %v2515 = vadd.f32 %v2513, %v2514
      %v2516 = vsel %vm432, %v2454, 0.0
      %v2517 = vadd.f32 %v2515, %v2516
      %v2518 = vrot.slane %v2517, 4
      %v2519 = vadd.f32 %v2517, %v2518
      %v2520 = vrot.slane %v2519, 2
      %v2521 = vadd.f32 %v2519, %v2520
      %v2522 = vrot.slane %v2521, 1
      %v2523 = vadd.f32 %v2521, %v2522
      %2524 = vst.msk [vmem:[%s295] sm:$0x1] %vm2421, %v2523
      %p2525 = scmp.lt.s32.totalorder %s19, 1
      %s2526 = scalar_select %p2525, %s19, 1
      %s2527 = smul.addr %s2526, 32
      %s2528 = smul.addr %s2527, 8
      %s2529 = scalar_lea.vmem %s5, %s2528
      %p2530 = scmp.lt.s32.totalorder %s19, 1
      %s2531 = scalar_select %p2530, %s19, 1
      %s2532 = scalar_lea.vmem %s6, %s2531
      %p2533 = scmp.lt.s32.totalorder %s19, 1
      %s2534 = scalar_select %p2533, %s19, 1
      %s2535 = scalar_lea.vmem %s7, %s2534
      // Predicated region
      $region41: #{upsampling_block_forward.6} parent=39 // pred_check
        %p2536 = pneg %p147
      $region42: #{upsampling_block_forward.6} parent=39 // pred_check_branch
        %2538 = sbr.rel (%p2536) target = $region44
      $region43: #{upsampling_block_forward.6} parent=39 // pred_region
        _
      $region44: #{upsampling_block_forward.6} parent=39 // pred_fallthru
        _
      // Predicated region
      $region45: #{upsampling_block_forward.6} parent=39 // pred_check
        %p2539 = pneg %p173
      $region46: #{upsampling_block_forward.6} parent=39 // pred_check_branch
        %2541 = sbr.rel (%p2539) target = $region48
      $region47: #{upsampling_block_forward.6} parent=39 // pred_region
        _
      $region48: #{upsampling_block_forward.6} parent=39 // pred_fallthru
        _
      // Predicated region
      $region49: #{upsampling_block_forward.6} parent=39 // pred_check
        %p2542 = pneg %p199
      $region50: #{upsampling_block_forward.6} parent=39 // pred_check_branch
        %2544 = sbr.rel (%p2542) target = $region52
      $region51: #{upsampling_block_forward.6} parent=39 // pred_region
        _
      $region52: #{upsampling_block_forward.6} parent=39 // pred_fallthru
        _
    $region40: #{upsampling_block_forward.6} parent=5 // pred_fallthru
      _
    %p2545 = scmp.le.s32.totalorder 2, %s14
    // Predicated region
    $region53: #{upsampling_block_forward.6} parent=5 // pred_check
      %p2546 = pneg %p2545
    $region54: #{upsampling_block_forward.6} parent=5 // pred_check_branch
      %2548 = sbr.rel (%p2546) target = $region56
    $region55: #{upsampling_block_forward.6} parent=5 // pred_region
      %s2549 = ssub.s32 %s14, 2
      // Predicated region
      $region57: #{upsampling_block_forward.6} parent=55 // pred_check
        %p2550 = pneg %p153
      $region58: #{upsampling_block_forward.6} parent=55 // pred_check_branch
        %2552 = sbr.rel (%p2550) target = $region60
      $region59: #{upsampling_block_forward.6} parent=55 // pred_region
        %p2553 = scmp.lt.s32.totalorder %s20, 1
        %s2554 = scalar_select %p2553, %s20, 1
        %s2555 = smul.addr %s2554, 32
        %s2556 = smul.addr %s2555, 8
        %s2557 = scalar_lea.vmem %s5, %s2556
      $region60: #{upsampling_block_forward.6} parent=55 // pred_fallthru
        _
      // Predicated region
      $region61: #{upsampling_block_forward.6} parent=55 // pred_check
        %p2558 = pneg %p179
      $region62: #{upsampling_block_forward.6} parent=55 // pred_check_branch
        %2560 = sbr.rel (%p2558) target = $region64
      $region63: #{upsampling_block_forward.6} parent=55 // pred_region
        %p2561 = scmp.lt.s32.totalorder %s20, 1
        %s2562 = scalar_select %p2561, %s20, 1
        %s2563 = scalar_lea.vmem %s6, %s2562
      $region64: #{upsampling_block_forward.6} parent=55 // pred_fallthru
        _
      // Predicated region
      $region65: #{upsampling_block_forward.6} parent=55 // pred_check
        %p2564 = pneg %p205
      $region66: #{upsampling_block_forward.6} parent=55 // pred_check_branch
        %2566 = sbr.rel (%p2564) target = $region68
      $region67: #{upsampling_block_forward.6} parent=55 // pred_region
        %p2567 = scmp.lt.s32.totalorder %s20, 1
        %s2568 = scalar_select %p2567, %s20, 1
        %s2569 = scalar_lea.vmem %s7, %s2568
      $region68: #{upsampling_block_forward.6} parent=55 // pred_fallthru
        _
    $region56: #{upsampling_block_forward.6} parent=5 // pred_fallthru
      _
  $region6: #{upsampling_block_forward.6} parent=0 // loop_footer
    %s18 = sadd.s32 1, %s14
  $region7: #{upsampling_block_forward.6} parent=0 // loop_footer_branch
    %13 = sbr.rel target = $region3
  $region8: #{upsampling_block_forward.6} parent=0 // loop_exit
    _

// kernel: upsampling_block_forward.5
$region0: #{upsampling_block_forward.5}
  #allocation0 [shape = 'u32[]', space=smem, size = 0x4, offset = 0x4, fixed_abs, tag = 'smem constant byte address 0x4 - core index']
  #allocation1 [shape = 'u32[72,128]{1,0:T(1,128)}', space=vmem, size = 0x9000, scoped, tag = 'internal scratch']
  #allocation2 [shape = 'f32[18,18,8]{2,1,0:T(8,128)}', space=vmem, size = 0x36000, scoped, tag = 'scratch operand']
  %s0 = inlined_call_operand.vmem [shape: f32[2,16,16,8], index: 0, kind: input, shape index: {}]
  %s1 = inlined_call_operand.vmem [shape: f32[1,8], index: 1, kind: input, shape index: {}, may-alias: {1,2}]
  %s2 = inlined_call_operand.vmem [shape: f32[1,8], index: 2, kind: input, shape index: {}, may-alias: {1,2}]
  %s3 = inlined_call_operand.vmem [shape: f32[72,8], index: 3, kind: input, shape index: {}]
  %s4 = inlined_call_operand.vmem [shape: f32[1,8], index: 4, kind: input, shape index: {}]
  %s5 = inlined_call_operand.vmem [shape: f32[2,16,16,8], index: 5, kind: output, shape index: {0}]
  %s6 = inlined_call_operand.vmem [shape: f32[2,1,8], index: 6, kind: output, shape index: {1}]
  %s7 = inlined_call_operand.vmem [shape: f32[2,1,8], index: 7, kind: output, shape index: {2}]
  %8 = xla_tuple %s5, %s6, %s7
  %s9 = sld [smem:[#allocation0]]
  $region69: #{upsampling_block_forward.5} parent=0
    _
  %s11 = ssub.s32 1, %s9
  %s12 = scalar_select 0, %s11, %s9
  loop: start=0, step=1, limit=4
  $region2: #{upsampling_block_forward.5} parent=0 // loop_pre_header
    _
  $region3: #{upsampling_block_forward.5} parent=0 // loop_header
    %s14 = sphi 0, %s18
    %p15 = scmp.ge.s32.totalorder %s14, 4
    %s24 = sphi 0, %s26
    %s27 = sphi 0, %s24
    %s28 = sphi 0, %s27
    %s44 = sphi 0, %s28
    %s48 = sphi 0, %s48
    %s50 = sphi 0, %s48
    %s51 = sphi 0, %s50
    %s65 = sphi 0, %s51
    %s69 = sphi 0, %s69
    %s71 = sphi 0, %s69
    %s72 = sphi 0, %s71
    %s86 = sphi 0, %s72
    %s90 = sphi 0, %s90
    %s92 = sphi 0, %s90
    %s93 = sphi 0, %s92
    %s107 = sphi 0, %s93
    %s111 = sphi 0, %s111
    %s113 = sphi 0, %s111
    %s114 = sphi 0, %s113
    %s128 = sphi 0, %s114
    %s134 = sphi 0, %s136
    %s137 = sphi 0, %s134
    %s138 = sphi 0, %s137
    %s154 = sphi 0, %s138
    %s160 = sphi 0, %s162
    %s163 = sphi 0, %s160
    %s164 = sphi 0, %s163
    %s180 = sphi 0, %s164
    %s186 = sphi 0, %s188
    %s189 = sphi 0, %s186
    %s190 = sphi 0, %s189
    %s206 = sphi 0, %s190
  $region4: #{upsampling_block_forward.5} parent=0 // loop_header_branch
    %17 = sbr.rel (%p15) target = $region8
  $region5: #{upsampling_block_forward.5} parent=0 // loop_body
    %s19 = ssub.s32 %s14, 1
    %s20 = ssub.s32 %s14, 2
    %s21 = sadd.s32 %s14, 1
    %s22 = ssub.s32 %s14, %s21
    %p23 = scmp.eq.s32.totalorder %s22, 0
    %s25 = sadd.s32 %s24, 1
    %s26 = scalar_select %p23, %s24, %s25
    %p29 = pneg %p23
    %p30 = scmp.eq.s32.totalorder %s14, 1
    %p31 = por %p29, %p30
    %p32 = scmp.ne.s32.totalorder %s24, %s27
    %p33 = scmp.eq.s32.totalorder %s14, 0
    %p34 = por %p32, %p33
    %p35 = scmp.ne.s32.totalorder %s24, %s27
    %p36 = scmp.eq.s32.totalorder %s19, 1
    %p37 = por %p35, %p36
    %p38 = scmp.ne.s32.totalorder %s27, %s28
    %p39 = scmp.eq.s32.totalorder %s19, 0
    %p40 = por %p38, %p39
    %p41 = scmp.ne.s32.totalorder %s27, %s28
    %p42 = scmp.eq.s32.totalorder %s20, 1
    %p43 = por %p41, %p42
    %p45 = scmp.ne.s32.totalorder %s28, %s44
    %p46 = scmp.eq.s32.totalorder %s20, 0
    %p47 = por %p45, %p46
    %s49 = sadd.s32 %s48, 1
    %p52 = scmp.eq.s32.totalorder %s14, 1
    %p53 = scmp.ne.s32.totalorder %s48, %s50
    %p54 = scmp.eq.s32.totalorder %s14, 0
    %p55 = por %p53, %p54
    %p56 = scmp.ne.s32.totalorder %s48, %s50
    %p57 = scmp.eq.s32.totalorder %s19, 1
    %p58 = por %p56, %p57
    %p59 = scmp.ne.s32.totalorder %s50, %s51
    %p60 = scmp.eq.s32.totalorder %s19, 0
    %p61 = por %p59, %p60
    %p62 = scmp.ne.s32.totalorder %s50, %s51
    %p63 = scmp.eq.s32.totalorder %s20, 1
    %p64 = por %p62, %p63
    %p66 = scmp.ne.s32.totalorder %s51, %s65
    %p67 = scmp.eq.s32.totalorder %s20, 0
    %p68 = por %p66, %p67
    %s70 = sadd.s32 %s69, 1
    %p73 = scmp.eq.s32.totalorder %s14, 1
    %p74 = scmp.ne.s32.totalorder %s69, %s71
    %p75 = scmp.eq.s32.totalorder %s14, 0
    %p76 = por %p74, %p75
    %p77 = scmp.ne.s32.totalorder %s69, %s71
    %p78 = scmp.eq.s32.totalorder %s19, 1
    %p79 = por %p77, %p78
    %p80 = scmp.ne.s32.totalorder %s71, %s72
    %p81 = scmp.eq.s32.totalorder %s19, 0
    %p82 = por %p80, %p81
    %p83 = scmp.ne.s32.totalorder %s71, %s72
    %p84 = scmp.eq.s32.totalorder %s20, 1
    %p85 = por %p83, %p84
    %p87 = scmp.ne.s32.totalorder %s72, %s86
    %p88 = scmp.eq.s32.totalorder %s20, 0
    %p89 = por %p87, %p88
    %s91 = sadd.s32 %s90, 1
    %p94 = scmp.eq.s32.totalorder %s14, 1
    %p95 = scmp.ne.s32.totalorder %s90, %s92
    %p96 = scmp.eq.s32.totalorder %s14, 0
    %p97 = por %p95, %p96
    %p98 = scmp.ne.s32.totalorder %s90, %s92
    %p99 = scmp.eq.s32.totalorder %s19, 1
    %p100 = por %p98, %p99
    %p101 = scmp.ne.s32.totalorder %s92, %s93
    %p102 = scmp.eq.s32.totalorder %s19, 0
    %p103 = por %p101, %p102
    %p104 = scmp.ne.s32.totalorder %s92, %s93
    %p105 = scmp.eq.s32.totalorder %s20, 1
    %p106 = por %p104, %p105
    %p108 = scmp.ne.s32.totalorder %s93, %s107
    %p109 = scmp.eq.s32.totalorder %s20, 0
    %p110 = por %p108, %p109
    %s112 = sadd.s32 %s111, 1
    %p115 = scmp.eq.s32.totalorder %s14, 1
    %p116 = scmp.ne.s32.totalorder %s111, %s113
    %p117 = scmp.eq.s32.totalorder %s14, 0
    %p118 = por %p116, %p117
    %p119 = scmp.ne.s32.totalorder %s111, %s113
    %p120 = scmp.eq.s32.totalorder %s19, 1
    %p121 = por %p119, %p120
    %p122 = scmp.ne.s32.totalorder %s113, %s114
    %p123 = scmp.eq.s32.totalorder %s19, 0
    %p124 = por %p122, %p123
    %p125 = scmp.ne.s32.totalorder %s113, %s114
    %p126 = scmp.eq.s32.totalorder %s20, 1
    %p127 = por %p125, %p126
    %p129 = scmp.ne.s32.totalorder %s114, %s128
    %p130 = scmp.eq.s32.totalorder %s20, 0
    %p131 = por %p129, %p130
    %s132 = ssub.s32 %s14, %s21
    %p133 = scmp.eq.s32.totalorder %s132, 0
    %s135 = sadd.s32 %s134, 1
    %s136 = scalar_select %p133, %s134, %s135
    %p139 = pneg %p133
    %p140 = scmp.eq.s32.totalorder %s14, 1
    %p141 = por %p139, %p140
    %p142 = scmp.ne.s32.totalorder %s134, %s137
    %p143 = scmp.eq.s32.totalorder %s14, 0
    %p144 = por %p142, %p143
    %p145 = scmp.ne.s32.totalorder %s134, %s137
    %p146 = scmp.eq.s32.totalorder %s19, 1
    %p147 = por %p145, %p146
    %p148 = scmp.ne.s32.totalorder %s137, %s138
    %p149 = scmp.eq.s32.totalorder %s19, 0
    %p150 = por %p148, %p149
    %p151 = scmp.ne.s32.totalorder %s137, %s138
    %p152 = scmp.eq.s32.totalorder %s20, 1
    %p153 = por %p151, %p152
    %p155 = scmp.ne.s32.totalorder %s138, %s154
    %p156 = scmp.eq.s32.totalorder %s20, 0
    %p157 = por %p155, %p156
    %s158 = ssub.s32 %s14, %s21
    %p159 = scmp.eq.s32.totalorder %s158, 0
    %s161 = sadd.s32 %s160, 1
    %s162 = scalar_select %p159, %s160, %s161
    %p165 = pneg %p159
    %p166 = scmp.eq.s32.totalorder %s14, 1
    %p167 = por %p165, %p166
    %p168 = scmp.ne.s32.totalorder %s160, %s163
    %p169 = scmp.eq.s32.totalorder %s14, 0
    %p170 = por %p168, %p169
    %p171 = scmp.ne.s32.totalorder %s160, %s163
    %p172 = scmp.eq.s32.totalorder %s19, 1
    %p173 = por %p171, %p172
    %p174 = scmp.ne.s32.totalorder %s163, %s164
    %p175 = scmp.eq.s32.totalorder %s19, 0
    %p176 = por %p174, %p175
    %p177 = scmp.ne.s32.totalorder %s163, %s164
    %p178 = scmp.eq.s32.totalorder %s20, 1
    %p179 = por %p177, %p178
    %p181 = scmp.ne.s32.totalorder %s164, %s180
    %p182 = scmp.eq.s32.totalorder %s20, 0
    %p183 = por %p181, %p182
    %s184 = ssub.s32 %s14, %s21
    %p185 = scmp.eq.s32.totalorder %s184, 0
    %s187 = sadd.s32 %s186, 1
    %s188 = scalar_select %p185, %s186, %s187
    %p191 = pneg %p185
    %p192 = scmp.eq.s32.totalorder %s14, 1
    %p193 = por %p191, %p192
    %p194 = scmp.ne.s32.totalorder %s186, %s189
    %p195 = scmp.eq.s32.totalorder %s14, 0
    %p196 = por %p194, %p195
    %p197 = scmp.ne.s32.totalorder %s186, %s189
    %p198 = scmp.eq.s32.totalorder %s19, 1
    %p199 = por %p197, %p198
    %p200 = scmp.ne.s32.totalorder %s189, %s190
    %p201 = scmp.eq.s32.totalorder %s19, 0
    %p202 = por %p200, %p201
    %p203 = scmp.ne.s32.totalorder %s189, %s190
    %p204 = scmp.eq.s32.totalorder %s20, 1
    %p205 = por %p203, %p204
    %p207 = scmp.ne.s32.totalorder %s190, %s206
    %p208 = scmp.eq.s32.totalorder %s20, 0
    %p209 = por %p207, %p208
    %p210 = scmp.le.s32.totalorder 1, %s14
    %p211 = scmp.lt.s32.totalorder %s14, 3
    %p212 = pnand %p210, %p211
    %p213 = pneg %p212
    // Predicated region
    $region9: #{upsampling_block_forward.5} parent=5 // pred_check
      _
    $region10: #{upsampling_block_forward.5} parent=5 // pred_check_branch
      %215 = sbr.rel (%p212) target = $region12
    $region11: #{upsampling_block_forward.5} parent=5 // pred_region
      %s216 = ssub.s32 %s14, 1
      // Predicated region
      $region13: #{upsampling_block_forward.5} parent=11 // pred_check
        %p217 = pneg %p61
      $region14: #{upsampling_block_forward.5} parent=11 // pred_check_branch
        %219 = sbr.rel (%p217) target = $region16
      $region15: #{upsampling_block_forward.5} parent=11 // pred_region
        _
      $region16: #{upsampling_block_forward.5} parent=11 // pred_fallthru
        _
      // Predicated region
      $region17: #{upsampling_block_forward.5} parent=11 // pred_check
        %p220 = pneg %p82
      $region18: #{upsampling_block_forward.5} parent=11 // pred_check_branch
        %222 = sbr.rel (%p220) target = $region20
      $region19: #{upsampling_block_forward.5} parent=11 // pred_region
        _
      $region20: #{upsampling_block_forward.5} parent=11 // pred_fallthru
        _
      // Predicated region
      $region21: #{upsampling_block_forward.5} parent=11 // pred_check
        %p223 = pneg %p103
      $region22: #{upsampling_block_forward.5} parent=11 // pred_check_branch
        %225 = sbr.rel (%p223) target = $region24
      $region23: #{upsampling_block_forward.5} parent=11 // pred_region
        _
      $region24: #{upsampling_block_forward.5} parent=11 // pred_fallthru
        _
      // Predicated region
      $region25: #{upsampling_block_forward.5} parent=11 // pred_check
        %p226 = pneg %p124
      $region26: #{upsampling_block_forward.5} parent=11 // pred_check_branch
        %228 = sbr.rel (%p226) target = $region28
      $region27: #{upsampling_block_forward.5} parent=11 // pred_region
        _
      $region28: #{upsampling_block_forward.5} parent=11 // pred_fallthru
        _
    $region12: #{upsampling_block_forward.5} parent=5 // pred_fallthru
      _
    %p229 = scmp.lt.s32.totalorder %s14, 2
    // Predicated region
    $region29: #{upsampling_block_forward.5} parent=5 // pred_check
      %p230 = pneg %p229
    $region30: #{upsampling_block_forward.5} parent=5 // pred_check_branch
      %232 = sbr.rel (%p230) target = $region32
    $region31: #{upsampling_block_forward.5} parent=5 // pred_region
      // Predicated region
      $region33: #{upsampling_block_forward.5} parent=31 // pred_check
        %p233 = pneg %p34
      $region34: #{upsampling_block_forward.5} parent=31 // pred_check_branch
        %235 = sbr.rel (%p233) target = $region36
      $region35: #{upsampling_block_forward.5} parent=31 // pred_region
        %p236 = scmp.lt.s32.totalorder %s14, 1
        %s237 = scalar_select %p236, %s14, 1
        %s238 = smul.addr %s237, 32
        %s239 = smul.addr %s238, 8
        %s240 = scalar_lea.vmem %s0, %s239
      $region36: #{upsampling_block_forward.5} parent=31 // pred_fallthru
        _
    $region32: #{upsampling_block_forward.5} parent=5 // pred_fallthru
      _
    %p241 = scmp.le.s32.totalorder 1, %s14
    %p242 = scmp.lt.s32.totalorder %s14, 3
    %p243 = pnand %p241, %p242
    %p244 = pneg %p243
    // Predicated region
    $region37: #{upsampling_block_forward.5} parent=5 // pred_check
      _
    $region38: #{upsampling_block_forward.5} parent=5 // pred_check_branch
      %246 = sbr.rel (%p243) target = $region40
    $region39: #{upsampling_block_forward.5} parent=5 // pred_region
      %s247 = ssub.s32 %s14, 1
      %p248 = scmp.lt.s32.totalorder %s19, 1
      %s249 = scalar_select %p248, %s19, 1
      %s250 = smul.addr %s249, 32
      %s251 = smul.addr %s250, 8
      %s252 = scalar_lea.vmem %s0, %s251
      %p253 = pneg %p40
      %p254 = pneg %p37
      %p255 = pneg %p61
      %p256 = pneg %p58
      %p257 = pneg %p82
      %p258 = pneg %p79
      %p259 = pneg %p103
      %p260 = pneg %p100
      %p261 = pneg %p124
      %p262 = pneg %p121
      %p263 = pneg %p150
      %p264 = pneg %p147
      %p265 = scmp.lt.s32.totalorder %s19, 1
      %s266 = scalar_select %p265, %s19, 1
      %s267 = smul.addr %s266, 32
      %s268 = smul.addr %s267, 8
      %s269 = scalar_lea.vmem %s5, %s268
      %p270 = pneg %p176
      %p271 = pneg %p173
      %p272 = scmp.lt.s32.totalorder %s19, 1
      %s273 = scalar_select %p272, %s19, 1
      %s274 = scalar_lea.vmem %s6, %s273
      %p275 = pneg %p202
      %p276 = pneg %p199
      %p277 = scmp.lt.s32.totalorder %s19, 1
      %s278 = scalar_select %p277, %s19, 1
      %s279 = scalar_lea.vmem %s7, %s278
      %p280 = scmp.lt.s32.totalorder %s19, 1
      %s281 = scalar_select %p280, %s19, 1
      %s282 = smul.addr %s281, 32
      %s283 = smul.addr %s282, 8
      %s284 = scalar_lea.vmem %s0, %s283
      %p285 = scmp.lt.s32.totalorder %s19, 1
      %s286 = scalar_select %p285, %s19, 1
      %s287 = smul.addr %s286, 32
      %s288 = smul.addr %s287, 8
      %s289 = scalar_lea.vmem %s5, %s288
      %p290 = scmp.lt.s32.totalorder %s19, 1
      %s291 = scalar_select %p290, %s19, 1
      %s292 = scalar_lea.vmem %s6, %s291
      %p293 = scmp.lt.s32.totalorder %s19, 1
      %s294 = scalar_select %p293, %s19, 1
      %s295 = scalar_lea.vmem %s7, %s294
      %v296 = vld [vmem:[%s284] sm:$0xff]
      %v297 = vld [vmem:[%s284 + $0x8] sm:$0xff]
      %v298 = vld [vmem:[%s284 + $0x10] sm:$0xff]
      %v299 = vld [vmem:[%s284 + $0x18] sm:$0xff]
      %v300 = vld [vmem:[%s284 + $0x20] sm:$0xff]
      %v301 = vld [vmem:[%s284 + $0x28] sm:$0xff]
      %v302 = vld [vmem:[%s284 + $0x30] sm:$0xff]
      %v303 = vld [vmem:[%s284 + $0x38] sm:$0xff]
      %v304 = vld [vmem:[%s284 + $0x40] sm:$0xff]
      %v305 = vld [vmem:[%s284 + $0x48] sm:$0xff]
      %v306 = vld [vmem:[%s284 + $0x50] sm:$0xff]
      %v307 = vld [vmem:[%s284 + $0x58] sm:$0xff]
      %v308 = vld [vmem:[%s284 + $0x60] sm:$0xff]
      %v309 = vld [vmem:[%s284 + $0x68] sm:$0xff]
      %v310 = vld [vmem:[%s284 + $0x70] sm:$0xff]
      %v311 = vld [vmem:[%s284 + $0x78] sm:$0xff]
      %v312 = vld [vmem:[%s284 + $0x80] sm:$0xff]
      %v313 = vld [vmem:[%s284 + $0x88] sm:$0xff]
      %v314 = vld [vmem:[%s284 + $0x90] sm:$0xff]
      %v315 = vld [vmem:[%s284 + $0x98] sm:$0xff]
      %v316 = vld [vmem:[%s284 + $0xa0] sm:$0xff]
      %v317 = vld [vmem:[%s284 + $0xa8] sm:$0xff]
      %v318 = vld [vmem:[%s284 + $0xb0] sm:$0xff]
      %v319 = vld [vmem:[%s284 + $0xb8] sm:$0xff]
      %v320 = vld [vmem:[%s284 + $0xc0] sm:$0xff]
      %v321 = vld [vmem:[%s284 + $0xc8] sm:$0xff]
      %v322 = vld [vmem:[%s284 + $0xd0] sm:$0xff]
      %v323 = vld [vmem:[%s284 + $0xd8] sm:$0xff]
      %v324 = vld [vmem:[%s284 + $0xe0] sm:$0xff]
      %v325 = vld [vmem:[%s284 + $0xe8] sm:$0xff]
      %v326 = vld [vmem:[%s284 + $0xf0] sm:$0xff]
      %v327 = vld [vmem:[%s284 + $0xf8] sm:$0xff]
      %vm328 = vcmask 64512
      %329 = vst.msk [vmem:[#allocation2] sm:$0xff] %vm328, 0.0
      %330 = vst.msk [vmem:[#allocation2 + $0x8] sm:$0xff] %vm328, 0.0
      %vm331 = vcmask 58368
      %332 = vst.msk [vmem:[#allocation2 + $0x10] sm:$0x3] %vm331, 0.0
      %333 = vst.msk [vmem:[#allocation2 + $0x18] sm:$0xff] %vm328, 0.0
      %334 = vst.msk [vmem:[#allocation2 + $0x20] sm:$0xff] %vm328, 0.0
      %335 = vst.msk [vmem:[#allocation2 + $0x28] sm:$0x3] %vm331, 0.0
      %336 = vst.msk [vmem:[#allocation2 + $0x30] sm:$0xff] %vm328, 0.0
      %337 = vst.msk [vmem:[#allocation2 + $0x38] sm:$0xff] %vm328, 0.0
      %338 = vst.msk [vmem:[#allocation2 + $0x40] sm:$0x3] %vm331, 0.0
      %339 = vst.msk [vmem:[#allocation2 + $0x48] sm:$0xff] %vm328, 0.0
      %340 = vst.msk [vmem:[#allocation2 + $0x50] sm:$0xff] %vm328, 0.0
      %341 = vst.msk [vmem:[#allocation2 + $0x58] sm:$0x3] %vm331, 0.0
      %342 = vst.msk [vmem:[#allocation2 + $0x60] sm:$0xff] %vm328, 0.0
      %343 = vst.msk [vmem:[#allocation2 + $0x68] sm:$0xff] %vm328, 0.0
      %344 = vst.msk [vmem:[#allocation2 + $0x70] sm:$0x3] %vm331, 0.0
      %345 = vst.msk [vmem:[#allocation2 + $0x78] sm:$0xff] %vm328, 0.0
      %346 = vst.msk [vmem:[#allocation2 + $0x80] sm:$0xff] %vm328, 0.0
      %347 = vst.msk [vmem:[#allocation2 + $0x88] sm:$0x3] %vm331, 0.0
      %348 = vst.msk [vmem:[#allocation2 + $0x90] sm:$0xff] %vm328, 0.0
      %349 = vst.msk [vmem:[#allocation2 + $0x98] sm:$0xff] %vm328, 0.0
      %350 = vst.msk [vmem:[#allocation2 + $0xa0] sm:$0x3] %vm331, 0.0
      %351 = vst.msk [vmem:[#allocation2 + $0xa8] sm:$0xff] %vm328, 0.0
      %352 = vst.msk [vmem:[#allocation2 + $0xb0] sm:$0xff] %vm328, 0.0
      %353 = vst.msk [vmem:[#allocation2 + $0xb8] sm:$0x3] %vm331, 0.0
      %354 = vst.msk [vmem:[#allocation2 + $0xc0] sm:$0xff] %vm328, 0.0
      %355 = vst.msk [vmem:[#allocation2 + $0xc8] sm:$0xff] %vm328, 0.0
      %356 = vst.msk [vmem:[#allocation2 + $0xd0] sm:$0x3] %vm331, 0.0
      %357 = vst.msk [vmem:[#allocation2 + $0xd8] sm:$0xff] %vm328, 0.0
      %358 = vst.msk [vmem:[#allocation2 + $0xe0] sm:$0xff] %vm328, 0.0
      %359 = vst.msk [vmem:[#allocation2 + $0xe8] sm:$0x3] %vm331, 0.0
      %360 = vst.msk [vmem:[#allocation2 + $0xf0] sm:$0xff] %vm328, 0.0
      %361 = vst.msk [vmem:[#allocation2 + $0xf8] sm:$0xff] %vm328, 0.0
      %362 = vst.msk [vmem:[#allocation2 + $0x100] sm:$0x3] %vm331, 0.0
      %363 = vst.msk [vmem:[#allocation2 + $0x108] sm:$0xff] %vm328, 0.0
      %364 = vst.msk [vmem:[#allocation2 + $0x110] sm:$0xff] %vm328, 0.0
      %365 = vst.msk [vmem:[#allocation2 + $0x118] sm:$0x3] %vm331, 0.0
      %366 = vst.msk [vmem:[#allocation2 + $0x120] sm:$0xff] %vm328, 0.0
      %367 = vst.msk [vmem:[#allocation2 + $0x128] sm:$0xff] %vm328, 0.0
      %368 = vst.msk [vmem:[#allocation2 + $0x130] sm:$0x3] %vm331, 0.0
      %369 = vst.msk [vmem:[#allocation2 + $0x138] sm:$0xff] %vm328, 0.0
      %370 = vst.msk [vmem:[#allocation2 + $0x140] sm:$0xff] %vm328, 0.0
      %371 = vst.msk [vmem:[#allocation2 + $0x148] sm:$0x3] %vm331, 0.0
      %372 = vst.msk [vmem:[#allocation2 + $0x150] sm:$0xff] %vm328, 0.0
      %373 = vst.msk [vmem:[#allocation2 + $0x158] sm:$0xff] %vm328, 0.0
      %374 = vst.msk [vmem:[#allocation2 + $0x160] sm:$0x3] %vm331, 0.0
      %375 = vst.msk [vmem:[#allocation2 + $0x168] sm:$0xff] %vm328, 0.0
      %376 = vst.msk [vmem:[#allocation2 + $0x170] sm:$0xff] %vm328, 0.0
      %377 = vst.msk [vmem:[#allocation2 + $0x178] sm:$0x3] %vm331, 0.0
      %378 = vst.msk [vmem:[#allocation2 + $0x180] sm:$0xff] %vm328, 0.0
      %379 = vst.msk [vmem:[#allocation2 + $0x188] sm:$0xff] %vm328, 0.0
      %380 = vst.msk [vmem:[#allocation2 + $0x190] sm:$0x3] %vm331, 0.0
      %381 = vst.msk [vmem:[#allocation2 + $0x198] sm:$0xff] %vm328, 0.0
      %382 = vst.msk [vmem:[#allocation2 + $0x1a0] sm:$0xff] %vm328, 0.0
      %383 = vst.msk [vmem:[#allocation2 + $0x1a8] sm:$0x3] %vm331, 0.0
      %s384 = scalar_lea.vmem [#allocation2], 24
      %385 = vst.msk [vmem:[%s384 + $0x1] sm:$0xff] %vm328, %v296
      %386 = vst.msk [vmem:[%s384 + $0x9] sm:$0xff] %vm328, %v297
      %387 = vst.msk [vmem:[%s384 + $0x19] sm:$0xff] %vm328, %v298
      %388 = vst.msk [vmem:[%s384 + $0x21] sm:$0xff] %vm328, %v299
      %389 = vst.msk [vmem:[%s384 + $0x31] sm:$0xff] %vm328, %v300
      %390 = vst.msk [vmem:[%s384 + $0x39] sm:$0xff] %vm328, %v301
      %391 = vst.msk [vmem:[%s384 + $0x49] sm:$0xff] %vm328, %v302
      %392 = vst.msk [vmem:[%s384 + $0x51] sm:$0xff] %vm328, %v303
      %393 = vst.msk [vmem:[%s384 + $0x61] sm:$0xff] %vm328, %v304
      %394 = vst.msk [vmem:[%s384 + $0x69] sm:$0xff] %vm328, %v305
      %395 = vst.msk [vmem:[%s384 + $0x79] sm:$0xff] %vm328, %v306
      %396 = vst.msk [vmem:[%s384 + $0x81] sm:$0xff] %vm328, %v307
      %397 = vst.msk [vmem:[%s384 + $0x91] sm:$0xff] %vm328, %v308
      %398 = vst.msk [vmem:[%s384 + $0x99] sm:$0xff] %vm328, %v309
      %399 = vst.msk [vmem:[%s384 + $0xa9] sm:$0xff] %vm328, %v310
      %400 = vst.msk [vmem:[%s384 + $0xb1] sm:$0xff] %vm328, %v311
      %401 = vst.msk [vmem:[%s384 + $0xc1] sm:$0xff] %vm328, %v312
      %402 = vst.msk [vmem:[%s384 + $0xc9] sm:$0xff] %vm328, %v313
      %403 = vst.msk [vmem:[%s384 + $0xd9] sm:$0xff] %vm328, %v314
      %404 = vst.msk [vmem:[%s384 + $0xe1] sm:$0xff] %vm328, %v315
      %405 = vst.msk [vmem:[%s384 + $0xf1] sm:$0xff] %vm328, %v316
      %406 = vst.msk [vmem:[%s384 + $0xf9] sm:$0xff] %vm328, %v317
      %407 = vst.msk [vmem:[%s384 + $0x109] sm:$0xff] %vm328, %v318
      %408 = vst.msk [vmem:[%s384 + $0x111] sm:$0xff] %vm328, %v319
      %409 = vst.msk [vmem:[%s384 + $0x121] sm:$0xff] %vm328, %v320
      %410 = vst.msk [vmem:[%s384 + $0x129] sm:$0xff] %vm328, %v321
      %411 = vst.msk [vmem:[%s384 + $0x139] sm:$0xff] %vm328, %v322
      %412 = vst.msk [vmem:[%s384 + $0x141] sm:$0xff] %vm328, %v323
      %413 = vst.msk [vmem:[%s384 + $0x151] sm:$0xff] %vm328, %v324
      %414 = vst.msk [vmem:[%s384 + $0x159] sm:$0xff] %vm328, %v325
      %415 = vst.msk [vmem:[%s384 + $0x169] sm:$0xff] %vm328, %v326
      %416 = vst.msk [vmem:[%s384 + $0x171] sm:$0xff] %vm328, %v327
      %v417 = vld [vmem:[#allocation2] sm:$0xff]
      %v418 = vld [vmem:[#allocation2 + $0x8] sm:$0xff]
      %v419 = vld [vmem:[#allocation2 + $0x18] sm:$0xff]
      %v420 = vld [vmem:[#allocation2 + $0x20] sm:$0xff]
      %v421 = vld [vmem:[#allocation2 + $0x30] sm:$0xff]
      %v422 = vld [vmem:[#allocation2 + $0x38] sm:$0xff]
      %v423 = vld [vmem:[#allocation2 + $0x48] sm:$0xff]
      %v424 = vld [vmem:[#allocation2 + $0x50] sm:$0xff]
      %v425 = vld [vmem:[#allocation2 + $0x60] sm:$0xff]
      %v426 = vld [vmem:[#allocation2 + $0x68] sm:$0xff]
      %v427 = vld [vmem:[#allocation2 + $0x78] sm:$0xff]
      %v428 = vld [vmem:[#allocation2 + $0x80] sm:$0xff]
      %v429 = vld [vmem:[#allocation2 + $0x90] sm:$0xff]
      %v430 = vld [vmem:[#allocation2 + $0x98] sm:$0xff]
      %v431 = vld [vmem:[#allocation2 + $0xa8] sm:$0xff]
      %v432 = vld [vmem:[#allocation2 + $0xb0] sm:$0xff]
      %v433 = vld [vmem:[#allocation2 + $0xc0] sm:$0xff]
      %v434 = vld [vmem:[#allocation2 + $0xc8] sm:$0xff]
      %v435 = vld [vmem:[#allocation2 + $0xd8] sm:$0xff]
      %v436 = vld [vmem:[#allocation2 + $0xe0] sm:$0xff]
      %v437 = vld [vmem:[#allocation2 + $0xf0] sm:$0xff]
      %v438 = vld [vmem:[#allocation2 + $0xf8] sm:$0xff]
      %v439 = vld [vmem:[#allocation2 + $0x108] sm:$0xff]
      %v440 = vld [vmem:[#allocation2 + $0x110] sm:$0xff]
      %v441 = vld [vmem:[#allocation2 + $0x120] sm:$0xff]
      %v442 = vld [vmem:[#allocation2 + $0x128] sm:$0xff]
      %v443 = vld [vmem:[#allocation2 + $0x138] sm:$0xff]
      %v444 = vld [vmem:[#allocation2 + $0x140] sm:$0xff]
      %v445 = vld [vmem:[#allocation2 + $0x150] sm:$0xff]
      %v446 = vld [vmem:[#allocation2 + $0x158] sm:$0xff]
      %v447 = vld [vmem:[#allocation2 + $0x168] sm:$0xff]
      %v448 = vld [vmem:[#allocation2 + $0x170] sm:$0xff]
      %v449 = vld [vmem:[#allocation2 + $0x1] sm:$0xff]
      %v450 = vld [vmem:[#allocation2 + $0x9] sm:$0xff]
      %v451 = vld [vmem:[#allocation2 + $0x19] sm:$0xff]
      %v452 = vld [vmem:[#allocation2 + $0x21] sm:$0xff]
      %v453 = vld [vmem:[#allocation2 + $0x31] sm:$0xff]
      %v454 = vld [vmem:[#allocation2 + $0x39] sm:$0xff]
      %v455 = vld [vmem:[#allocation2 + $0x49] sm:$0xff]
      %v456 = vld [vmem:[#allocation2 + $0x51] sm:$0xff]
      %v457 = vld [vmem:[#allocation2 + $0x61] sm:$0xff]
      %v458 = vld [vmem:[#allocation2 + $0x69] sm:$0xff]
      %v459 = vld [vmem:[#allocation2 + $0x79] sm:$0xff]
      %v460 = vld [vmem:[#allocation2 + $0x81] sm:$0xff]
      %v461 = vld [vmem:[#allocation2 + $0x91] sm:$0xff]
      %v462 = vld [vmem:[#allocation2 + $0x99] sm:$0xff]
      %v463 = vld [vmem:[#allocation2 + $0xa9] sm:$0xff]
      %v464 = vld [vmem:[#allocation2 + $0xb1] sm:$0xff]
      %v465 = vld [vmem:[#allocation2 + $0xc1] sm:$0xff]
      %v466 = vld [vmem:[#allocation2 + $0xc9] sm:$0xff]
      %v467 = vld [vmem:[#allocation2 + $0xd9] sm:$0xff]
      %v468 = vld [vmem:[#allocation2 + $0xe1] sm:$0xff]
      %v469 = vld [vmem:[#allocation2 + $0xf1] sm:$0xff]
      %v470 = vld [vmem:[#allocation2 + $0xf9] sm:$0xff]
      %v471 = vld [vmem:[#allocation2 + $0x109] sm:$0xff]
      %v472 = vld [vmem:[#allocation2 + $0x111] sm:$0xff]
      %v473 = vld [vmem:[#allocation2 + $0x121] sm:$0xff]
      %v474 = vld [vmem:[#allocation2 + $0x129] sm:$0xff]
      %v475 = vld [vmem:[#allocation2 + $0x139] sm:$0xff]
      %v476 = vld [vmem:[#allocation2 + $0x141] sm:$0xff]
      %v477 = vld [vmem:[#allocation2 + $0x151] sm:$0xff]
      %v478 = vld [vmem:[#allocation2 + $0x159] sm:$0xff]
      %v479 = vld [vmem:[#allocation2 + $0x169] sm:$0xff]
      %v480 = vld [vmem:[#allocation2 + $0x171] sm:$0xff]
      %v481 = vld [vmem:[#allocation2 + $0x2] sm:$0xff]
      %v482 = vld [vmem:[#allocation2 + $0xa] sm:$0xff]
      %v483 = vld [vmem:[#allocation2 + $0x1a] sm:$0xff]
      %v484 = vld [vmem:[#allocation2 + $0x22] sm:$0xff]
      %v485 = vld [vmem:[#allocation2 + $0x32] sm:$0xff]
      %v486 = vld [vmem:[#allocation2 + $0x3a] sm:$0xff]
      %v487 = vld [vmem:[#allocation2 + $0x4a] sm:$0xff]
      %v488 = vld [vmem:[#allocation2 + $0x52] sm:$0xff]
      %v489 = vld [vmem:[#allocation2 + $0x62] sm:$0xff]
      %v490 = vld [vmem:[#allocation2 + $0x6a] sm:$0xff]
      %v491 = vld [vmem:[#allocation2 + $0x7a] sm:$0xff]
      %v492 = vld [vmem:[#allocation2 + $0x82] sm:$0xff]
      %v493 = vld [vmem:[#allocation2 + $0x92] sm:$0xff]
      %v494 = vld [vmem:[#allocation2 + $0x9a] sm:$0xff]
      %v495 = vld [vmem:[#allocation2 + $0xaa] sm:$0xff]
      %v496 = vld [vmem:[#allocation2 + $0xb2] sm:$0xff]
      %v497 = vld [vmem:[#allocation2 + $0xc2] sm:$0xff]
      %v498 = vld [vmem:[#allocation2 + $0xca] sm:$0xff]
      %v499 = vld [vmem:[#allocation2 + $0xda] sm:$0xff]
      %v500 = vld [vmem:[#allocation2 + $0xe2] sm:$0xff]
      %v501 = vld [vmem:[#allocation2 + $0xf2] sm:$0xff]
      %v502 = vld [vmem:[#allocation2 + $0xfa] sm:$0xff]
      %v503 = vld [vmem:[#allocation2 + $0x10a] sm:$0xff]
      %v504 = vld [vmem:[#allocation2 + $0x112] sm:$0xff]
      %v505 = vld [vmem:[#allocation2 + $0x122] sm:$0xff]
      %v506 = vld [vmem:[#allocation2 + $0x12a] sm:$0xff]
      %v507 = vld [vmem:[#allocation2 + $0x13a] sm:$0xff]
      %v508 = vld [vmem:[#allocation2 + $0x142] sm:$0xff]
      %v509 = vld [vmem:[#allocation2 + $0x152] sm:$0xff]
      %v510 = vld [vmem:[#allocation2 + $0x15a] sm:$0xff]
      %v511 = vld [vmem:[#allocation2 + $0x16a] sm:$0xff]
      %v512 = vld [vmem:[#allocation2 + $0x172] sm:$0xff]
      %v513 = vld [vmem:[%s384] sm:$0xff]
      %v514 = vld [vmem:[%s384 + $0x8] sm:$0xff]
      %v515 = vld [vmem:[%s384 + $0x18] sm:$0xff]
      %v516 = vld [vmem:[%s384 + $0x20] sm:$0xff]
      %v517 = vld [vmem:[%s384 + $0x30] sm:$0xff]
      %v518 = vld [vmem:[%s384 + $0x38] sm:$0xff]
      %v519 = vld [vmem:[%s384 + $0x48] sm:$0xff]
      %v520 = vld [vmem:[%s384 + $0x50] sm:$0xff]
      %v521 = vld [vmem:[%s384 + $0x60] sm:$0xff]
      %v522 = vld [vmem:[%s384 + $0x68] sm:$0xff]
      %v523 = vld [vmem:[%s384 + $0x78] sm:$0xff]
      %v524 = vld [vmem:[%s384 + $0x80] sm:$0xff]
      %v525 = vld [vmem:[%s384 + $0x90] sm:$0xff]
      %v526 = vld [vmem:[%s384 + $0x98] sm:$0xff]
      %v527 = vld [vmem:[%s384 + $0xa8] sm:$0xff]
      %v528 = vld [vmem:[%s384 + $0xb0] sm:$0xff]
      %v529 = vld [vmem:[%s384 + $0xc0] sm:$0xff]
      %v530 = vld [vmem:[%s384 + $0xc8] sm:$0xff]
      %v531 = vld [vmem:[%s384 + $0xd8] sm:$0xff]
      %v532 = vld [vmem:[%s384 + $0xe0] sm:$0xff]
      %v533 = vld [vmem:[%s384 + $0xf0] sm:$0xff]
      %v534 = vld [vmem:[%s384 + $0xf8] sm:$0xff]
      %v535 = vld [vmem:[%s384 + $0x108] sm:$0xff]
      %v536 = vld [vmem:[%s384 + $0x110] sm:$0xff]
      %v537 = vld [vmem:[%s384 + $0x120] sm:$0xff]
      %v538 = vld [vmem:[%s384 + $0x128] sm:$0xff]
      %v539 = vld [vmem:[%s384 + $0x138] sm:$0xff]
      %v540 = vld [vmem:[%s384 + $0x140] sm:$0xff]
      %v541 = vld [vmem:[%s384 + $0x150] sm:$0xff]
      %v542 = vld [vmem:[%s384 + $0x158] sm:$0xff]
      %v543 = vld [vmem:[%s384 + $0x168] sm:$0xff]
      %v544 = vld [vmem:[%s384 + $0x170] sm:$0xff]
      %v545 = vld [vmem:[%s384 + $0x1] sm:$0xff]
      %v546 = vld [vmem:[%s384 + $0x9] sm:$0xff]
      %v547 = vld [vmem:[%s384 + $0x19] sm:$0xff]
      %v548 = vld [vmem:[%s384 + $0x21] sm:$0xff]
      %v549 = vld [vmem:[%s384 + $0x31] sm:$0xff]
      %v550 = vld [vmem:[%s384 + $0x39] sm:$0xff]
      %v551 = vld [vmem:[%s384 + $0x49] sm:$0xff]
      %v552 = vld [vmem:[%s384 + $0x51] sm:$0xff]
      %v553 = vld [vmem:[%s384 + $0x61] sm:$0xff]
      %v554 = vld [vmem:[%s384 + $0x69] sm:$0xff]
      %v555 = vld [vmem:[%s384 + $0x79] sm:$0xff]
      %v556 = vld [vmem:[%s384 + $0x81] sm:$0xff]
      %v557 = vld [vmem:[%s384 + $0x91] sm:$0xff]
      %v558 = vld [vmem:[%s384 + $0x99] sm:$0xff]
      %v559 = vld [vmem:[%s384 + $0xa9] sm:$0xff]
      %v560 = vld [vmem:[%s384 + $0xb1] sm:$0xff]
      %v561 = vld [vmem:[%s384 + $0xc1] sm:$0xff]
      %v562 = vld [vmem:[%s384 + $0xc9] sm:$0xff]
      %v563 = vld [vmem:[%s384 + $0xd9] sm:$0xff]
      %v564 = vld [vmem:[%s384 + $0xe1] sm:$0xff]
      %v565 = vld [vmem:[%s384 + $0xf1] sm:$0xff]
      %v566 = vld [vmem:[%s384 + $0xf9] sm:$0xff]
      %v567 = vld [vmem:[%s384 + $0x109] sm:$0xff]
      %v568 = vld [vmem:[%s384 + $0x111] sm:$0xff]
      %v569 = vld [vmem:[%s384 + $0x121] sm:$0xff]
      %v570 = vld [vmem:[%s384 + $0x129] sm:$0xff]
      %v571 = vld [vmem:[%s384 + $0x139] sm:$0xff]
      %v572 = vld [vmem:[%s384 + $0x141] sm:$0xff]
      %v573 = vld [vmem:[%s384 + $0x151] sm:$0xff]
      %v574 = vld [vmem:[%s384 + $0x159] sm:$0xff]
      %v575 = vld [vmem:[%s384 + $0x169] sm:$0xff]
      %v576 = vld [vmem:[%s384 + $0x171] sm:$0xff]
      %v577 = vld [vmem:[%s384 + $0x2] sm:$0xff]
      %v578 = vld [vmem:[%s384 + $0xa] sm:$0xff]
      %v579 = vld [vmem:[%s384 + $0x1a] sm:$0xff]
      %v580 = vld [vmem:[%s384 + $0x22] sm:$0xff]
      %v581 = vld [vmem:[%s384 + $0x32] sm:$0xff]
      %v582 = vld [vmem:[%s384 + $0x3a] sm:$0xff]
      %v583 = vld [vmem:[%s384 + $0x4a] sm:$0xff]
      %v584 = vld [vmem:[%s384 + $0x52] sm:$0xff]
      %v585 = vld [vmem:[%s384 + $0x62] sm:$0xff]
      %v586 = vld [vmem:[%s384 + $0x6a] sm:$0xff]
      %v587 = vld [vmem:[%s384 + $0x7a] sm:$0xff]
      %v588 = vld [vmem:[%s384 + $0x82] sm:$0xff]
      %v589 = vld [vmem:[%s384 + $0x92] sm:$0xff]
      %v590 = vld [vmem:[%s384 + $0x9a] sm:$0xff]
      %v591 = vld [vmem:[%s384 + $0xaa] sm:$0xff]
      %v592 = vld [vmem:[%s384 + $0xb2] sm:$0xff]
      %v593 = vld [vmem:[%s384 + $0xc2] sm:$0xff]
      %v594 = vld [vmem:[%s384 + $0xca] sm:$0xff]
      %v595 = vld [vmem:[%s384 + $0xda] sm:$0xff]
      %v596 = vld [vmem:[%s384 + $0xe2] sm:$0xff]
      %v597 = vld [vmem:[%s384 + $0xf2] sm:$0xff]
      %v598 = vld [vmem:[%s384 + $0xfa] sm:$0xff]
      %v599 = vld [vmem:[%s384 + $0x10a] sm:$0xff]
      %v600 = vld [vmem:[%s384 + $0x112] sm:$0xff]
      %v601 = vld [vmem:[%s384 + $0x122] sm:$0xff]
      %v602 = vld [vmem:[%s384 + $0x12a] sm:$0xff]
      %v603 = vld [vmem:[%s384 + $0x13a] sm:$0xff]
      %v604 = vld [vmem:[%s384 + $0x142] sm:$0xff]
      %v605 = vld [vmem:[%s384 + $0x152] sm:$0xff]
      %v606 = vld [vmem:[%s384 + $0x15a] sm:$0xff]
      %v607 = vld [vmem:[%s384 + $0x16a] sm:$0xff]
      %v608 = vld [vmem:[%s384 + $0x172] sm:$0xff]
      %s609 = scalar_lea.vmem [#allocation2], 48
      %v610 = vld [vmem:[%s609] sm:$0xff]
      %v611 = vld [vmem:[%s609 + $0x8] sm:$0xff]
      %v612 = vld [vmem:[%s609 + $0x18] sm:$0xff]
      %v613 = vld [vmem:[%s609 + $0x20] sm:$0xff]
      %v614 = vld [vmem:[%s609 + $0x30] sm:$0xff]
      %v615 = vld [vmem:[%s609 + $0x38] sm:$0xff]
      %v616 = vld [vmem:[%s609 + $0x48] sm:$0xff]
      %v617 = vld [vmem:[%s609 + $0x50] sm:$0xff]
      %v618 = vld [vmem:[%s609 + $0x60] sm:$0xff]
      %v619 = vld [vmem:[%s609 + $0x68] sm:$0xff]
      %v620 = vld [vmem:[%s609 + $0x78] sm:$0xff]
      %v621 = vld [vmem:[%s609 + $0x80] sm:$0xff]
      %v622 = vld [vmem:[%s609 + $0x90] sm:$0xff]
      %v623 = vld [vmem:[%s609 + $0x98] sm:$0xff]
      %v624 = vld [vmem:[%s609 + $0xa8] sm:$0xff]
      %v625 = vld [vmem:[%s609 + $0xb0] sm:$0xff]
      %v626 = vld [vmem:[%s609 + $0xc0] sm:$0xff]
      %v627 = vld [vmem:[%s609 + $0xc8] sm:$0xff]
      %v628 = vld [vmem:[%s609 + $0xd8] sm:$0xff]
      %v629 = vld [vmem:[%s609 + $0xe0] sm:$0xff]
      %v630 = vld [vmem:[%s609 + $0xf0] sm:$0xff]
      %v631 = vld [vmem:[%s609 + $0xf8] sm:$0xff]
      %v632 = vld [vmem:[%s609 + $0x108] sm:$0xff]
      %v633 = vld [vmem:[%s609 + $0x110] sm:$0xff]
      %v634 = vld [vmem:[%s609 + $0x120] sm:$0xff]
      %v635 = vld [vmem:[%s609 + $0x128] sm:$0xff]
      %v636 = vld [vmem:[%s609 + $0x138] sm:$0xff]
      %v637 = vld [vmem:[%s609 + $0x140] sm:$0xff]
      %v638 = vld [vmem:[%s609 + $0x150] sm:$0xff]
      %v639 = vld [vmem:[%s609 + $0x158] sm:$0xff]
      %v640 = vld [vmem:[%s609 + $0x168] sm:$0xff]
      %v641 = vld [vmem:[%s609 + $0x170] sm:$0xff]
      %v642 = vld [vmem:[%s609 + $0x1] sm:$0xff]
      %v643 = vld [vmem:[%s609 + $0x9] sm:$0xff]
      %v644 = vld [vmem:[%s609 + $0x19] sm:$0xff]
      %v645 = vld [vmem:[%s609 + $0x21] sm:$0xff]
      %v646 = vld [vmem:[%s609 + $0x31] sm:$0xff]
      %v647 = vld [vmem:[%s609 + $0x39] sm:$0xff]
      %v648 = vld [vmem:[%s609 + $0x49] sm:$0xff]
      %v649 = vld [vmem:[%s609 + $0x51] sm:$0xff]
      %v650 = vld [vmem:[%s609 + $0x61] sm:$0xff]
      %v651 = vld [vmem:[%s609 + $0x69] sm:$0xff]
      %v652 = vld [vmem:[%s609 + $0x79] sm:$0xff]
      %v653 = vld [vmem:[%s609 + $0x81] sm:$0xff]
      %v654 = vld [vmem:[%s609 + $0x91] sm:$0xff]
      %v655 = vld [vmem:[%s609 + $0x99] sm:$0xff]
      %v656 = vld [vmem:[%s609 + $0xa9] sm:$0xff]
      %v657 = vld [vmem:[%s609 + $0xb1] sm:$0xff]
      %v658 = vld [vmem:[%s609 + $0xc1] sm:$0xff]
      %v659 = vld [vmem:[%s609 + $0xc9] sm:$0xff]
      %v660 = vld [vmem:[%s609 + $0xd9] sm:$0xff]
      %v661 = vld [vmem:[%s609 + $0xe1] sm:$0xff]
      %v662 = vld [vmem:[%s609 + $0xf1] sm:$0xff]
      %v663 = vld [vmem:[%s609 + $0xf9] sm:$0xff]
      %v664 = vld [vmem:[%s609 + $0x109] sm:$0xff]
      %v665 = vld [vmem:[%s609 + $0x111] sm:$0xff]
      %v666 = vld [vmem:[%s609 + $0x121] sm:$0xff]
      %v667 = vld [vmem:[%s609 + $0x129] sm:$0xff]
      %v668 = vld [vmem:[%s609 + $0x139] sm:$0xff]
      %v669 = vld [vmem:[%s609 + $0x141] sm:$0xff]
      %v670 = vld [vmem:[%s609 + $0x151] sm:$0xff]
      %v671 = vld [vmem:[%s609 + $0x159] sm:$0xff]
      %v672 = vld [vmem:[%s609 + $0x169] sm:$0xff]
      %v673 = vld [vmem:[%s609 + $0x171] sm:$0xff]
      %v674 = vld [vmem:[%s609 + $0x2] sm:$0xff]
      %v675 = vld [vmem:[%s609 + $0xa] sm:$0xff]
      %v676 = vld [vmem:[%s609 + $0x1a] sm:$0xff]
      %v677 = vld [vmem:[%s609 + $0x22] sm:$0xff]
      %v678 = vld [vmem:[%s609 + $0x32] sm:$0xff]
      %v679 = vld [vmem:[%s609 + $0x3a] sm:$0xff]
      %v680 = vld [vmem:[%s609 + $0x4a] sm:$0xff]
      %v681 = vld [vmem:[%s609 + $0x52] sm:$0xff]
      %v682 = vld [vmem:[%s609 + $0x62] sm:$0xff]
      %v683 = vld [vmem:[%s609 + $0x6a] sm:$0xff]
      %v684 = vld [vmem:[%s609 + $0x7a] sm:$0xff]
      %v685 = vld [vmem:[%s609 + $0x82] sm:$0xff]
      %v686 = vld [vmem:[%s609 + $0x92] sm:$0xff]
      %v687 = vld [vmem:[%s609 + $0x9a] sm:$0xff]
      %v688 = vld [vmem:[%s609 + $0xaa] sm:$0xff]
      %v689 = vld [vmem:[%s609 + $0xb2] sm:$0xff]
      %v690 = vld [vmem:[%s609 + $0xc2] sm:$0xff]
      %v691 = vld [vmem:[%s609 + $0xca] sm:$0xff]
      %v692 = vld [vmem:[%s609 + $0xda] sm:$0xff]
      %v693 = vld [vmem:[%s609 + $0xe2] sm:$0xff]
      %v694 = vld [vmem:[%s609 + $0xf2] sm:$0xff]
      %v695 = vld [vmem:[%s609 + $0xfa] sm:$0xff]
      %v696 = vld [vmem:[%s609 + $0x10a] sm:$0xff]
      %v697 = vld [vmem:[%s609 + $0x112] sm:$0xff]
      %v698 = vld [vmem:[%s609 + $0x122] sm:$0xff]
      %v699 = vld [vmem:[%s609 + $0x12a] sm:$0xff]
      %v700 = vld [vmem:[%s609 + $0x13a] sm:$0xff]
      %v701 = vld [vmem:[%s609 + $0x142] sm:$0xff]
      %v702 = vld [vmem:[%s609 + $0x152] sm:$0xff]
      %v703 = vld [vmem:[%s609 + $0x15a] sm:$0xff]
      %v704 = vld [vmem:[%s609 + $0x16a] sm:$0xff]
      %v705 = vld [vmem:[%s609 + $0x172] sm:$0xff]
      %738 = vrot.lane.b32.xlu0 %v449, 8
      %v739 = vpop.permute.xlu0 %738
      %740 = vrot.lane.b32.xlu0 %v450, 8
      %v741 = vpop.permute.xlu0 %740
      %742 = vrot.lane.b32.xlu0 %v451, 8
      %v743 = vpop.permute.xlu0 %742
      %744 = vrot.lane.b32.xlu0 %v452, 8
      %v745 = vpop.permute.xlu0 %744
      %746 = vrot.lane.b32.xlu0 %v453, 8
      %v747 = vpop.permute.xlu0 %746
      %748 = vrot.lane.b32.xlu0 %v454, 8
      %v749 = vpop.permute.xlu0 %748
      %750 = vrot.lane.b32.xlu0 %v455, 8
      %v751 = vpop.permute.xlu0 %750
      %752 = vrot.lane.b32.xlu0 %v456, 8
      %v753 = vpop.permute.xlu0 %752
      %754 = vrot.lane.b32.xlu0 %v457, 8
      %v755 = vpop.permute.xlu0 %754
      %756 = vrot.lane.b32.xlu0 %v458, 8
      %v757 = vpop.permute.xlu0 %756
      %758 = vrot.lane.b32.xlu0 %v459, 8
      %v759 = vpop.permute.xlu0 %758
      %760 = vrot.lane.b32.xlu0 %v460, 8
      %v761 = vpop.permute.xlu0 %760
      %762 = vrot.lane.b32.xlu0 %v461, 8
      %v763 = vpop.permute.xlu0 %762
      %764 = vrot.lane.b32.xlu0 %v462, 8
      %v765 = vpop.permute.xlu0 %764
      %766 = vrot.lane.b32.xlu0 %v463, 8
      %v767 = vpop.permute.xlu0 %766
      %768 = vrot.lane.b32.xlu0 %v464, 8
      %v769 = vpop.permute.xlu0 %768
      %770 = vrot.lane.b32.xlu0 %v465, 8
      %v771 = vpop.permute.xlu0 %770
      %772 = vrot.lane.b32.xlu0 %v466, 8
      %v773 = vpop.permute.xlu0 %772
      %774 = vrot.lane.b32.xlu0 %v467, 8
      %v775 = vpop.permute.xlu0 %774
      %776 = vrot.lane.b32.xlu0 %v468, 8
      %v777 = vpop.permute.xlu0 %776
      %778 = vrot.lane.b32.xlu0 %v469, 8
      %v779 = vpop.permute.xlu0 %778
      %780 = vrot.lane.b32.xlu0 %v470, 8
      %v781 = vpop.permute.xlu0 %780
      %782 = vrot.lane.b32.xlu0 %v471, 8
      %v783 = vpop.permute.xlu0 %782
      %784 = vrot.lane.b32.xlu0 %v472, 8
      %v785 = vpop.permute.xlu0 %784
      %786 = vrot.lane.b32.xlu0 %v473, 8
      %v787 = vpop.permute.xlu0 %786
      %788 = vrot.lane.b32.xlu0 %v474, 8
      %v789 = vpop.permute.xlu0 %788
      %790 = vrot.lane.b32.xlu0 %v475, 8
      %v791 = vpop.permute.xlu0 %790
      %792 = vrot.lane.b32.xlu0 %v476, 8
      %v793 = vpop.permute.xlu0 %792
      %794 = vrot.lane.b32.xlu0 %v477, 8
      %v795 = vpop.permute.xlu0 %794
      %796 = vrot.lane.b32.xlu0 %v478, 8
      %v797 = vpop.permute.xlu0 %796
      %798 = vrot.lane.b32.xlu0 %v479, 8
      %v799 = vpop.permute.xlu0 %798
      %800 = vrot.lane.b32.xlu0 %v480, 8
      %v801 = vpop.permute.xlu0 %800
      %866 = vrot.lane.b32.xlu0 %v481, 16
      %v867 = vpop.permute.xlu0 %866
      %868 = vrot.lane.b32.xlu0 %v482, 16
      %v869 = vpop.permute.xlu0 %868
      %870 = vrot.lane.b32.xlu0 %v483, 16
      %v871 = vpop.permute.xlu0 %870
      %872 = vrot.lane.b32.xlu0 %v484, 16
      %v873 = vpop.permute.xlu0 %872
      %874 = vrot.lane.b32.xlu0 %v485, 16
      %v875 = vpop.permute.xlu0 %874
      %876 = vrot.lane.b32.xlu0 %v486, 16
      %v877 = vpop.permute.xlu0 %876
      %878 = vrot.lane.b32.xlu0 %v487, 16
      %v879 = vpop.permute.xlu0 %878
      %880 = vrot.lane.b32.xlu0 %v488, 16
      %v881 = vpop.permute.xlu0 %880
      %882 = vrot.lane.b32.xlu0 %v489, 16
      %v883 = vpop.permute.xlu0 %882
      %884 = vrot.lane.b32.xlu0 %v490, 16
      %v885 = vpop.permute.xlu0 %884
      %886 = vrot.lane.b32.xlu0 %v491, 16
      %v887 = vpop.permute.xlu0 %886
      %888 = vrot.lane.b32.xlu0 %v492, 16
      %v889 = vpop.permute.xlu0 %888
      %890 = vrot.lane.b32.xlu0 %v493, 16
      %v891 = vpop.permute.xlu0 %890
      %892 = vrot.lane.b32.xlu0 %v494, 16
      %v893 = vpop.permute.xlu0 %892
      %894 = vrot.lane.b32.xlu0 %v495, 16
      %v895 = vpop.permute.xlu0 %894
      %896 = vrot.lane.b32.xlu0 %v496, 16
      %v897 = vpop.permute.xlu0 %896
      %898 = vrot.lane.b32.xlu0 %v497, 16
      %v899 = vpop.permute.xlu0 %898
      %900 = vrot.lane.b32.xlu0 %v498, 16
      %v901 = vpop.permute.xlu0 %900
      %902 = vrot.lane.b32.xlu0 %v499, 16
      %v903 = vpop.permute.xlu0 %902
      %904 = vrot.lane.b32.xlu0 %v500, 16
      %v905 = vpop.permute.xlu0 %904
      %906 = vrot.lane.b32.xlu0 %v501, 16
      %v907 = vpop.permute.xlu0 %906
      %908 = vrot.lane.b32.xlu0 %v502, 16
      %v909 = vpop.permute.xlu0 %908
      %910 = vrot.lane.b32.xlu0 %v503, 16
      %v911 = vpop.permute.xlu0 %910
      %912 = vrot.lane.b32.xlu0 %v504, 16
      %v913 = vpop.permute.xlu0 %912
      %914 = vrot.lane.b32.xlu0 %v505, 16
      %v915 = vpop.permute.xlu0 %914
      %916 = vrot.lane.b32.xlu0 %v506, 16
      %v917 = vpop.permute.xlu0 %916
      %918 = vrot.lane.b32.xlu0 %v507, 16
      %v919 = vpop.permute.xlu0 %918
      %920 = vrot.lane.b32.xlu0 %v508, 16
      %v921 = vpop.permute.xlu0 %920
      %922 = vrot.lane.b32.xlu0 %v509, 16
      %v923 = vpop.permute.xlu0 %922
      %924 = vrot.lane.b32.xlu0 %v510, 16
      %v925 = vpop.permute.xlu0 %924
      %926 = vrot.lane.b32.xlu0 %v511, 16
      %v927 = vpop.permute.xlu0 %926
      %928 = vrot.lane.b32.xlu0 %v512, 16
      %v929 = vpop.permute.xlu0 %928
      %994 = vrot.lane.b32.xlu0 %v513, 24
      %v995 = vpop.permute.xlu0 %994
      %996 = vrot.lane.b32.xlu0 %v514, 24
      %v997 = vpop.permute.xlu0 %996
      %998 = vrot.lane.b32.xlu0 %v515, 24
      %v999 = vpop.permute.xlu0 %998
      %1000 = vrot.lane.b32.xlu0 %v516, 24
      %v1001 = vpop.permute.xlu0 %1000
      %1002 = vrot.lane.b32.xlu0 %v517, 24
      %v1003 = vpop.permute.xlu0 %1002
      %1004 = vrot.lane.b32.xlu0 %v518, 24
      %v1005 = vpop.permute.xlu0 %1004
      %1006 = vrot.lane.b32.xlu0 %v519, 24
      %v1007 = vpop.permute.xlu0 %1006
      %1008 = vrot.lane.b32.xlu0 %v520, 24
      %v1009 = vpop.permute.xlu0 %1008
      %1010 = vrot.lane.b32.xlu0 %v521, 24
      %v1011 = vpop.permute.xlu0 %1010
      %1012 = vrot.lane.b32.xlu0 %v522, 24
      %v1013 = vpop.permute.xlu0 %1012
      %1014 = vrot.lane.b32.xlu0 %v523, 24
      %v1015 = vpop.permute.xlu0 %1014
      %1016 = vrot.lane.b32.xlu0 %v524, 24
      %v1017 = vpop.permute.xlu0 %1016
      %1018 = vrot.lane.b32.xlu0 %v525, 24
      %v1019 = vpop.permute.xlu0 %1018
      %1020 = vrot.lane.b32.xlu0 %v526, 24
      %v1021 = vpop.permute.xlu0 %1020
      %1022 = vrot.lane.b32.xlu0 %v527, 24
      %v1023 = vpop.permute.xlu0 %1022
      %1024 = vrot.lane.b32.xlu0 %v528, 24
      %v1025 = vpop.permute.xlu0 %1024
      %1026 = vrot.lane.b32.xlu0 %v529, 24
      %v1027 = vpop.permute.xlu0 %1026
      %1028 = vrot.lane.b32.xlu0 %v530, 24
      %v1029 = vpop.permute.xlu0 %1028
      %1030 = vrot.lane.b32.xlu0 %v531, 24
      %v1031 = vpop.permute.xlu0 %1030
      %1032 = vrot.lane.b32.xlu0 %v532, 24
      %v1033 = vpop.permute.xlu0 %1032
      %1034 = vrot.lane.b32.xlu0 %v533, 24
      %v1035 = vpop.permute.xlu0 %1034
      %1036 = vrot.lane.b32.xlu0 %v534, 24
      %v1037 = vpop.permute.xlu0 %1036
      %1038 = vrot.lane.b32.xlu0 %v535, 24
      %v1039 = vpop.permute.xlu0 %1038
      %1040 = vrot.lane.b32.xlu0 %v536, 24
      %v1041 = vpop.permute.xlu0 %1040
      %1042 = vrot.lane.b32.xlu0 %v537, 24
      %v1043 = vpop.permute.xlu0 %1042
      %1044 = vrot.lane.b32.xlu0 %v538, 24
      %v1045 = vpop.permute.xlu0 %1044
      %1046 = vrot.lane.b32.xlu0 %v539, 24
      %v1047 = vpop.permute.xlu0 %1046
      %1048 = vrot.lane.b32.xlu0 %v540, 24
      %v1049 = vpop.permute.xlu0 %1048
      %1050 = vrot.lane.b32.xlu0 %v541, 24
      %v1051 = vpop.permute.xlu0 %1050
      %1052 = vrot.lane.b32.xlu0 %v542, 24
      %v1053 = vpop.permute.xlu0 %1052
      %1054 = vrot.lane.b32.xlu0 %v543, 24
      %v1055 = vpop.permute.xlu0 %1054
      %1056 = vrot.lane.b32.xlu0 %v544, 24
      %v1057 = vpop.permute.xlu0 %1056
      %1122 = vrot.lane.b32.xlu0 %v545, 32
      %v1123 = vpop.permute.xlu0 %1122
      %1124 = vrot.lane.b32.xlu0 %v546, 32
      %v1125 = vpop.permute.xlu0 %1124
      %1126 = vrot.lane.b32.xlu0 %v547, 32
      %v1127 = vpop.permute.xlu0 %1126
      %1128 = vrot.lane.b32.xlu0 %v548, 32
      %v1129 = vpop.permute.xlu0 %1128
      %1130 = vrot.lane.b32.xlu0 %v549, 32
      %v1131 = vpop.permute.xlu0 %1130
      %1132 = vrot.lane.b32.xlu0 %v550, 32
      %v1133 = vpop.permute.xlu0 %1132
      %1134 = vrot.lane.b32.xlu0 %v551, 32
      %v1135 = vpop.permute.xlu0 %1134
      %1136 = vrot.lane.b32.xlu0 %v552, 32
      %v1137 = vpop.permute.xlu0 %1136
      %1138 = vrot.lane.b32.xlu0 %v553, 32
      %v1139 = vpop.permute.xlu0 %1138
      %1140 = vrot.lane.b32.xlu0 %v554, 32
      %v1141 = vpop.permute.xlu0 %1140
      %1142 = vrot.lane.b32.xlu0 %v555, 32
      %v1143 = vpop.permute.xlu0 %1142
      %1144 = vrot.lane.b32.xlu0 %v556, 32
      %v1145 = vpop.permute.xlu0 %1144
      %1146 = vrot.lane.b32.xlu0 %v557, 32
      %v1147 = vpop.permute.xlu0 %1146
      %1148 = vrot.lane.b32.xlu0 %v558, 32
      %v1149 = vpop.permute.xlu0 %1148
      %1150 = vrot.lane.b32.xlu0 %v559, 32
      %v1151 = vpop.permute.xlu0 %1150
      %1152 = vrot.lane.b32.xlu0 %v560, 32
      %v1153 = vpop.permute.xlu0 %1152
      %1154 = vrot.lane.b32.xlu0 %v561, 32
      %v1155 = vpop.permute.xlu0 %1154
      %1156 = vrot.lane.b32.xlu0 %v562, 32
      %v1157 = vpop.permute.xlu0 %1156
      %1158 = vrot.lane.b32.xlu0 %v563, 32
      %v1159 = vpop.permute.xlu0 %1158
      %1160 = vrot.lane.b32.xlu0 %v564, 32
      %v1161 = vpop.permute.xlu0 %1160
      %1162 = vrot.lane.b32.xlu0 %v565, 32
      %v1163 = vpop.permute.xlu0 %1162
      %1164 = vrot.lane.b32.xlu0 %v566, 32
      %v1165 = vpop.permute.xlu0 %1164
      %1166 = vrot.lane.b32.xlu0 %v567, 32
      %v1167 = vpop.permute.xlu0 %1166
      %1168 = vrot.lane.b32.xlu0 %v568, 32
      %v1169 = vpop.permute.xlu0 %1168
      %1170 = vrot.lane.b32.xlu0 %v569, 32
      %v1171 = vpop.permute.xlu0 %1170
      %1172 = vrot.lane.b32.xlu0 %v570, 32
      %v1173 = vpop.permute.xlu0 %1172
      %1174 = vrot.lane.b32.xlu0 %v571, 32
      %v1175 = vpop.permute.xlu0 %1174
      %1176 = vrot.lane.b32.xlu0 %v572, 32
      %v1177 = vpop.permute.xlu0 %1176
      %1178 = vrot.lane.b32.xlu0 %v573, 32
      %v1179 = vpop.permute.xlu0 %1178
      %1180 = vrot.lane.b32.xlu0 %v574, 32
      %v1181 = vpop.permute.xlu0 %1180
      %1182 = vrot.lane.b32.xlu0 %v575, 32
      %v1183 = vpop.permute.xlu0 %1182
      %1184 = vrot.lane.b32.xlu0 %v576, 32
      %v1185 = vpop.permute.xlu0 %1184
      %1250 = vrot.lane.b32.xlu0 %v577, 40
      %v1251 = vpop.permute.xlu0 %1250
      %1252 = vrot.lane.b32.xlu0 %v578, 40
      %v1253 = vpop.permute.xlu0 %1252
      %1254 = vrot.lane.b32.xlu0 %v579, 40
      %v1255 = vpop.permute.xlu0 %1254
      %1256 = vrot.lane.b32.xlu0 %v580, 40
      %v1257 = vpop.permute.xlu0 %1256
      %1258 = vrot.lane.b32.xlu0 %v581, 40
      %v1259 = vpop.permute.xlu0 %1258
      %1260 = vrot.lane.b32.xlu0 %v582, 40
      %v1261 = vpop.permute.xlu0 %1260
      %1262 = vrot.lane.b32.xlu0 %v583, 40
      %v1263 = vpop.permute.xlu0 %1262
      %1264 = vrot.lane.b32.xlu0 %v584, 40
      %v1265 = vpop.permute.xlu0 %1264
      %1266 = vrot.lane.b32.xlu0 %v585, 40
      %v1267 = vpop.permute.xlu0 %1266
      %1268 = vrot.lane.b32.xlu0 %v586, 40
      %v1269 = vpop.permute.xlu0 %1268
      %1270 = vrot.lane.b32.xlu0 %v587, 40
      %v1271 = vpop.permute.xlu0 %1270
      %1272 = vrot.lane.b32.xlu0 %v588, 40
      %v1273 = vpop.permute.xlu0 %1272
      %1274 = vrot.lane.b32.xlu0 %v589, 40
      %v1275 = vpop.permute.xlu0 %1274
      %1276 = vrot.lane.b32.xlu0 %v590, 40
      %v1277 = vpop.permute.xlu0 %1276
      %1278 = vrot.lane.b32.xlu0 %v591, 40
      %v1279 = vpop.permute.xlu0 %1278
      %1280 = vrot.lane.b32.xlu0 %v592, 40
      %v1281 = vpop.permute.xlu0 %1280
      %1282 = vrot.lane.b32.xlu0 %v593, 40
      %v1283 = vpop.permute.xlu0 %1282
      %1284 = vrot.lane.b32.xlu0 %v594, 40
      %v1285 = vpop.permute.xlu0 %1284
      %1286 = vrot.lane.b32.xlu0 %v595, 40
      %v1287 = vpop.permute.xlu0 %1286
      %1288 = vrot.lane.b32.xlu0 %v596, 40
      %v1289 = vpop.permute.xlu0 %1288
      %1290 = vrot.lane.b32.xlu0 %v597, 40
      %v1291 = vpop.permute.xlu0 %1290
      %1292 = vrot.lane.b32.xlu0 %v598, 40
      %v1293 = vpop.permute.xlu0 %1292
      %1294 = vrot.lane.b32.xlu0 %v599, 40
      %v1295 = vpop.permute.xlu0 %1294
      %1296 = vrot.lane.b32.xlu0 %v600, 40
      %v1297 = vpop.permute.xlu0 %1296
      %1298 = vrot.lane.b32.xlu0 %v601, 40
      %v1299 = vpop.permute.xlu0 %1298
      %1300 = vrot.lane.b32.xlu0 %v602, 40
      %v1301 = vpop.permute.xlu0 %1300
      %1302 = vrot.lane.b32.xlu0 %v603, 40
      %v1303 = vpop.permute.xlu0 %1302
      %1304 = vrot.lane.b32.xlu0 %v604, 40
      %v1305 = vpop.permute.xlu0 %1304
      %1306 = vrot.lane.b32.xlu0 %v605, 40
      %v1307 = vpop.permute.xlu0 %1306
      %1308 = vrot.lane.b32.xlu0 %v606, 40
      %v1309 = vpop.permute.xlu0 %1308
      %1310 = vrot.lane.b32.xlu0 %v607, 40
      %v1311 = vpop.permute.xlu0 %1310
      %1312 = vrot.lane.b32.xlu0 %v608, 40
      %v1313 = vpop.permute.xlu0 %1312
      %1378 = vrot.lane.b32.xlu0 %v610, 48
      %v1379 = vpop.permute.xlu0 %1378
      %1380 = vrot.lane.b32.xlu0 %v611, 48
      %v1381 = vpop.permute.xlu0 %1380
      %1382 = vrot.lane.b32.xlu0 %v612, 48
      %v1383 = vpop.permute.xlu0 %1382
      %1384 = vrot.lane.b32.xlu0 %v613, 48
      %v1385 = vpop.permute.xlu0 %1384
      %1386 = vrot.lane.b32.xlu0 %v614, 48
      %v1387 = vpop.permute.xlu0 %1386
      %1388 = vrot.lane.b32.xlu0 %v615, 48
      %v1389 = vpop.permute.xlu0 %1388
      %1390 = vrot.lane.b32.xlu0 %v616, 48
      %v1391 = vpop.permute.xlu0 %1390
      %1392 = vrot.lane.b32.xlu0 %v617, 48
      %v1393 = vpop.permute.xlu0 %1392
      %1394 = vrot.lane.b32.xlu0 %v618, 48
      %v1395 = vpop.permute.xlu0 %1394
      %1396 = vrot.lane.b32.xlu0 %v619, 48
      %v1397 = vpop.permute.xlu0 %1396
      %1398 = vrot.lane.b32.xlu0 %v620, 48
      %v1399 = vpop.permute.xlu0 %1398
      %1400 = vrot.lane.b32.xlu0 %v621, 48
      %v1401 = vpop.permute.xlu0 %1400
      %1402 = vrot.lane.b32.xlu0 %v622, 48
      %v1403 = vpop.permute.xlu0 %1402
      %1404 = vrot.lane.b32.xlu0 %v623, 48
      %v1405 = vpop.permute.xlu0 %1404
      %1406 = vrot.lane.b32.xlu0 %v624, 48
      %v1407 = vpop.permute.xlu0 %1406
      %1408 = vrot.lane.b32.xlu0 %v625, 48
      %v1409 = vpop.permute.xlu0 %1408
      %1410 = vrot.lane.b32.xlu0 %v626, 48
      %v1411 = vpop.permute.xlu0 %1410
      %1412 = vrot.lane.b32.xlu0 %v627, 48
      %v1413 = vpop.permute.xlu0 %1412
      %1414 = vrot.lane.b32.xlu0 %v628, 48
      %v1415 = vpop.permute.xlu0 %1414
      %1416 = vrot.lane.b32.xlu0 %v629, 48
      %v1417 = vpop.permute.xlu0 %1416
      %1418 = vrot.lane.b32.xlu0 %v630, 48
      %v1419 = vpop.permute.xlu0 %1418
      %1420 = vrot.lane.b32.xlu0 %v631, 48
      %v1421 = vpop.permute.xlu0 %1420
      %1422 = vrot.lane.b32.xlu0 %v632, 48
      %v1423 = vpop.permute.xlu0 %1422
      %1424 = vrot.lane.b32.xlu0 %v633, 48
      %v1425 = vpop.permute.xlu0 %1424
      %1426 = vrot.lane.b32.xlu0 %v634, 48
      %v1427 = vpop.permute.xlu0 %1426
      %1428 = vrot.lane.b32.xlu0 %v635, 48
      %v1429 = vpop.permute.xlu0 %1428
      %1430 = vrot.lane.b32.xlu0 %v636, 48
      %v1431 = vpop.permute.xlu0 %1430
      %1432 = vrot.lane.b32.xlu0 %v637, 48
      %v1433 = vpop.permute.xlu0 %1432
      %1434 = vrot.lane.b32.xlu0 %v638, 48
      %v1435 = vpop.permute.xlu0 %1434
      %1436 = vrot.lane.b32.xlu0 %v639, 48
      %v1437 = vpop.permute.xlu0 %1436
      %1438 = vrot.lane.b32.xlu0 %v640, 48
      %v1439 = vpop.permute.xlu0 %1438
      %1440 = vrot.lane.b32.xlu0 %v641, 48
      %v1441 = vpop.permute.xlu0 %1440
      %1506 = vrot.lane.b32.xlu0 %v642, 56
      %v1507 = vpop.permute.xlu0 %1506
      %1508 = vrot.lane.b32.xlu0 %v643, 56
      %v1509 = vpop.permute.xlu0 %1508
      %1510 = vrot.lane.b32.xlu0 %v644, 56
      %v1511 = vpop.permute.xlu0 %1510
      %1512 = vrot.lane.b32.xlu0 %v645, 56
      %v1513 = vpop.permute.xlu0 %1512
      %1514 = vrot.lane.b32.xlu0 %v646, 56
      %v1515 = vpop.permute.xlu0 %1514
      %1516 = vrot.lane.b32.xlu0 %v647, 56
      %v1517 = vpop.permute.xlu0 %1516
      %1518 = vrot.lane.b32.xlu0 %v648, 56
      %v1519 = vpop.permute.xlu0 %1518
      %1520 = vrot.lane.b32.xlu0 %v649, 56
      %v1521 = vpop.permute.xlu0 %1520
      %1522 = vrot.lane.b32.xlu0 %v650, 56
      %v1523 = vpop.permute.xlu0 %1522
      %1524 = vrot.lane.b32.xlu0 %v651, 56
      %v1525 = vpop.permute.xlu0 %1524
      %1526 = vrot.lane.b32.xlu0 %v652, 56
      %v1527 = vpop.permute.xlu0 %1526
      %1528 = vrot.lane.b32.xlu0 %v653, 56
      %v1529 = vpop.permute.xlu0 %1528
      %1530 = vrot.lane.b32.xlu0 %v654, 56
      %v1531 = vpop.permute.xlu0 %1530
      %1532 = vrot.lane.b32.xlu0 %v655, 56
      %v1533 = vpop.permute.xlu0 %1532
      %1534 = vrot.lane.b32.xlu0 %v656, 56
      %v1535 = vpop.permute.xlu0 %1534
      %1536 = vrot.lane.b32.xlu0 %v657, 56
      %v1537 = vpop.permute.xlu0 %1536
      %1538 = vrot.lane.b32.xlu0 %v658, 56
      %v1539 = vpop.permute.xlu0 %1538
      %1540 = vrot.lane.b32.xlu0 %v659, 56
      %v1541 = vpop.permute.xlu0 %1540
      %1542 = vrot.lane.b32.xlu0 %v660, 56
      %v1543 = vpop.permute.xlu0 %1542
      %1544 = vrot.lane.b32.xlu0 %v661, 56
      %v1545 = vpop.permute.xlu0 %1544
      %1546 = vrot.lane.b32.xlu0 %v662, 56
      %v1547 = vpop.permute.xlu0 %1546
      %1548 = vrot.lane.b32.xlu0 %v663, 56
      %v1549 = vpop.permute.xlu0 %1548
      %1550 = vrot.lane.b32.xlu0 %v664, 56
      %v1551 = vpop.permute.xlu0 %1550
      %1552 = vrot.lane.b32.xlu0 %v665, 56
      %v1553 = vpop.permute.xlu0 %1552
      %1554 = vrot.lane.b32.xlu0 %v666, 56
      %v1555 = vpop.permute.xlu0 %1554
      %1556 = vrot.lane.b32.xlu0 %v667, 56
      %v1557 = vpop.permute.xlu0 %1556
      %1558 = vrot.lane.b32.xlu0 %v668, 56
      %v1559 = vpop.permute.xlu0 %1558
      %1560 = vrot.lane.b32.xlu0 %v669, 56
      %v1561 = vpop.permute.xlu0 %1560
      %1562 = vrot.lane.b32.xlu0 %v670, 56
      %v1563 = vpop.permute.xlu0 %1562
      %1564 = vrot.lane.b32.xlu0 %v671, 56
      %v1565 = vpop.permute.xlu0 %1564
      %1566 = vrot.lane.b32.xlu0 %v672, 56
      %v1567 = vpop.permute.xlu0 %1566
      %1568 = vrot.lane.b32.xlu0 %v673, 56
      %v1569 = vpop.permute.xlu0 %1568
      %1634 = vrot.lane.b32.xlu0 %v674, 64
      %v1635 = vpop.permute.xlu0 %1634
      %1636 = vrot.lane.b32.xlu0 %v675, 64
      %v1637 = vpop.permute.xlu0 %1636
      %1638 = vrot.lane.b32.xlu0 %v676, 64
      %v1639 = vpop.permute.xlu0 %1638
      %1640 = vrot.lane.b32.xlu0 %v677, 64
      %v1641 = vpop.permute.xlu0 %1640
      %1642 = vrot.lane.b32.xlu0 %v678, 64
      %v1643 = vpop.permute.xlu0 %1642
      %1644 = vrot.lane.b32.xlu0 %v679, 64
      %v1645 = vpop.permute.xlu0 %1644
      %1646 = vrot.lane.b32.xlu0 %v680, 64
      %v1647 = vpop.permute.xlu0 %1646
      %1648 = vrot.lane.b32.xlu0 %v681, 64
      %v1649 = vpop.permute.xlu0 %1648
      %1650 = vrot.lane.b32.xlu0 %v682, 64
      %v1651 = vpop.permute.xlu0 %1650
      %1652 = vrot.lane.b32.xlu0 %v683, 64
      %v1653 = vpop.permute.xlu0 %1652
      %1654 = vrot.lane.b32.xlu0 %v684, 64
      %v1655 = vpop.permute.xlu0 %1654
      %1656 = vrot.lane.b32.xlu0 %v685, 64
      %v1657 = vpop.permute.xlu0 %1656
      %1658 = vrot.lane.b32.xlu0 %v686, 64
      %v1659 = vpop.permute.xlu0 %1658
      %1660 = vrot.lane.b32.xlu0 %v687, 64
      %v1661 = vpop.permute.xlu0 %1660
      %1662 = vrot.lane.b32.xlu0 %v688, 64
      %v1663 = vpop.permute.xlu0 %1662
      %1664 = vrot.lane.b32.xlu0 %v689, 64
      %v1665 = vpop.permute.xlu0 %1664
      %1666 = vrot.lane.b32.xlu0 %v690, 64
      %v1667 = vpop.permute.xlu0 %1666
      %1668 = vrot.lane.b32.xlu0 %v691, 64
      %v1669 = vpop.permute.xlu0 %1668
      %1670 = vrot.lane.b32.xlu0 %v692, 64
      %v1671 = vpop.permute.xlu0 %1670
      %1672 = vrot.lane.b32.xlu0 %v693, 64
      %v1673 = vpop.permute.xlu0 %1672
      %1674 = vrot.lane.b32.xlu0 %v694, 64
      %v1675 = vpop.permute.xlu0 %1674
      %1676 = vrot.lane.b32.xlu0 %v695, 64
      %v1677 = vpop.permute.xlu0 %1676
      %1678 = vrot.lane.b32.xlu0 %v696, 64
      %v1679 = vpop.permute.xlu0 %1678
      %1680 = vrot.lane.b32.xlu0 %v697, 64
      %v1681 = vpop.permute.xlu0 %1680
      %1682 = vrot.lane.b32.xlu0 %v698, 64
      %v1683 = vpop.permute.xlu0 %1682
      %1684 = vrot.lane.b32.xlu0 %v699, 64
      %v1685 = vpop.permute.xlu0 %1684
      %1686 = vrot.lane.b32.xlu0 %v700, 64
      %v1687 = vpop.permute.xlu0 %1686
      %1688 = vrot.lane.b32.xlu0 %v701, 64
      %v1689 = vpop.permute.xlu0 %1688
      %1690 = vrot.lane.b32.xlu0 %v702, 64
      %v1691 = vpop.permute.xlu0 %1690
      %1692 = vrot.lane.b32.xlu0 %v703, 64
      %v1693 = vpop.permute.xlu0 %1692
      %1694 = vrot.lane.b32.xlu0 %v704, 64
      %v1695 = vpop.permute.xlu0 %1694
      %1696 = vrot.lane.b32.xlu0 %v705, 64
      %v1697 = vpop.permute.xlu0 %1696
      %v1730 = vsel %vm328, %v417, %v739
      %v1731 = vsel %vm328, %v418, %v741
      %v1732 = vsel %vm328, %v419, %v743
      %v1733 = vsel %vm328, %v420, %v745
      %v1734 = vsel %vm328, %v421, %v747
      %v1735 = vsel %vm328, %v422, %v749
      %v1736 = vsel %vm328, %v423, %v751
      %v1737 = vsel %vm328, %v424, %v753
      %v1738 = vsel %vm328, %v425, %v755
      %v1739 = vsel %vm328, %v426, %v757
      %v1740 = vsel %vm328, %v427, %v759
      %v1741 = vsel %vm328, %v428, %v761
      %v1742 = vsel %vm328, %v429, %v763
      %v1743 = vsel %vm328, %v430, %v765
      %v1744 = vsel %vm328, %v431, %v767
      %v1745 = vsel %vm328, %v432, %v769
      %v1746 = vsel %vm328, %v433, %v771
      %v1747 = vsel %vm328, %v434, %v773
      %v1748 = vsel %vm328, %v435, %v775
      %v1749 = vsel %vm328, %v436, %v777
      %v1750 = vsel %vm328, %v437, %v779
      %v1751 = vsel %vm328, %v438, %v781
      %v1752 = vsel %vm328, %v439, %v783
      %v1753 = vsel %vm328, %v440, %v785
      %v1754 = vsel %vm328, %v441, %v787
      %v1755 = vsel %vm328, %v442, %v789
      %v1756 = vsel %vm328, %v443, %v791
      %v1757 = vsel %vm328, %v444, %v793
      %v1758 = vsel %vm328, %v445, %v795
      %v1759 = vsel %vm328, %v446, %v797
      %v1760 = vsel %vm328, %v447, %v799
      %v1761 = vsel %vm328, %v448, %v801
      %vm1762 = vcmask 130048
      %v1763 = vsel %vm1762, %v1730, %v867
      %v1764 = vsel %vm1762, %v1731, %v869
      %v1765 = vsel %vm1762, %v1732, %v871
      %v1766 = vsel %vm1762, %v1733, %v873
      %v1767 = vsel %vm1762, %v1734, %v875
      %v1768 = vsel %vm1762, %v1735, %v877
      %v1769 = vsel %vm1762, %v1736, %v879
      %v1770 = vsel %vm1762, %v1737, %v881
      %v1771 = vsel %vm1762, %v1738, %v883
      %v1772 = vsel %vm1762, %v1739, %v885
      %v1773 = vsel %vm1762, %v1740, %v887
      %v1774 = vsel %vm1762, %v1741, %v889
      %v1775 = vsel %vm1762, %v1742, %v891
      %v1776 = vsel %vm1762, %v1743, %v893
      %v1777 = vsel %vm1762, %v1744, %v895
      %v1778 = vsel %vm1762, %v1745, %v897
      %v1779 = vsel %vm1762, %v1746, %v899
      %v1780 = vsel %vm1762, %v1747, %v901
      %v1781 = vsel %vm1762, %v1748, %v903
      %v1782 = vsel %vm1762, %v1749, %v905
      %v1783 = vsel %vm1762, %v1750, %v907
      %v1784 = vsel %vm1762, %v1751, %v909
      %v1785 = vsel %vm1762, %v1752, %v911
      %v1786 = vsel %vm1762, %v1753, %v913
      %v1787 = vsel %vm1762, %v1754, %v915
      %v1788 = vsel %vm1762, %v1755, %v917
      %v1789 = vsel %vm1762, %v1756, %v919
      %v1790 = vsel %vm1762, %v1757, %v921
      %v1791 = vsel %vm1762, %v1758, %v923
      %v1792 = vsel %vm1762, %v1759, %v925
      %v1793 = vsel %vm1762, %v1760, %v927
      %v1794 = vsel %vm1762, %v1761, %v929
      %vm1795 = vcmask 195584
      %v1796 = vsel %vm1795, %v1763, %v995
      %v1797 = vsel %vm1795, %v1764, %v997
      %v1798 = vsel %vm1795, %v1765, %v999
      %v1799 = vsel %vm1795, %v1766, %v1001
      %v1800 = vsel %vm1795, %v1767, %v1003
      %v1801 = vsel %vm1795, %v1768, %v1005
      %v1802 = vsel %vm1795, %v1769, %v1007
      %v1803 = vsel %vm1795, %v1770, %v1009
      %v1804 = vsel %vm1795, %v1771, %v1011
      %v1805 = vsel %vm1795, %v1772, %v1013
      %v1806 = vsel %vm1795, %v1773, %v1015
      %v1807 = vsel %vm1795, %v1774, %v1017
      %v1808 = vsel %vm1795, %v1775, %v1019
      %v1809 = vsel %vm1795, %v1776, %v1021
      %v1810 = vsel %vm1795, %v1777, %v1023
      %v1811 = vsel %vm1795, %v1778, %v1025
      %v1812 = vsel %vm1795, %v1779, %v1027
      %v1813 = vsel %vm1795, %v1780, %v1029
      %v1814 = vsel %vm1795, %v1781, %v1031
      %v1815 = vsel %vm1795, %v1782, %v1033
      %v1816 = vsel %vm1795, %v1783, %v1035
      %v1817 = vsel %vm1795, %v1784, %v1037
      %v1818 = vsel %vm1795, %v1785, %v1039
      %v1819 = vsel %vm1795, %v1786, %v1041
      %v1820 = vsel %vm1795, %v1787, %v1043
      %v1821 = vsel %vm1795, %v1788, %v1045
      %v1822 = vsel %vm1795, %v1789, %v1047
      %v1823 = vsel %vm1795, %v1790, %v1049
      %v1824 = vsel %vm1795, %v1791, %v1051
      %v1825 = vsel %vm1795, %v1792, %v1053
      %v1826 = vsel %vm1795, %v1793, %v1055
      %v1827 = vsel %vm1795, %v1794, %v1057
      %vm1828 = vcmask 261120
      %v1829 = vsel %vm1828, %v1796, %v1123
      %v1830 = vsel %vm1828, %v1797, %v1125
      %v1831 = vsel %vm1828, %v1798, %v1127
      %v1832 = vsel %vm1828, %v1799, %v1129
      %v1833 = vsel %vm1828, %v1800, %v1131
      %v1834 = vsel %vm1828, %v1801, %v1133
      %v1835 = vsel %vm1828, %v1802, %v1135
      %v1836 = vsel %vm1828, %v1803, %v1137
      %v1837 = vsel %vm1828, %v1804, %v1139
      %v1838 = vsel %vm1828, %v1805, %v1141
      %v1839 = vsel %vm1828, %v1806, %v1143
      %v1840 = vsel %vm1828, %v1807, %v1145
      %v1841 = vsel %vm1828, %v1808, %v1147
      %v1842 = vsel %vm1828, %v1809, %v1149
      %v1843 = vsel %vm1828, %v1810, %v1151
      %v1844 = vsel %vm1828, %v1811, %v1153
      %v1845 = vsel %vm1828, %v1812, %v1155
      %v1846 = vsel %vm1828, %v1813, %v1157
      %v1847 = vsel %vm1828, %v1814, %v1159
      %v1848 = vsel %vm1828, %v1815, %v1161
      %v1849 = vsel %vm1828, %v1816, %v1163
      %v1850 = vsel %vm1828, %v1817, %v1165
      %v1851 = vsel %vm1828, %v1818, %v1167
      %v1852 = vsel %vm1828, %v1819, %v1169
      %v1853 = vsel %vm1828, %v1820, %v1171
      %v1854 = vsel %vm1828, %v1821, %v1173
      %v1855 = vsel %vm1828, %v1822, %v1175
      %v1856 = vsel %vm1828, %v1823, %v1177
      %v1857 = vsel %vm1828, %v1824, %v1179
      %v1858 = vsel %vm1828, %v1825, %v1181
      %v1859 = vsel %vm1828, %v1826, %v1183
      %v1860 = vsel %vm1828, %v1827, %v1185
      %vm1861 = vcmask 326656
      %v1862 = vsel %vm1861, %v1829, %v1251
      %v1863 = vsel %vm1861, %v1830, %v1253
      %v1864 = vsel %vm1861, %v1831, %v1255
      %v1865 = vsel %vm1861, %v1832, %v1257
      %v1866 = vsel %vm1861, %v1833, %v1259
      %v1867 = vsel %vm1861, %v1834, %v1261
      %v1868 = vsel %vm1861, %v1835, %v1263
      %v1869 = vsel %vm1861, %v1836, %v1265
      %v1870 = vsel %vm1861, %v1837, %v1267
      %v1871 = vsel %vm1861, %v1838, %v1269
      %v1872 = vsel %vm1861, %v1839, %v1271
      %v1873 = vsel %vm1861, %v1840, %v1273
      %v1874 = vsel %vm1861, %v1841, %v1275
      %v1875 = vsel %vm1861, %v1842, %v1277
      %v1876 = vsel %vm1861, %v1843, %v1279
      %v1877 = vsel %vm1861, %v1844, %v1281
      %v1878 = vsel %vm1861, %v1845, %v1283
      %v1879 = vsel %vm1861, %v1846, %v1285
      %v1880 = vsel %vm1861, %v1847, %v1287
      %v1881 = vsel %vm1861, %v1848, %v1289
      %v1882 = vsel %vm1861, %v1849, %v1291
      %v1883 = vsel %vm1861, %v1850, %v1293
      %v1884 = vsel %vm1861, %v1851, %v1295
      %v1885 = vsel %vm1861, %v1852, %v1297
      %v1886 = vsel %vm1861, %v1853, %v1299
      %v1887 = vsel %vm1861, %v1854, %v1301
      %v1888 = vsel %vm1861, %v1855, %v1303
      %v1889 = vsel %vm1861, %v1856, %v1305
      %v1890 = vsel %vm1861, %v1857, %v1307
      %v1891 = vsel %vm1861, %v1858, %v1309
      %v1892 = vsel %vm1861, %v1859, %v1311
      %v1893 = vsel %vm1861, %v1860, %v1313
      %vm1894 = vcmask 392192
      %v1895 = vsel %vm1894, %v1862, %v1379
      %v1896 = vsel %vm1894, %v1863, %v1381
      %v1897 = vsel %vm1894, %v1864, %v1383
      %v1898 = vsel %vm1894, %v1865, %v1385
      %v1899 = vsel %vm1894, %v1866, %v1387
      %v1900 = vsel %vm1894, %v1867, %v1389
      %v1901 = vsel %vm1894, %v1868, %v1391
      %v1902 = vsel %vm1894, %v1869, %v1393
      %v1903 = vsel %vm1894, %v1870, %v1395
      %v1904 = vsel %vm1894, %v1871, %v1397
      %v1905 = vsel %vm1894, %v1872, %v1399
      %v1906 = vsel %vm1894, %v1873, %v1401
      %v1907 = vsel %vm1894, %v1874, %v1403
      %v1908 = vsel %vm1894, %v1875, %v1405
      %v1909 = vsel %vm1894, %v1876, %v1407
      %v1910 = vsel %vm1894, %v1877, %v1409
      %v1911 = vsel %vm1894, %v1878, %v1411
      %v1912 = vsel %vm1894, %v1879, %v1413
      %v1913 = vsel %vm1894, %v1880, %v1415
      %v1914 = vsel %vm1894, %v1881, %v1417
      %v1915 = vsel %vm1894, %v1882, %v1419
      %v1916 = vsel %vm1894, %v1883, %v1421
      %v1917 = vsel %vm1894, %v1884, %v1423
      %v1918 = vsel %vm1894, %v1885, %v1425
      %v1919 = vsel %vm1894, %v1886, %v1427
      %v1920 = vsel %vm1894, %v1887, %v1429
      %v1921 = vsel %vm1894, %v1888, %v1431
      %v1922 = vsel %vm1894, %v1889, %v1433
      %v1923 = vsel %vm1894, %v1890, %v1435
      %v1924 = vsel %vm1894, %v1891, %v1437
      %v1925 = vsel %vm1894, %v1892, %v1439
      %v1926 = vsel %vm1894, %v1893, %v1441
      %vm1927 = vcmask 457728
      %v1928 = vsel %vm1927, %v1895, %v1507
      %v1929 = vsel %vm1927, %v1896, %v1509
      %v1930 = vsel %vm1927, %v1897, %v1511
      %v1931 = vsel %vm1927, %v1898, %v1513
      %v1932 = vsel %vm1927, %v1899, %v1515
      %v1933 = vsel %vm1927, %v1900, %v1517
      %v1934 = vsel %vm1927, %v1901, %v1519
      %v1935 = vsel %vm1927, %v1902, %v1521
      %v1936 = vsel %vm1927, %v1903, %v1523
      %v1937 = vsel %vm1927, %v1904, %v1525
      %v1938 = vsel %vm1927, %v1905, %v1527
      %v1939 = vsel %vm1927, %v1906, %v1529
      %v1940 = vsel %vm1927, %v1907, %v1531
      %v1941 = vsel %vm1927, %v1908, %v1533
      %v1942 = vsel %vm1927, %v1909, %v1535
      %v1943 = vsel %vm1927, %v1910, %v1537
      %v1944 = vsel %vm1927, %v1911, %v1539
      %v1945 = vsel %vm1927, %v1912, %v1541
      %v1946 = vsel %vm1927, %v1913, %v1543
      %v1947 = vsel %vm1927, %v1914, %v1545
      %v1948 = vsel %vm1927, %v1915, %v1547
      %v1949 = vsel %vm1927, %v1916, %v1549
      %v1950 = vsel %vm1927, %v1917, %v1551
      %v1951 = vsel %vm1927, %v1918, %v1553
      %v1952 = vsel %vm1927, %v1919, %v1555
      %v1953 = vsel %vm1927, %v1920, %v1557
      %v1954 = vsel %vm1927, %v1921, %v1559
      %v1955 = vsel %vm1927, %v1922, %v1561
      %v1956 = vsel %vm1927, %v1923, %v1563
      %v1957 = vsel %vm1927, %v1924, %v1565
      %v1958 = vsel %vm1927, %v1925, %v1567
      %v1959 = vsel %vm1927, %v1926, %v1569
      %vm1960 = vcmask 523264
      %v1961 = vsel %vm1960, %v1928, %v1635
      %v1962 = vsel %vm1960, %v1929, %v1637
      %v1963 = vsel %vm1960, %v1930, %v1639
      %v1964 = vsel %vm1960, %v1931, %v1641
      %v1965 = vsel %vm1960, %v1932, %v1643
      %v1966 = vsel %vm1960, %v1933, %v1645
      %v1967 = vsel %vm1960, %v1934, %v1647
      %v1968 = vsel %vm1960, %v1935, %v1649
      %v1969 = vsel %vm1960, %v1936, %v1651
      %v1970 = vsel %vm1960, %v1937, %v1653
      %v1971 = vsel %vm1960, %v1938, %v1655
      %v1972 = vsel %vm1960, %v1939, %v1657
      %v1973 = vsel %vm1960, %v1940, %v1659
      %v1974 = vsel %vm1960, %v1941, %v1661
      %v1975 = vsel %vm1960, %v1942, %v1663
      %v1976 = vsel %vm1960, %v1943, %v1665
      %v1977 = vsel %vm1960, %v1944, %v1667
      %v1978 = vsel %vm1960, %v1945, %v1669
      %v1979 = vsel %vm1960, %v1946, %v1671
      %v1980 = vsel %vm1960, %v1947, %v1673
      %v1981 = vsel %vm1960, %v1948, %v1675
      %v1982 = vsel %vm1960, %v1949, %v1677
      %v1983 = vsel %vm1960, %v1950, %v1679
      %v1984 = vsel %vm1960, %v1951, %v1681
      %v1985 = vsel %vm1960, %v1952, %v1683
      %v1986 = vsel %vm1960, %v1953, %v1685
      %v1987 = vsel %vm1960, %v1954, %v1687
      %v1988 = vsel %vm1960, %v1955, %v1689
      %v1989 = vsel %vm1960, %v1956, %v1691
      %v1990 = vsel %vm1960, %v1957, %v1693
      %v1991 = vsel %vm1960, %v1958, %v1695
      %v1992 = vsel %vm1960, %v1959, %v1697
      %v1993 = vld [vmem:[%s3] sm:$0xff]
      %v1994 = vld [vmem:[%s3 + $0x8] sm:$0xff]
      %v1995 = vld [vmem:[%s3 + $0x10] sm:$0xff]
      %v1996 = vld [vmem:[%s3 + $0x18] sm:$0xff]
      %v1997 = vld [vmem:[%s3 + $0x20] sm:$0xff]
      %v1998 = vld [vmem:[%s3 + $0x28] sm:$0xff]
      %v1999 = vld [vmem:[%s3 + $0x30] sm:$0xff]
      %v2000 = vld [vmem:[%s3 + $0x38] sm:$0xff]
      %v2001 = vld [vmem:[%s3 + $0x40] sm:$0xff]
      %v2002 = vld [vmem:[%s4] sm:$0x1]
      %v2004 = vperm.slane %v2002, 0
      %vm2006 = vcmask 588800
      %v2008 = vsel %vm2006, %v1961, 0
      %v2011 = vsel %vm2006, %v1962, 0
      %v2014 = vsel %vm2006, %v1963, 0
      %v2017 = vsel %vm2006, %v1964, 0
      %v2020 = vsel %vm2006, %v1965, 0
      %v2023 = vsel %vm2006, %v1966, 0
      %v2026 = vsel %vm2006, %v1967, 0
      %v2029 = vsel %vm2006, %v1968, 0
      %v2032 = vsel %vm2006, %v1969, 0
      %v2035 = vsel %vm2006, %v1970, 0
      %v2038 = vsel %vm2006, %v1971, 0
      %v2041 = vsel %vm2006, %v1972, 0
      %v2044 = vsel %vm2006, %v1973, 0
      %v2047 = vsel %vm2006, %v1974, 0
      %v2050 = vsel %vm2006, %v1975, 0
      %v2053 = vsel %vm2006, %v1976, 0
      %v2056 = vsel %vm2006, %v1977, 0
      %v2059 = vsel %vm2006, %v1978, 0
      %v2062 = vsel %vm2006, %v1979, 0
      %v2065 = vsel %vm2006, %v1980, 0
      %v2068 = vsel %vm2006, %v1981, 0
      %v2071 = vsel %vm2006, %v1982, 0
      %v2074 = vsel %vm2006, %v1983, 0
      %v2077 = vsel %vm2006, %v1984, 0
      %v2080 = vsel %vm2006, %v1985, 0
      %v2083 = vsel %vm2006, %v1986, 0
      %v2086 = vsel %vm2006, %v1987, 0
      %v2089 = vsel %vm2006, %v1988, 0
      %v2092 = vsel %vm2006, %v1989, 0
      %v2095 = vsel %vm2006, %v1990, 0
      %v2098 = vsel %vm2006, %v1991, 0
      %v2101 = vsel %vm2006, %v1992, 0
      %2103 = vmatpush.msra.mxu0 0.0
      %2104 = vmatpush.msra.mxu0 0.0
      %2105 = vmatpush.msra.mxu0 0.0
      %2106 = vmatpush.msra.mxu0 0.0
      %2107 = vmatpush.msra.mxu0 0.0
      %2108 = vmatpush.msra.mxu0 0.0
      %2109 = vmatpush.msra.mxu0 0.0
      %2110 = vmatpush.msra.mxu0 %v2001
      %2111 = vmatpush.msra.mxu0 %v2000
      %2112 = vmatpush.msra.mxu0 %v1999
      %2113 = vmatpush.msra.mxu0 %v1998
      %2114 = vmatpush.msra.mxu0 %v1997
      %2115 = vmatpush.msra.mxu0 %v1996
      %2116 = vmatpush.msra.mxu0 %v1995
      %2117 = vmatpush.msra.mxu0 %v1994
      %2118 = vmatpush.msra.mxu0 %v1993
      %2119 = vmatmul.f32.gmra.mxu0 %v2008
      %v2120 = vpop.f32.mrf.mxu0
      %v2121 = vadd.f32 %v2004, %v2120
      %2122 = vmatmul.f32.gmra.mxu0 %v2011
      %v2123 = vpop.f32.mrf.mxu0
      %v2124 = vadd.f32 %v2004, %v2123
      %2125 = vmatmul.f32.gmra.mxu0 %v2014
      %v2126 = vpop.f32.mrf.mxu0
      %v2127 = vadd.f32 %v2004, %v2126
      %2128 = vmatmul.f32.gmra.mxu0 %v2017
      %v2129 = vpop.f32.mrf.mxu0
      %v2130 = vadd.f32 %v2004, %v2129
      %2131 = vmatmul.f32.gmra.mxu0 %v2020
      %v2132 = vpop.f32.mrf.mxu0
      %v2133 = vadd.f32 %v2004, %v2132
      %2134 = vmatmul.f32.gmra.mxu0 %v2023
      %v2135 = vpop.f32.mrf.mxu0
      %v2136 = vadd.f32 %v2004, %v2135
      %2137 = vmatmul.f32.gmra.mxu0 %v2026
      %v2138 = vpop.f32.mrf.mxu0
      %v2139 = vadd.f32 %v2004, %v2138
      %2140 = vmatmul.f32.gmra.mxu0 %v2029
      %v2141 = vpop.f32.mrf.mxu0
      %v2142 = vadd.f32 %v2004, %v2141
      %2143 = vmatmul.f32.gmra.mxu0 %v2032
      %v2144 = vpop.f32.mrf.mxu0
      %v2145 = vadd.f32 %v2004, %v2144
      %2146 = vmatmul.f32.gmra.mxu0 %v2035
      %v2147 = vpop.f32.mrf.mxu0
      %v2148 = vadd.f32 %v2004, %v2147
      %2149 = vmatmul.f32.gmra.mxu0 %v2038
      %v2150 = vpop.f32.mrf.mxu0
      %v2151 = vadd.f32 %v2004, %v2150
      %2152 = vmatmul.f32.gmra.mxu0 %v2041
      %v2153 = vpop.f32.mrf.mxu0
      %v2154 = vadd.f32 %v2004, %v2153
      %2155 = vmatmul.f32.gmra.mxu0 %v2044
      %v2156 = vpop.f32.mrf.mxu0
      %v2157 = vadd.f32 %v2004, %v2156
      %2158 = vmatmul.f32.gmra.mxu0 %v2047
      %v2159 = vpop.f32.mrf.mxu0
      %v2160 = vadd.f32 %v2004, %v2159
      %2161 = vmatmul.f32.gmra.mxu0 %v2050
      %v2162 = vpop.f32.mrf.mxu0
      %v2163 = vadd.f32 %v2004, %v2162
      %2164 = vmatmul.f32.gmra.mxu0 %v2053
      %v2165 = vpop.f32.mrf.mxu0
      %v2166 = vadd.f32 %v2004, %v2165
      %2167 = vmatmul.f32.gmra.mxu0 %v2056
      %v2168 = vpop.f32.mrf.mxu0
      %v2169 = vadd.f32 %v2004, %v2168
      %2170 = vmatmul.f32.gmra.mxu0 %v2059
      %v2171 = vpop.f32.mrf.mxu0
      %v2172 = vadd.f32 %v2004, %v2171
      %2173 = vmatmul.f32.gmra.mxu0 %v2062
      %v2174 = vpop.f32.mrf.mxu0
      %v2175 = vadd.f32 %v2004, %v2174
      %2176 = vmatmul.f32.gmra.mxu0 %v2065
      %v2177 = vpop.f32.mrf.mxu0
      %v2178 = vadd.f32 %v2004, %v2177
      %2179 = vmatmul.f32.gmra.mxu0 %v2068
      %v2180 = vpop.f32.mrf.mxu0
      %v2181 = vadd.f32 %v2004, %v2180
      %2182 = vmatmul.f32.gmra.mxu0 %v2071
      %v2183 = vpop.f32.mrf.mxu0
      %v2184 = vadd.f32 %v2004, %v2183
      %2185 = vmatmul.f32.gmra.mxu0 %v2074
      %v2186 = vpop.f32.mrf.mxu0
      %v2187 = vadd.f32 %v2004, %v2186
      %2188 = vmatmul.f32.gmra.mxu0 %v2077
      %v2189 = vpop.f32.mrf.mxu0
      %v2190 = vadd.f32 %v2004, %v2189
      %2191 = vmatmul.f32.gmra.mxu0 %v2080
      %v2192 = vpop.f32.mrf.mxu0
      %v2193 = vadd.f32 %v2004, %v2192
      %2194 = vmatmul.f32.gmra.mxu0 %v2083
      %v2195 = vpop.f32.mrf.mxu0
      %v2196 = vadd.f32 %v2004, %v2195
      %2197 = vmatmul.f32.gmra.mxu0 %v2086
      %v2198 = vpop.f32.mrf.mxu0
      %v2199 = vadd.f32 %v2004, %v2198
      %2200 = vmatmul.f32.gmra.mxu0 %v2089
      %v2201 = vpop.f32.mrf.mxu0
      %v2202 = vadd.f32 %v2004, %v2201
      %2203 = vmatmul.f32.gmra.mxu0 %v2092
      %v2204 = vpop.f32.mrf.mxu0
      %v2205 = vadd.f32 %v2004, %v2204
      %2206 = vmatmul.f32.gmra.mxu0 %v2095
      %v2207 = vpop.f32.mrf.mxu0
      %v2208 = vadd.f32 %v2004, %v2207
      %2209 = vmatmul.f32.gmra.mxu0 %v2098
      %v2210 = vpop.f32.mrf.mxu0
      %v2211 = vadd.f32 %v2004, %v2210
      %2212 = vmatmul.f32.gmra.mxu0 %v2101
      %v2213 = vpop.f32.mrf.mxu0
      %v2214 = vadd.f32 %v2004, %v2213
      %2215 = vdwg.mxu0
      %2216 = vst.msk [vmem:[%s289] sm:$0xff] %vm328, %v2121
      %2217 = vst.msk [vmem:[%s289 + $0x8] sm:$0xff] %vm328, %v2124
      %2218 = vst.msk [vmem:[%s289 + $0x10] sm:$0xff] %vm328, %v2127
      %2219 = vst.msk [vmem:[%s289 + $0x18] sm:$0xff] %vm328, %v2130
      %2220 = vst.msk [vmem:[%s289 + $0x20] sm:$0xff] %vm328, %v2133
      %2221 = vst.msk [vmem:[%s289 + $0x28] sm:$0xff] %vm328, %v2136
      %2222 = vst.msk [vmem:[%s289 + $0x30] sm:$0xff] %vm328, %v2139
      %2223 = vst.msk [vmem:[%s289 + $0x38] sm:$0xff] %vm328, %v2142
      %2224 = vst.msk [vmem:[%s289 + $0x40] sm:$0xff] %vm328, %v2145
      %2225 = vst.msk [vmem:[%s289 + $0x48] sm:$0xff] %vm328, %v2148
      %2226 = vst.msk [vmem:[%s289 + $0x50] sm:$0xff] %vm328, %v2151
      %2227 = vst.msk [vmem:[%s289 + $0x58] sm:$0xff] %vm328, %v2154
      %2228 = vst.msk [vmem:[%s289 + $0x60] sm:$0xff] %vm328, %v2157
      %2229 = vst.msk [vmem:[%s289 + $0x68] sm:$0xff] %vm328, %v2160
      %2230 = vst.msk [vmem:[%s289 + $0x70] sm:$0xff] %vm328, %v2163
      %2231 = vst.msk [vmem:[%s289 + $0x78] sm:$0xff] %vm328, %v2166
      %2232 = vst.msk [vmem:[%s289 + $0x80] sm:$0xff] %vm328, %v2169
      %2233 = vst.msk [vmem:[%s289 + $0x88] sm:$0xff] %vm328, %v2172
      %2234 = vst.msk [vmem:[%s289 + $0x90] sm:$0xff] %vm328, %v2175
      %2235 = vst.msk [vmem:[%s289 + $0x98] sm:$0xff] %vm328, %v2178
      %2236 = vst.msk [vmem:[%s289 + $0xa0] sm:$0xff] %vm328, %v2181
      %2237 = vst.msk [vmem:[%s289 + $0xa8] sm:$0xff] %vm328, %v2184
      %2238 = vst.msk [vmem:[%s289 + $0xb0] sm:$0xff] %vm328, %v2187
      %2239 = vst.msk [vmem:[%s289 + $0xb8] sm:$0xff] %vm328, %v2190
      %2240 = vst.msk [vmem:[%s289 + $0xc0] sm:$0xff] %vm328, %v2193
      %2241 = vst.msk [vmem:[%s289 + $0xc8] sm:$0xff] %vm328, %v2196
      %2242 = vst.msk [vmem:[%s289 + $0xd0] sm:$0xff] %vm328, %v2199
      %2243 = vst.msk [vmem:[%s289 + $0xd8] sm:$0xff] %vm328, %v2202
      %2244 = vst.msk [vmem:[%s289 + $0xe0] sm:$0xff] %vm328, %v2205
      %2245 = vst.msk [vmem:[%s289 + $0xe8] sm:$0xff] %vm328, %v2208
      %2246 = vst.msk [vmem:[%s289 + $0xf0] sm:$0xff] %vm328, %v2211
      %2247 = vst.msk [vmem:[%s289 + $0xf8] sm:$0xff] %vm328, %v2214
      %v2248 = vsel %vm328, %v2121, 0.0
      %v2249 = vsel %vm328, %v2124, 0.0
      %v2250 = vadd.f32 %v2248, %v2249
      %v2251 = vsel %vm328, %v2127, 0.0
      %v2252 = vadd.f32 %v2250, %v2251
      %v2253 = vsel %vm328, %v2130, 0.0
      %v2254 = vadd.f32 %v2252, %v2253
      %v2255 = vsel %vm328, %v2133, 0.0
      %v2256 = vadd.f32 %v2254, %v2255
      %v2257 = vsel %vm328, %v2136, 0.0
      %v2258 = vadd.f32 %v2256, %v2257
      %v2259 = vsel %vm328, %v2139, 0.0
      %v2260 = vadd.f32 %v2258, %v2259
      %v2261 = vsel %vm328, %v2142, 0.0
      %v2262 = vadd.f32 %v2260, %v2261
      %v2263 = vsel %vm328, %v2145, 0.0
      %v2264 = vadd.f32 %v2262, %v2263
      %v2265 = vsel %vm328, %v2148, 0.0
      %v2266 = vadd.f32 %v2264, %v2265
      %v2267 = vsel %vm328, %v2151, 0.0
      %v2268 = vadd.f32 %v2266, %v2267
      %v2269 = vsel %vm328, %v2154, 0.0
      %v2270 = vadd.f32 %v2268, %v2269
      %v2271 = vsel %vm328, %v2157, 0.0
      %v2272 = vadd.f32 %v2270, %v2271
      %v2273 = vsel %vm328, %v2160, 0.0
      %v2274 = vadd.f32 %v2272, %v2273
      %v2275 = vsel %vm328, %v2163, 0.0
      %v2276 = vadd.f32 %v2274, %v2275
      %v2277 = vsel %vm328, %v2166, 0.0
      %v2278 = vadd.f32 %v2276, %v2277
      %v2279 = vsel %vm328, %v2169, 0.0
      %v2280 = vadd.f32 %v2278, %v2279
      %v2281 = vsel %vm328, %v2172, 0.0
      %v2282 = vadd.f32 %v2280, %v2281
      %v2283 = vsel %vm328, %v2175, 0.0
      %v2284 = vadd.f32 %v2282, %v2283
      %v2285 = vsel %vm328, %v2178, 0.0
      %v2286 = vadd.f32 %v2284, %v2285
      %v2287 = vsel %vm328, %v2181, 0.0
      %v2288 = vadd.f32 %v2286, %v2287
      %v2289 = vsel %vm328, %v2184, 0.0
      %v2290 = vadd.f32 %v2288, %v2289
      %v2291 = vsel %vm328, %v2187, 0.0
      %v2292 = vadd.f32 %v2290, %v2291
      %v2293 = vsel %vm328, %v2190, 0.0
      %v2294 = vadd.f32 %v2292, %v2293
      %v2295 = vsel %vm328, %v2193, 0.0
      %v2296 = vadd.f32 %v2294, %v2295
      %v2297 = vsel %vm328, %v2196, 0.0
      %v2298 = vadd.f32 %v2296, %v2297
      %v2299 = vsel %vm328, %v2199, 0.0
      %v2300 = vadd.f32 %v2298, %v2299
      %v2301 = vsel %vm328, %v2202, 0.0
      %v2302 = vadd.f32 %v2300, %v2301
      %v2303 = vsel %vm328, %v2205, 0.0
      %v2304 = vadd.f32 %v2302, %v2303
      %v2305 = vsel %vm328, %v2208, 0.0
      %v2306 = vadd.f32 %v2304, %v2305
      %v2307 = vsel %vm328, %v2211, 0.0
      %v2308 = vadd.f32 %v2306, %v2307
      %v2309 = vsel %vm328, %v2214, 0.0
      %v2310 = vadd.f32 %v2308, %v2309
      %v2311 = vrot.slane %v2310, 4
      %v2312 = vadd.f32 %v2310, %v2311
      %v2313 = vrot.slane %v2312, 2
      %v2314 = vadd.f32 %v2312, %v2313
      %v2315 = vrot.slane %v2314, 1
      %v2316 = vadd.f32 %v2314, %v2315
      %vm2317 = vcmask 57344
      %2318 = vst.msk [vmem:[%s292] sm:$0x1] %vm2317, %v2316
      %v2319 = vmul.f32 %v2121, %v2121
      %v2320 = vmul.f32 %v2124, %v2124
      %v2321 = vmul.f32 %v2127, %v2127
      %v2322 = vmul.f32 %v2130, %v2130
      %v2323 = vmul.f32 %v2133, %v2133
      %v2324 = vmul.f32 %v2136, %v2136
      %v2325 = vmul.f32 %v2139, %v2139
      %v2326 = vmul.f32 %v2142, %v2142
      %v2327 = vmul.f32 %v2145, %v2145
      %v2328 = vmul.f32 %v2148, %v2148
      %v2329 = vmul.f32 %v2151, %v2151
      %v2330 = vmul.f32 %v2154, %v2154
      %v2331 = vmul.f32 %v2157, %v2157
      %v2332 = vmul.f32 %v2160, %v2160
      %v2333 = vmul.f32 %v2163, %v2163
      %v2334 = vmul.f32 %v2166, %v2166
      %v2335 = vmul.f32 %v2169, %v2169
      %v2336 = vmul.f32 %v2172, %v2172
      %v2337 = vmul.f32 %v2175, %v2175
      %v2338 = vmul.f32 %v2178, %v2178
      %v2339 = vmul.f32 %v2181, %v2181
      %v2340 = vmul.f32 %v2184, %v2184
      %v2341 = vmul.f32 %v2187, %v2187
      %v2342 = vmul.f32 %v2190, %v2190
      %v2343 = vmul.f32 %v2193, %v2193
      %v2344 = vmul.f32 %v2196, %v2196
      %v2345 = vmul.f32 %v2199, %v2199
      %v2346 = vmul.f32 %v2202, %v2202
      %v2347 = vmul.f32 %v2205, %v2205
      %v2348 = vmul.f32 %v2208, %v2208
      %v2349 = vmul.f32 %v2211, %v2211
      %v2350 = vmul.f32 %v2214, %v2214
      %v2351 = vsel %vm328, %v2319, 0.0
      %v2352 = vsel %vm328, %v2320, 0.0
      %v2353 = vadd.f32 %v2351, %v2352
      %v2354 = vsel %vm328, %v2321, 0.0
      %v2355 = vadd.f32 %v2353, %v2354
      %v2356 = vsel %vm328, %v2322, 0.0
      %v2357 = vadd.f32 %v2355, %v2356
      %v2358 = vsel %vm328, %v2323, 0.0
      %v2359 = vadd.f32 %v2357, %v2358
      %v2360 = vsel %vm328, %v2324, 0.0
      %v2361 = vadd.f32 %v2359, %v2360
      %v2362 = vsel %vm328, %v2325, 0.0
      %v2363 = vadd.f32 %v2361, %v2362
      %v2364 = vsel %vm328, %v2326, 0.0
      %v2365 = vadd.f32 %v2363, %v2364
      %v2366 = vsel %vm328, %v2327, 0.0
      %v2367 = vadd.f32 %v2365, %v2366
      %v2368 = vsel %vm328, %v2328, 0.0
      %v2369 = vadd.f32 %v2367, %v2368
      %v2370 = vsel %vm328, %v2329, 0.0
      %v2371 = vadd.f32 %v2369, %v2370
      %v2372 = vsel %vm328, %v2330, 0.0
      %v2373 = vadd.f32 %v2371, %v2372
      %v2374 = vsel %vm328, %v2331, 0.0
      %v2375 = vadd.f32 %v2373, %v2374
      %v2376 = vsel %vm328, %v2332, 0.0
      %v2377 = vadd.f32 %v2375, %v2376
      %v2378 = vsel %vm328, %v2333, 0.0
      %v2379 = vadd.f32 %v2377, %v2378
      %v2380 = vsel %vm328, %v2334, 0.0
      %v2381 = vadd.f32 %v2379, %v2380
      %v2382 = vsel %vm328, %v2335, 0.0
      %v2383 = vadd.f32 %v2381, %v2382
      %v2384 = vsel %vm328, %v2336, 0.0
      %v2385 = vadd.f32 %v2383, %v2384
      %v2386 = vsel %vm328, %v2337, 0.0
      %v2387 = vadd.f32 %v2385, %v2386
      %v2388 = vsel %vm328, %v2338, 0.0
      %v2389 = vadd.f32 %v2387, %v2388
      %v2390 = vsel %vm328, %v2339, 0.0
      %v2391 = vadd.f32 %v2389, %v2390
      %v2392 = vsel %vm328, %v2340, 0.0
      %v2393 = vadd.f32 %v2391, %v2392
      %v2394 = vsel %vm328, %v2341, 0.0
      %v2395 = vadd.f32 %v2393, %v2394
      %v2396 = vsel %vm328, %v2342, 0.0
      %v2397 = vadd.f32 %v2395, %v2396
      %v2398 = vsel %vm328, %v2343, 0.0
      %v2399 = vadd.f32 %v2397, %v2398
      %v2400 = vsel %vm328, %v2344, 0.0
      %v2401 = vadd.f32 %v2399, %v2400
      %v2402 = vsel %vm328, %v2345, 0.0
      %v2403 = vadd.f32 %v2401, %v2402
      %v2404 = vsel %vm328, %v2346, 0.0
      %v2405 = vadd.f32 %v2403, %v2404
      %v2406 = vsel %vm328, %v2347, 0.0
      %v2407 = vadd.f32 %v2405, %v2406
      %v2408 = vsel %vm328, %v2348, 0.0
      %v2409 = vadd.f32 %v2407, %v2408
      %v2410 = vsel %vm328, %v2349, 0.0
      %v2411 = vadd.f32 %v2409, %v2410
      %v2412 = vsel %vm328, %v2350, 0.0
      %v2413 = vadd.f32 %v2411, %v2412
      %v2414 = vrot.slane %v2413, 4
      %v2415 = vadd.f32 %v2413, %v2414
      %v2416 = vrot.slane %v2415, 2
      %v2417 = vadd.f32 %v2415, %v2416
      %v2418 = vrot.slane %v2417, 1
      %v2419 = vadd.f32 %v2417, %v2418
      %2420 = vst.msk [vmem:[%s295] sm:$0x1] %vm2317, %v2419
      %p2421 = scmp.lt.s32.totalorder %s19, 1
      %s2422 = scalar_select %p2421, %s19, 1
      %s2423 = smul.addr %s2422, 32
      %s2424 = smul.addr %s2423, 8
      %s2425 = scalar_lea.vmem %s5, %s2424
      %p2426 = scmp.lt.s32.totalorder %s19, 1
      %s2427 = scalar_select %p2426, %s19, 1
      %s2428 = scalar_lea.vmem %s6, %s2427
      %p2429 = scmp.lt.s32.totalorder %s19, 1
      %s2430 = scalar_select %p2429, %s19, 1
      %s2431 = scalar_lea.vmem %s7, %s2430
      // Predicated region
      $region41: #{upsampling_block_forward.5} parent=39 // pred_check
        %p2432 = pneg %p147
      $region42: #{upsampling_block_forward.5} parent=39 // pred_check_branch
        %2434 = sbr.rel (%p2432) target = $region44
      $region43: #{upsampling_block_forward.5} parent=39 // pred_region
        _
      $region44: #{upsampling_block_forward.5} parent=39 // pred_fallthru
        _
      // Predicated region
      $region45: #{upsampling_block_forward.5} parent=39 // pred_check
        %p2435 = pneg %p173
      $region46: #{upsampling_block_forward.5} parent=39 // pred_check_branch
        %2437 = sbr.rel (%p2435) target = $region48
      $region47: #{upsampling_block_forward.5} parent=39 // pred_region
        _
      $region48: #{upsampling_block_forward.5} parent=39 // pred_fallthru
        _
      // Predicated region
      $region49: #{upsampling_block_forward.5} parent=39 // pred_check
        %p2438 = pneg %p199
      $region50: #{upsampling_block_forward.5} parent=39 // pred_check_branch
        %2440 = sbr.rel (%p2438) target = $region52
      $region51: #{upsampling_block_forward.5} parent=39 // pred_region
        _
      $region52: #{upsampling_block_forward.5} parent=39 // pred_fallthru
        _
    $region40: #{upsampling_block_forward.5} parent=5 // pred_fallthru
      _
    %p2441 = scmp.le.s32.totalorder 2, %s14
    // Predicated region
    $region53: #{upsampling_block_forward.5} parent=5 // pred_check
      %p2442 = pneg %p2441
    $region54: #{upsampling_block_forward.5} parent=5 // pred_check_branch
      %2444 = sbr.rel (%p2442) target = $region56
    $region55: #{upsampling_block_forward.5} parent=5 // pred_region
      %s2445 = ssub.s32 %s14, 2
      // Predicated region
      $region57: #{upsampling_block_forward.5} parent=55 // pred_check
        %p2446 = pneg %p153
      $region58: #{upsampling_block_forward.5} parent=55 // pred_check_branch
        %2448 = sbr.rel (%p2446) target = $region60
      $region59: #{upsampling_block_forward.5} parent=55 // pred_region
        %p2449 = scmp.lt.s32.totalorder %s20, 1
        %s2450 = scalar_select %p2449, %s20, 1
        %s2451 = smul.addr %s2450, 32
        %s2452 = smul.addr %s2451, 8
        %s2453 = scalar_lea.vmem %s5, %s2452
      $region60: #{upsampling_block_forward.5} parent=55 // pred_fallthru
        _
      // Predicated region
      $region61: #{upsampling_block_forward.5} parent=55 // pred_check
        %p2454 = pneg %p179
      $region62: #{upsampling_block_forward.5} parent=55 // pred_check_branch
        %2456 = sbr.rel (%p2454) target = $region64
      $region63: #{upsampling_block_forward.5} parent=55 // pred_region
        %p2457 = scmp.lt.s32.totalorder %s20, 1
        %s2458 = scalar_select %p2457, %s20, 1
        %s2459 = scalar_lea.vmem %s6, %s2458
      $region64: #{upsampling_block_forward.5} parent=55 // pred_fallthru
        _
      // Predicated region
      $region65: #{upsampling_block_forward.5} parent=55 // pred_check
        %p2460 = pneg %p205
      $region66: #{upsampling_block_forward.5} parent=55 // pred_check_branch
        %2462 = sbr.rel (%p2460) target = $region68
      $region67: #{upsampling_block_forward.5} parent=55 // pred_region
        %p2463 = scmp.lt.s32.totalorder %s20, 1
        %s2464 = scalar_select %p2463, %s20, 1
        %s2465 = scalar_lea.vmem %s7, %s2464
      $region68: #{upsampling_block_forward.5} parent=55 // pred_fallthru
        _
    $region56: #{upsampling_block_forward.5} parent=5 // pred_fallthru
      _
  $region6: #{upsampling_block_forward.5} parent=0 // loop_footer
    %s18 = sadd.s32 1, %s14
  $region7: #{upsampling_block_forward.5} parent=0 // loop_footer_branch
    %13 = sbr.rel target = $region3
  $region8: #{upsampling_block_forward.5} parent=0 // loop_exit
    _

// kernel: upsampling_block_forward.7
$region0: #{upsampling_block_forward.7}
  #allocation0 [shape = 'u32[]', space=smem, size = 0x4, offset = 0x4, fixed_abs, tag = 'smem constant byte address 0x4 - core index']
  #allocation1 [shape = 'u32[72,128]{1,0:T(1,128)}', space=vmem, size = 0x9000, scoped, tag = 'internal scratch']
  %s0 = inlined_call_operand.vmem [shape: f32[2,16,128], index: 0, kind: input, shape index: {}]
  %s1 = inlined_call_operand.vmem [shape: f32[1,128], index: 1, kind: input, shape index: {}]
  %s2 = inlined_call_operand.vmem [shape: f32[1,128], index: 2, kind: input, shape index: {}]
  %s3 = inlined_call_operand.vmem [shape: f32[2,16,128], index: 3, kind: output, shape index: {}]
  %s4 = sld [smem:[#allocation0]]
  $region45: #{upsampling_block_forward.7} parent=0
    _
  %s6 = ssub.s32 1, %s4
  %s7 = scalar_select 0, %s6, %s4
  loop: start=0, step=1, limit=4
  $region2: #{upsampling_block_forward.7} parent=0 // loop_pre_header
    _
  $region3: #{upsampling_block_forward.7} parent=0 // loop_header
    %s9 = sphi 0, %s13
    %p10 = scmp.ge.s32.totalorder %s9, 4
    %s19 = sphi 0, %s21
    %s22 = sphi 0, %s19
    %s23 = sphi 0, %s22
    %s39 = sphi 0, %s23
    %s43 = sphi 0, %s43
    %s45 = sphi 0, %s43
    %s46 = sphi 0, %s45
    %s60 = sphi 0, %s46
    %s64 = sphi 0, %s64
    %s66 = sphi 0, %s64
    %s67 = sphi 0, %s66
    %s81 = sphi 0, %s67
    %s87 = sphi 0, %s89
    %s90 = sphi 0, %s87
    %s91 = sphi 0, %s90
    %s107 = sphi 0, %s91
  $region4: #{upsampling_block_forward.7} parent=0 // loop_header_branch
    %12 = sbr.rel (%p10) target = $region8
  $region5: #{upsampling_block_forward.7} parent=0 // loop_body
    %s14 = ssub.s32 %s9, 1
    %s15 = ssub.s32 %s9, 2
    %s16 = sadd.s32 %s9, 1
    %s17 = ssub.s32 %s9, %s16
    %p18 = scmp.eq.s32.totalorder %s17, 0
    %s20 = sadd.s32 %s19, 1
    %s21 = scalar_select %p18, %s19, %s20
    %p24 = pneg %p18
    %p25 = scmp.eq.s32.totalorder %s9, 1
    %p26 = por %p24, %p25
    %p27 = scmp.ne.s32.totalorder %s19, %s22
    %p28 = scmp.eq.s32.totalorder %s9, 0
    %p29 = por %p27, %p28
    %p30 = scmp.ne.s32.totalorder %s19, %s22
    %p31 = scmp.eq.s32.totalorder %s14, 1
    %p32 = por %p30, %p31
    %p33 = scmp.ne.s32.totalorder %s22, %s23
    %p34 = scmp.eq.s32.totalorder %s14, 0
    %p35 = por %p33, %p34
    %p36 = scmp.ne.s32.totalorder %s22, %s23
    %p37 = scmp.eq.s32.totalorder %s15, 1
    %p38 = por %p36, %p37
    %p40 = scmp.ne.s32.totalorder %s23, %s39
    %p41 = scmp.eq.s32.totalorder %s15, 0
    %p42 = por %p40, %p41
    %s44 = sadd.s32 %s43, 1
    %p47 = scmp.eq.s32.totalorder %s9, 1
    %p48 = scmp.ne.s32.totalorder %s43, %s45
    %p49 = scmp.eq.s32.totalorder %s9, 0
    %p50 = por %p48, %p49
    %p51 = scmp.ne.s32.totalorder %s43, %s45
    %p52 = scmp.eq.s32.totalorder %s14, 1
    %p53 = por %p51, %p52
    %p54 = scmp.ne.s32.totalorder %s45, %s46
    %p55 = scmp.eq.s32.totalorder %s14, 0
    %p56 = por %p54, %p55
    %p57 = scmp.ne.s32.totalorder %s45, %s46
    %p58 = scmp.eq.s32.totalorder %s15, 1
    %p59 = por %p57, %p58
    %p61 = scmp.ne.s32.totalorder %s46, %s60
    %p62 = scmp.eq.s32.totalorder %s15, 0
    %p63 = por %p61, %p62
    %s65 = sadd.s32 %s64, 1
    %p68 = scmp.eq.s32.totalorder %s9, 1
    %p69 = scmp.ne.s32.totalorder %s64, %s66
    %p70 = scmp.eq.s32.totalorder %s9, 0
    %p71 = por %p69, %p70
    %p72 = scmp.ne.s32.totalorder %s64, %s66
    %p73 = scmp.eq.s32.totalorder %s14, 1
    %p74 = por %p72, %p73
    %p75 = scmp.ne.s32.totalorder %s66, %s67
    %p76 = scmp.eq.s32.totalorder %s14, 0
    %p77 = por %p75, %p76
    %p78 = scmp.ne.s32.totalorder %s66, %s67
    %p79 = scmp.eq.s32.totalorder %s15, 1
    %p80 = por %p78, %p79
    %p82 = scmp.ne.s32.totalorder %s67, %s81
    %p83 = scmp.eq.s32.totalorder %s15, 0
    %p84 = por %p82, %p83
    %s85 = ssub.s32 %s9, %s16
    %p86 = scmp.eq.s32.totalorder %s85, 0
    %s88 = sadd.s32 %s87, 1
    %s89 = scalar_select %p86, %s87, %s88
    %p92 = pneg %p86
    %p93 = scmp.eq.s32.totalorder %s9, 1
    %p94 = por %p92, %p93
    %p95 = scmp.ne.s32.totalorder %s87, %s90
    %p96 = scmp.eq.s32.totalorder %s9, 0
    %p97 = por %p95, %p96
    %p98 = scmp.ne.s32.totalorder %s87, %s90
    %p99 = scmp.eq.s32.totalorder %s14, 1
    %p100 = por %p98, %p99
    %p101 = scmp.ne.s32.totalorder %s90, %s91
    %p102 = scmp.eq.s32.totalorder %s14, 0
    %p103 = por %p101, %p102
    %p104 = scmp.ne.s32.totalorder %s90, %s91
    %p105 = scmp.eq.s32.totalorder %s15, 1
    %p106 = por %p104, %p105
    %p108 = scmp.ne.s32.totalorder %s91, %s107
    %p109 = scmp.eq.s32.totalorder %s15, 0
    %p110 = por %p108, %p109
    %p111 = scmp.le.s32.totalorder 1, %s9
    %p112 = scmp.lt.s32.totalorder %s9, 3
    %p113 = pnand %p111, %p112
    %p114 = pneg %p113
    // Predicated region
    $region9: #{upsampling_block_forward.7} parent=5 // pred_check
      _
    $region10: #{upsampling_block_forward.7} parent=5 // pred_check_branch
      %116 = sbr.rel (%p113) target = $region12
    $region11: #{upsampling_block_forward.7} parent=5 // pred_region
      %s117 = ssub.s32 %s9, 1
      // Predicated region
      $region13: #{upsampling_block_forward.7} parent=11 // pred_check
        %p118 = pneg %p56
      $region14: #{upsampling_block_forward.7} parent=11 // pred_check_branch
        %120 = sbr.rel (%p118) target = $region16
      $region15: #{upsampling_block_forward.7} parent=11 // pred_region
        _
      $region16: #{upsampling_block_forward.7} parent=11 // pred_fallthru
        _
      // Predicated region
      $region17: #{upsampling_block_forward.7} parent=11 // pred_check
        %p121 = pneg %p77
      $region18: #{upsampling_block_forward.7} parent=11 // pred_check_branch
        %123 = sbr.rel (%p121) target = $region20
      $region19: #{upsampling_block_forward.7} parent=11 // pred_region
        _
      $region20: #{upsampling_block_forward.7} parent=11 // pred_fallthru
        _
    $region12: #{upsampling_block_forward.7} parent=5 // pred_fallthru
      _
    %p124 = scmp.lt.s32.totalorder %s9, 2
    // Predicated region
    $region21: #{upsampling_block_forward.7} parent=5 // pred_check
      %p125 = pneg %p124
    $region22: #{upsampling_block_forward.7} parent=5 // pred_check_branch
      %127 = sbr.rel (%p125) target = $region24
    $region23: #{upsampling_block_forward.7} parent=5 // pred_region
      // Predicated region
      $region25: #{upsampling_block_forward.7} parent=23 // pred_check
        %p128 = pneg %p29
      $region26: #{upsampling_block_forward.7} parent=23 // pred_check_branch
        %130 = sbr.rel (%p128) target = $region28
      $region27: #{upsampling_block_forward.7} parent=23 // pred_region
        %p131 = scmp.lt.s32.totalorder %s9, 1
        %s132 = scalar_select %p131, %s9, 1
        %s133 = smul.addr %s132, 2
        %s134 = smul.addr %s133, 8
        %s135 = scalar_lea.vmem %s0, %s134
      $region28: #{upsampling_block_forward.7} parent=23 // pred_fallthru
        _
    $region24: #{upsampling_block_forward.7} parent=5 // pred_fallthru
      _
    %p136 = scmp.le.s32.totalorder 1, %s9
    %p137 = scmp.lt.s32.totalorder %s9, 3
    %p138 = pnand %p136, %p137
    %p139 = pneg %p138
    // Predicated region
    $region29: #{upsampling_block_forward.7} parent=5 // pred_check
      _
    $region30: #{upsampling_block_forward.7} parent=5 // pred_check_branch
      %141 = sbr.rel (%p138) target = $region32
    $region31: #{upsampling_block_forward.7} parent=5 // pred_region
      %s142 = ssub.s32 %s9, 1
      %p143 = scmp.lt.s32.totalorder %s14, 1
      %s144 = scalar_select %p143, %s14, 1
      %s145 = smul.addr %s144, 2
      %s146 = smul.addr %s145, 8
      %s147 = scalar_lea.vmem %s0, %s146
      %p148 = pneg %p35
      %p149 = pneg %p32
      %p150 = pneg %p56
      %p151 = pneg %p53
      %p152 = pneg %p77
      %p153 = pneg %p74
      %p154 = pneg %p103
      %p155 = pneg %p100
      %p156 = scmp.lt.s32.totalorder %s14, 1
      %s157 = scalar_select %p156, %s14, 1
      %s158 = smul.addr %s157, 2
      %s159 = smul.addr %s158, 8
      %s160 = scalar_lea.vmem %s3, %s159
      %p161 = scmp.lt.s32.totalorder %s14, 1
      %s162 = scalar_select %p161, %s14, 1
      %s163 = smul.addr %s162, 2
      %s164 = smul.addr %s163, 8
      %s165 = scalar_lea.vmem %s0, %s164
      %p166 = scmp.lt.s32.totalorder %s14, 1
      %s167 = scalar_select %p166, %s14, 1
      %s168 = smul.addr %s167, 2
      %s169 = smul.addr %s168, 8
      %s170 = scalar_lea.vmem %s3, %s169
      %v171 = vld [vmem:[%s165] sm:$0xff]
      %v172 = vld [vmem:[%s165 + $0x8] sm:$0xff]
      %v173 = vld [vmem:[%s1] sm:$0x1]
      %v175 = vperm.slane %v173, 0
      %v177 = vmul.f32 %v171, %v175
      %v178 = vmul.f32 %v172, %v175
      %v179 = vld [vmem:[%s2] sm:$0x1]
      %v181 = vperm.slane %v179, 0
      %v183 = vadd.f32 %v177, %v181
      %v184 = vadd.f32 %v178, %v181
      %v185 = vmax.f32 %v183, 0.0
      %v186 = vmax.f32 %v184, 0.0
      %187 = vst [vmem:[%s170] sm:$0xff] %v185
      %188 = vst [vmem:[%s170 + $0x8] sm:$0xff] %v186
      %p189 = scmp.lt.s32.totalorder %s14, 1
      %s190 = scalar_select %p189, %s14, 1
      %s191 = smul.addr %s190, 2
      %s192 = smul.addr %s191, 8
      %s193 = scalar_lea.vmem %s3, %s192
      // Predicated region
      $region33: #{upsampling_block_forward.7} parent=31 // pred_check
        %p194 = pneg %p100
      $region34: #{upsampling_block_forward.7} parent=31 // pred_check_branch
        %196 = sbr.rel (%p194) target = $region36
      $region35: #{upsampling_block_forward.7} parent=31 // pred_region
        _
      $region36: #{upsampling_block_forward.7} parent=31 // pred_fallthru
        _
    $region32: #{upsampling_block_forward.7} parent=5 // pred_fallthru
      _
    %p197 = scmp.le.s32.totalorder 2, %s9
    // Predicated region
    $region37: #{upsampling_block_forward.7} parent=5 // pred_check
      %p198 = pneg %p197
    $region38: #{upsampling_block_forward.7} parent=5 // pred_check_branch
      %200 = sbr.rel (%p198) target = $region40
    $region39: #{upsampling_block_forward.7} parent=5 // pred_region
      %s201 = ssub.s32 %s9, 2
      // Predicated region
      $region41: #{upsampling_block_forward.7} parent=39 // pred_check
        %p202 = pneg %p106
      $region42: #{upsampling_block_forward.7} parent=39 // pred_check_branch
        %204 = sbr.rel (%p202) target = $region44
      $region43: #{upsampling_block_forward.7} parent=39 // pred_region
        %p205 = scmp.lt.s32.totalorder %s15, 1
        %s206 = scalar_select %p205, %s15, 1
        %s207 = smul.addr %s206, 2
        %s208 = smul.addr %s207, 8
        %s209 = scalar_lea.vmem %s3, %s208
      $region44: #{upsampling_block_forward.7} parent=39 // pred_fallthru
        _
    $region40: #{upsampling_block_forward.7} parent=5 // pred_fallthru
      _
  $region6: #{upsampling_block_forward.7} parent=0 // loop_footer
    %s13 = sadd.s32 1, %s9
  $region7: #{upsampling_block_forward.7} parent=0 // loop_footer_branch
    %8 = sbr.rel target = $region3
  $region8: #{upsampling_block_forward.7} parent=0 // loop_exit
    _

</llo_original>
